<compile_context>
chip_gen: v5e
topology: v5e:2x2
jax: 0.10.0
libtpu: 0.0.40
codegen_flags: <defaults>
</compile_context>

<pallas_src>
import functools
import math

import jax
import jax.numpy as jnp
from jax.experimental import pallas as pl
from jax.experimental.pallas import tpu as pltpu

_MM_DTYPE = jnp.bfloat16            # matmul / residual-stream dtype (fp32 accumulation)


@functools.lru_cache(maxsize=None)
def _vmem_limit_bytes():
    """Per-chip scoped-VMEM budget with headroom for compiler scratch."""
    cap = 128 * 1024 * 1024
    try:
        cap = int(pltpu.get_tpu_info().vmem_capacity_bytes)
    except Exception:
        pass
    # leave ~16 MiB headroom; cap at 112 MiB (v5e/v6e), ~48 MiB on v7x
    return max(32 * 1024 * 1024, min(cap - 16 * 1024 * 1024, 112 * 1024 * 1024))


def _cparams(sem):
    return pltpu.CompilerParams(dimension_semantics=sem,
                                vmem_limit_bytes=_vmem_limit_bytes())


def _round_up(x, m):
    return (x + m - 1) // m * m


def _row_tile(m, cap=512):
    """Largest row tile <= cap that divides m (multiple of 16 for bf16 packing)."""
    if m <= cap:
        return m
    t = cap - cap % 16
    while t >= 16:
        if m % t == 0:
            return t
        t -= 16
    return 8 if m % 8 == 0 else m          # fallback (only matmul() pads)


def _hidden_tile(D, H, tm):
    """MLP hidden (reduction) tile: full H when the bf16 weights fit VMEM."""
    budget = int(_vmem_limit_bytes() * 0.6)
    def need(th):
        w = 2 * 2 * (D * th + th * D)                       # dbl-buffered bf16 w1/w2
        act = tm * th * 4 + tm * D * 16                     # fp32 h + act tiles (rough)
        return w + act
    for th in (H, 2048, 1024, 512, 256, 128):
        if th <= H and H % th == 0 and need(th) <= budget:
            return th
    return 128 if H % 128 == 0 else H


# ----------------------------- Pallas kernels ------------------------------

def _matmul_kernel(x_ref, w_ref, o_ref):
    o_ref[...] = jnp.dot(x_ref[...], w_ref[...],
                         preferred_element_type=jnp.float32).astype(o_ref.dtype)


def matmul(x, w):
    """x: (M, K) bf16, w: (K, N) bf16 -> (M, N) bf16 (patch-embedding conv)."""
    M, K = x.shape
    N = w.shape[1]
    Kp = _round_up(K, 128)                 # pad contraction dim to full MXU lanes
    if Kp != K:
        x = jnp.pad(x, ((0, 0), (0, Kp - K)))
        w = jnp.pad(w, ((0, Kp - K), (0, 0)))
    tm = _row_tile(M)
    if M % tm:
        x = jnp.pad(x, ((0, _round_up(M, tm) - M), (0, 0)))
    Mp = x.shape[0]
    out = pl.pallas_call(
        _matmul_kernel,
        out_shape=jax.ShapeDtypeStruct((Mp, N), _MM_DTYPE),
        grid=(Mp // tm,),
        in_specs=[pl.BlockSpec((tm, Kp), lambda i: (i, 0)),
                  pl.BlockSpec((Kp, N), lambda i: (0, 0))],
        out_specs=pl.BlockSpec((tm, N), lambda i: (i, 0)),
        compiler_params=_cparams(("parallel",)),
    )(x, w)
    return out[:M] if Mp != M else out


def _layernorm_kernel(x_ref, g_ref, b_ref, o_ref):
    x = x_ref[...].astype(jnp.float32)          # fp32 LN (LayerNorm subclass)
    mean = jnp.mean(x, axis=-1, keepdims=True)
    var = jnp.mean(jnp.square(x - mean), axis=-1, keepdims=True)
    y = (x - mean) * jax.lax.rsqrt(var + 1e-5)
    o_ref[...] = (y * g_ref[...] + b_ref[...]).astype(o_ref.dtype)


def layernorm(x, g, b, out_dtype=None):
    M, D = x.shape
    out_dtype = out_dtype or x.dtype
    tm = _row_tile(M)
    assert M % tm == 0
    return pl.pallas_call(
        _layernorm_kernel,
        out_shape=jax.ShapeDtypeStruct((M, D), out_dtype),
        grid=(M // tm,),
        in_specs=[pl.BlockSpec((tm, D), lambda i: (i, 0)),
                  pl.BlockSpec((1, D), lambda i: (0, 0)),
                  pl.BlockSpec((1, D), lambda i: (0, 0))],
        out_specs=pl.BlockSpec((tm, D), lambda i: (i, 0)),
        compiler_params=_cparams(("parallel",)),
    )(x, g.reshape(1, D), b.reshape(1, D))


def _ln_linear_kernel(x_ref, g_ref, b_ref, w_ref, bias_ref, o_ref):
    x = x_ref[...].astype(jnp.float32)
    mean = jnp.mean(x, axis=-1, keepdims=True)
    var = jnp.mean(jnp.square(x - mean), axis=-1, keepdims=True)
    xn = (x - mean) * jax.lax.rsqrt(var + 1e-5)
    xn = (xn * g_ref[...] + b_ref[...]).astype(_MM_DTYPE)
    acc = jnp.dot(xn, w_ref[...], preferred_element_type=jnp.float32)
    o_ref[...] = (acc + bias_ref[...]).astype(o_ref.dtype)


def ln_linear(x, g, b, w, bias):
    """Fused LayerNorm + Linear.  x: (M, K) bf16, w: (K, N) bf16 -> (M, N) bf16."""
    M, K = x.shape
    N = w.shape[1]
    tm = _row_tile(M)
    assert M % tm == 0
    return pl.pallas_call(
        _ln_linear_kernel,
        out_shape=jax.ShapeDtypeStruct((M, N), _MM_DTYPE),
        grid=(M // tm,),
        in_specs=[pl.BlockSpec((tm, K), lambda i: (i, 0)),
                  pl.BlockSpec((1, K), lambda i: (0, 0)),
                  pl.BlockSpec((1, K), lambda i: (0, 0)),
                  pl.BlockSpec((K, N), lambda i: (0, 0)),
                  pl.BlockSpec((1, N), lambda i: (0, 0))],
        out_specs=pl.BlockSpec((tm, N), lambda i: (i, 0)),
        compiler_params=_cparams(("parallel",)),
    )(x, g.reshape(1, K), b.reshape(1, K), w, bias.reshape(1, N))


def _mlp_kernel(y_ref, g_ref, b_ref, w1_ref, b1_ref, w2_ref, b2_ref, o_ref,
                xln_ref, acc_ref):
    """Fused LN2 + c_fc + QuickGELU + c_proj + residual, hidden dim K-tiled."""
    @pl.when(pl.program_id(1) == 0)
    def _():
        x = y_ref[...].astype(jnp.float32)
        mean = jnp.mean(x, axis=-1, keepdims=True)
        var = jnp.mean(jnp.square(x - mean), axis=-1, keepdims=True)
        xn = (x - mean) * jax.lax.rsqrt(var + 1e-5)
        xln_ref[...] = (xn * g_ref[...] + b_ref[...]).astype(xln_ref.dtype)
        acc_ref[...] = jnp.zeros_like(acc_ref)

    h = jnp.dot(xln_ref[...], w1_ref[...],
                preferred_element_type=jnp.float32) + b1_ref[...]
    h = h * jax.nn.sigmoid(1.702 * h)            # QuickGELU
    acc_ref[...] += jnp.dot(h.astype(_MM_DTYPE), w2_ref[...],
                            preferred_element_type=jnp.float32)

    @pl.when(pl.program_id(1) == pl.num_programs(1) - 1)
    def _():
        o_ref[...] = (y_ref[...].astype(jnp.float32) + acc_ref[...]
                      + b2_ref[...]).astype(o_ref.dtype)


def mlp_block(y2d, g, b, w1, b1, w2, b2):
    """Returns y + c_proj(gelu(c_fc(LN(y)))).  y2d: (M, D) bf16."""
    M, D = y2d.shape
    H = w1.shape[1]
    tm = _row_tile(M)
    assert M % tm == 0
    th = _hidden_tile(D, H, tm)
    return pl.pallas_call(
        _mlp_kernel,
        out_shape=jax.ShapeDtypeStruct((M, D), y2d.dtype),
        grid=(M // tm, H // th),
        in_specs=[pl.BlockSpec((tm, D), lambda i, h: (i, 0)),
                  pl.BlockSpec((1, D), lambda i, h: (0, 0)),
                  pl.BlockSpec((1, D), lambda i, h: (0, 0)),
                  pl.BlockSpec((D, th), lambda i, h: (0, h)),
                  pl.BlockSpec((1, th), lambda i, h: (0, h)),
                  pl.BlockSpec((th, D), lambda i, h: (h, 0)),
                  pl.BlockSpec((1, D), lambda i, h: (0, 0))],
        out_specs=pl.BlockSpec((tm, D), lambda i, h: (i, 0)),
        scratch_shapes=[pltpu.VMEM((tm, D), _MM_DTYPE),
                        pltpu.VMEM((tm, D), jnp.float32)],
        compiler_params=_cparams(("parallel", "arbitrary")),
    )(y2d, g.reshape(1, D), b.reshape(1, D), w1, b1.reshape(1, H),
      w2, b2.reshape(1, D))


def _attn_kernel(nq_ref, qc_ref, kt_ref, v_ref, mask_ref, kvm_ref, wo_ref,
                 bo_ref, ym_ref, yc_ref, om_ref, oc_ref, accm_ref, accc_ref,
                 *, scale):
    """One (batch, head) step: masked cross-attn + clip self-attn, out_proj
    contribution of this head accumulated into fp32 scratch; bias + residual
    added on the last head."""
    hid = pl.program_id(1)

    @pl.when(hid == 0)
    def _():
        accm_ref[...] = jnp.zeros_like(accm_ref)
        accc_ref[...] = jnp.zeros_like(accc_ref)

    kt = kt_ref[0, 0]                        # (hd, Lc) bf16 (pre-transposed)
    v = v_ref[0, 0]                          # (Lc, hd) bf16
    wo = wo_ref[0]                           # (hd, d)  bf16

    def attend(q, add_mask):
        s = jnp.dot(q, kt, preferred_element_type=jnp.float32) * scale + add_mask
        s = s - jnp.max(s, axis=-1, keepdims=True)
        p = jnp.exp(s)
        p = p * pl.reciprocal(jnp.sum(p, axis=-1, keepdims=True), approx=True)
        return jnp.dot(p.astype(v.dtype), v, preferred_element_type=jnp.float32)

    mo = attend(nq_ref[0, 0], mask_ref[0])   # (nq_p, hd) fp32
    co = attend(qc_ref[0, 0], kvm_ref[...])  # (Lc_p, hd) fp32
    accm_ref[...] += jnp.dot(mo.astype(_MM_DTYPE), wo,
                             preferred_element_type=jnp.float32)
    accc_ref[...] += jnp.dot(co.astype(_MM_DTYPE), wo,
                             preferred_element_type=jnp.float32)

    @pl.when(hid == pl.num_programs(1) - 1)
    def _():
        bo = bo_ref[...]
        om_ref[0] = (ym_ref[0].astype(jnp.float32) + accm_ref[...] + bo
                     ).astype(om_ref.dtype)
        oc_ref[0] = (yc_ref[0].astype(jnp.float32) + accc_ref[...] + bo
                     ).astype(oc_ref.dtype)


def attention_block(new_q, q_c, k_t, v, mask_add, kv_mask, wo_h, b_out,
                    y_m, y_c, *, heads):
    """new_q: (B,h,nq,hd)  q_c/v: (B,h,Lc,hd)  k_t: (B,h,hd,Lc)
       mask_add: (B,nq,Lc)  kv_mask: (1,Lc)  wo_h: (h,hd,d)
       y_m: (B,nq,d)  y_c: (B,Lc,d)  ->  (y_m', y_c')"""
    B, _, nq_p, hd = new_q.shape
    Lc_p = v.shape[2]
    d = y_m.shape[-1]
    kernel = functools.partial(_attn_kernel, scale=1.0 / math.sqrt(hd))
    # TODO(synk): for Lc >~ 1k on v7x, tile the clip-attention query dim with an
    # online-softmax instead of materializing the full (Lc, Lc) score matrix.
    out = pl.pallas_call(
        kernel,
        out_shape=(jax.ShapeDtypeStruct(y_m.shape, y_m.dtype),
                   jax.ShapeDtypeStruct(y_c.shape, y_c.dtype)),
        grid=(B, heads),
        in_specs=[pl.BlockSpec((1, 1, nq_p, hd), lambda b, h: (b, h, 0, 0)),
                  pl.BlockSpec((1, 1, Lc_p, hd), lambda b, h: (b, h, 0, 0)),
                  pl.BlockSpec((1, 1, hd, Lc_p), lambda b, h: (b, h, 0, 0)),
                  pl.BlockSpec((1, 1, Lc_p, hd), lambda b, h: (b, h, 0, 0)),
                  pl.BlockSpec((1, nq_p, Lc_p), lambda b, h: (b, 0, 0)),
                  pl.BlockSpec((1, Lc_p), lambda b, h: (0, 0)),
                  pl.BlockSpec((1, hd, d), lambda b, h: (h, 0, 0)),
                  pl.BlockSpec((1, d), lambda b, h: (0, 0)),
                  pl.BlockSpec((1, nq_p, d), lambda b, h: (b, 0, 0)),
                  pl.BlockSpec((1, Lc_p, d), lambda b, h: (b, 0, 0))],
        out_specs=[pl.BlockSpec((1, nq_p, d), lambda b, h: (b, 0, 0)),
                   pl.BlockSpec((1, Lc_p, d), lambda b, h: (b, 0, 0))],
        scratch_shapes=[pltpu.VMEM((nq_p, d), jnp.float32),
                        pltpu.VMEM((Lc_p, d), jnp.float32)],
        compiler_params=_cparams(("parallel", "arbitrary")),
    )(new_q, q_c, k_t, v, mask_add, kv_mask, wo_h, b_out.reshape(1, d), y_m, y_c)
    return out[0], out[1]


# ----------------------------- model pieces --------------------------------

def get_attn_masks(pred_masks, img_size, patch_size):
    """Returns bool mask (B, nq, L+1); True == position is blocked."""
    B, nq, _, _ = pred_masks.shape
    # TODO(synk): bilinear interpolate + max_pool are mask preprocessing, done in JAX glue
    m = jax.image.resize(pred_masks, (B, nq, img_size, img_size), method="bilinear")
    g = img_size // patch_size
    m = m.reshape(B, nq, g, patch_size, g, patch_size).max(axis=(3, 5))  # max_pool2d
    bin_masks = (m > 0.0).reshape(B, nq, -1)
    attn = jnp.concatenate([jnp.ones_like(bin_masks[..., :1]), bin_masks], axis=-1)
    return jnp.logical_not(attn)


def residual_attention_block(y_m, y_c, mask_add, kv_mask, p, heads):
    """y_m: (B, nq_p, d), y_c: (B, Lc_p, d) bf16; returns updated pair."""
    B, nq_p, d = y_m.shape
    Lc_p = y_c.shape[1]
    hd = d // heads

    # fused LN1 + projections (qkv from clip tokens, new_q from mask tokens)
    qkv = ln_linear(y_c.reshape(B * Lc_p, d), p["ln1_g"], p["ln1_b"],
                    p["in_proj_w"], p["in_proj_b"])
    qkv = qkv.reshape(B, Lc_p, 3, heads, hd)
    q_c = qkv[:, :, 0].transpose(0, 2, 1, 3)        # (B, heads, Lc_p, hd)
    k_t = qkv[:, :, 1].transpose(0, 2, 3, 1)        # (B, heads, hd, Lc_p)
    v = qkv[:, :, 2].transpose(0, 2, 1, 3)          # (B, heads, Lc_p, hd)

    new_q = ln_linear(y_m.reshape(B * nq_p, d), p["ln1_g"], p["ln1_b"],
                      p["new_q_w"], p["new_q_b"])
    new_q = new_q.reshape(B, nq_p, heads, hd).transpose(0, 2, 1, 3)

    wo_h = p["out_proj_w"].reshape(heads, hd, d)    # pure reshape, no copy

    # fused attention (per batch*head grid step) + out_proj + residual
    y_m, y_c = attention_block(new_q, q_c, k_t, v, mask_add, kv_mask,
                               wo_h, p["out_proj_b"], y_m, y_c, heads=heads)

    # fused LN2 + MLP + residual on each token group (no slicing / concat)
    y_m = mlp_block(y_m.reshape(B * nq_p, d), p["ln2_g"], p["ln2_b"],
                    p["fc_w"], p["fc_b"], p["proj_w"], p["proj_b"]).reshape(B, nq_p, d)
    y_c = mlp_block(y_c.reshape(B * Lc_p, d), p["ln2_g"], p["ln2_b"],
                    p["fc_w"], p["fc_b"], p["proj_w"], p["proj_b"]).reshape(B, Lc_p, d)
    return y_m, y_c


def vision_transformer_forward(params, x, masks, mask_pe, *, patch_size, heads,
                               input_resolution):
    B, C, H, W = x.shape
    P = patch_size
    width = params["class_embedding"].shape[0]
    gh, gw = H // P, W // P
    L = gh * gw
    Lc = L + 1
    nq = mask_pe.shape[1]
    nq_p = _round_up(nq, 16)                 # pad token counts ONCE, not per kernel
    Lc_p = _round_up(Lc, 16)

    # patch-embedding conv (stride = kernel = P, no bias) as im2col matmul
    patches = (x.reshape(B, C, gh, P, gw, P)
                 .transpose(0, 2, 4, 1, 3, 5)
                 .reshape(B * L, C * P * P)).astype(_MM_DTYPE)
    conv_w = params["conv1_w"].reshape(width, C * P * P).T            # (C*P*P, width)
    feat = matmul(patches, conv_w).reshape(B, L, width)

    cls = params["class_embedding"].astype(jnp.float32)
    clip_tok = jnp.concatenate([jnp.broadcast_to(cls, (B, 1, width)),
                                feat.astype(jnp.float32)], axis=1)
    clip_tok = clip_tok + params["positional_embedding"][None]
    mask_tok = mask_pe.astype(jnp.float32) + cls

    # pad to (nq_p, Lc_p); padded clip keys are masked out everywhere below
    clip_tok = jnp.pad(clip_tok, ((0, 0), (0, Lc_p - Lc), (0, 0)))
    mask_tok = jnp.pad(mask_tok, ((0, 0), (0, nq_p - nq), (0, 0)))

    blocked = get_attn_masks(masks, input_resolution, P)              # (B, nq, Lc) bool
    blocked = jnp.pad(blocked, ((0, 0), (0, nq_p - nq), (0, Lc_p - Lc)))
    key_pad = jnp.arange(Lc_p) >= Lc
    blocked = jnp.logical_or(blocked, key_pad[None, None, :])
    mask_add = jnp.where(blocked, jnp.float32(-1e30), jnp.float32(0.0))
    kv_mask = jnp.where(key_pad, jnp.float32(-1e30),
                        jnp.float32(0.0)).reshape(1, Lc_p)

    # ln_pre (fp32 math), residual stream stored in bf16 from here on
    y_m = layernorm(mask_tok.reshape(B * nq_p, width), params["ln_pre_g"],
                    params["ln_pre_b"], out_dtype=_MM_DTYPE).reshape(B, nq_p, width)
    y_c = layernorm(clip_tok.reshape(B * Lc_p, width), params["ln_pre_g"],
                    params["ln_pre_b"], out_dtype=_MM_DTYPE).reshape(B, Lc_p, width)

    for lyr in params["layers"]:
        y_m, y_c = residual_attention_block(y_m, y_c, mask_add, kv_mask, lyr, heads)

    # drop padding + single transpose to PyTorch's (seq, batch, width)
    out = jnp.concatenate([y_m[:, :nq], y_c[:, :Lc]], axis=1)
    return out.transpose(1, 0, 2).astype(jnp.float32)


# ----------------------------- parameters ----------------------------------

def init_params(key, *, width, layers, patch_size, input_resolution, output_dim):
    d = width
    L = (input_resolution // patch_size) ** 2
    scale = d ** -0.5
    keys = jax.random.split(key, 4 + layers)

    def nrm(k, shape, s=0.02):
        return jax.random.normal(k, shape, jnp.float32) * s

    params = dict(
        conv1_w=nrm(keys[0], (d, 3, patch_size, patch_size)),
        class_embedding=jax.random.normal(keys[1], (d,), jnp.float32) * scale,
        positional_embedding=jax.random.normal(keys[2], (L + 1, d), jnp.float32) * scale,
        ln_pre_g=jnp.ones((d,), jnp.float32),
        ln_pre_b=jnp.zeros((d,), jnp.float32),
        # ln_post / proj exist in __init__ but are not used by forward()
        ln_post_g=jnp.ones((d,), jnp.float32),
        ln_post_b=jnp.zeros((d,), jnp.float32),
        proj=jax.random.normal(keys[3], (d, output_dim), jnp.float32) * scale,
    )
    layer_params = []
    for li in range(layers):
        lk = jax.random.split(keys[4 + li], 10)
        layer_params.append(dict(
            in_proj_w=nrm(lk[0], (d, 3 * d)), in_proj_b=nrm(lk[1], (3 * d,)),
            new_q_w=nrm(lk[2], (d, d)),       new_q_b=nrm(lk[3], (d,)),
            out_proj_w=nrm(lk[4], (d, d)),    out_proj_b=nrm(lk[5], (d,)),
            ln1_g=jnp.ones((d,), jnp.float32), ln1_b=jnp.zeros((d,), jnp.float32),
            fc_w=nrm(lk[6], (d, 4 * d)),      fc_b=nrm(lk[7], (4 * d,)),
            proj_w=nrm(lk[8], (4 * d, d)),    proj_b=nrm(lk[9], (d,)),
            ln2_g=jnp.ones((d,), jnp.float32), ln2_b=jnp.zeros((d,), jnp.float32),
        ))
    params["layers"] = layer_params
    return params


def prepare_params(params):
    """Cast all matmul weights to bf16 ONCE (halves HBM<->VMEM DMA bytes);
    LayerNorm params, biases and embeddings stay fp32."""
    out = dict(params)
    out["conv1_w"] = params["conv1_w"].astype(_MM_DTYPE)
    new_layers = []
    for p in params["layers"]:
        q = dict(p)
        for k in ("in_proj_w", "new_q_w", "out_proj_w", "fc_w", "proj_w"):
            q[k] = p[k].astype(_MM_DTYPE)
        new_layers.append(q)
    out["layers"] = new_layers
    return out


# --------------------------------- main -------------------------------------

if __name__ == "__main__":
    input_resolution, patch_size = 16, 4
    width, layers, heads, output_dim = 32, 2, 4, 8
    B, nq = 2, 3

    key = jax.random.PRNGKey(0)
    kp, kx, km, kpe = jax.random.split(key, 4)

    params = prepare_params(
        init_params(kp, width=width, layers=layers, patch_size=patch_size,
                    input_resolution=input_resolution, output_dim=output_dim))

    x = jax.random.normal(kx, (B, 3, input_resolution, input_resolution), jnp.float32)
    masks = jax.random.normal(km, (B, nq, input_resolution, input_resolution), jnp.float32)
    mask_pe = jax.random.normal(kpe, (B, nq, width), jnp.float32) * 0.02

    fwd = jax.jit(functools.partial(vision_transformer_forward,
                                    patch_size=patch_size, heads=heads,
                                    input_resolution=input_resolution))
    tokens = fwd(params, x, masks, mask_pe)
    jax.block_until_ready(tokens)

    expected_seq = nq + (input_resolution // patch_size) ** 2 + 1
    assert tokens.shape == (expected_seq, B, width), tokens.shape
    assert bool(jnp.all(jnp.isfinite(tokens)))
    print("KERNEL_OK")
</pallas_src>

<mosaic_0001>
module attributes {stable_mosaic.version = 11 : i64} {
  func.func @_layernorm_kernel(%arg0: i32, %arg1: memref<32x32xf32, #tpu.memory_space<vmem>>, %arg2: memref<1x32xf32, #tpu.memory_space<vmem>>, %arg3: memref<1x32xf32, #tpu.memory_space<vmem>>, %arg4: memref<32x32xbf16, #tpu.memory_space<vmem>>) attributes {dimension_semantics = [#tpu.dimension_semantics<parallel>], iteration_bounds = array<i64: 1>, scalar_prefetch = 0 : i64, scratch_operands = 0 : i64, tpu.core_type = #tpu.core_type<tc>, window_params = [{transform_indices = @transform_0, window_bounds = array<i64: 32, 32>}, {pipeline_mode = #tpu.pipeline_mode<synchronous>, transform_indices = @transform_1, window_bounds = array<i64: 1, 32>}, {pipeline_mode = #tpu.pipeline_mode<synchronous>, transform_indices = @transform_2, window_bounds = array<i64: 1, 32>}, {transform_indices = @transform_3, window_bounds = array<i64: 32, 32>}]} {
    %c0 = arith.constant 0 : index
    %c0_0 = arith.constant 0 : index
    %0 = vector.load %arg1[%c0, %c0_0] : memref<32x32xf32, #tpu.memory_space<vmem>>, vector<32x32xf32>
    %cst = arith.constant dense<0.000000e+00> : vector<32xf32>
    %1 = vector.multi_reduction <add>, %0, %cst [1] : vector<32x32xf32> to vector<32xf32>
    %2 = vector.shape_cast %1 : vector<32xf32> to vector<32x1xf32>
    %cst_1 = arith.constant 3.200000e+01 : f32
    %3 = vector.broadcast %cst_1 : f32 to vector<32x1xf32>
    %4 = arith.divf %2, %3 : vector<32x1xf32>
    %5 = vector.broadcast %4 : vector<32x1xf32> to vector<32x32xf32>
    %6 = arith.subf %0, %5 : vector<32x32xf32>
    %7 = arith.mulf %6, %6 : vector<32x32xf32>
    %cst_2 = arith.constant dense<0.000000e+00> : vector<32xf32>
    %8 = vector.multi_reduction <add>, %7, %cst_2 [1] : vector<32x32xf32> to vector<32xf32>
    %9 = vector.shape_cast %8 : vector<32xf32> to vector<32x1xf32>
    %cst_3 = arith.constant 3.200000e+01 : f32
    %10 = vector.broadcast %cst_3 : f32 to vector<32x1xf32>
    %11 = arith.divf %9, %10 : vector<32x1xf32>
    %12 = vector.broadcast %4 : vector<32x1xf32> to vector<32x32xf32>
    %13 = arith.subf %0, %12 : vector<32x32xf32>
    %cst_4 = arith.constant 9.99999974E-6 : f32
    %14 = vector.broadcast %cst_4 : f32 to vector<32x1xf32>
    %15 = arith.addf %11, %14 : vector<32x1xf32>
    %16 = math.rsqrt %15 : vector<32x1xf32>
    %17 = vector.broadcast %16 : vector<32x1xf32> to vector<32x32xf32>
    %18 = arith.mulf %13, %17 : vector<32x32xf32>
    %c0_5 = arith.constant 0 : index
    %c0_6 = arith.constant 0 : index
    %19 = vector.load %arg2[%c0_5, %c0_6] : memref<1x32xf32, #tpu.memory_space<vmem>>, vector<1x32xf32>
    %20 = vector.broadcast %19 : vector<1x32xf32> to vector<32x32xf32>
    %21 = arith.mulf %18, %20 : vector<32x32xf32>
    %c0_7 = arith.constant 0 : index
    %c0_8 = arith.constant 0 : index
    %22 = vector.load %arg3[%c0_7, %c0_8] : memref<1x32xf32, #tpu.memory_space<vmem>>, vector<1x32xf32>
    %23 = vector.broadcast %22 : vector<1x32xf32> to vector<32x32xf32>
    %24 = arith.addf %21, %23 : vector<32x32xf32>
    %25 = arith.truncf %24 : vector<32x32xf32> to vector<32x32xbf16>
    %c0_9 = arith.constant 0 : index
    %c0_10 = arith.constant 0 : index
    %26 = vector.load %arg4[%c0_9, %c0_10] : memref<32x32xbf16, #tpu.memory_space<vmem>>, vector<32x32xbf16>
    tpu.vector_store %arg4[%c0_9, %c0_10], %25 {strides = array<i32>} : memref<32x32xbf16, #tpu.memory_space<vmem>>, vector<32x32xbf16>,
    return
  }
  func.func @transform_0(%arg0: i32) -> (i32, i32) {
    %c0_i32 = arith.constant 0 : i32
    %c0_i32_0 = arith.constant 0 : i32
    return %arg0, %c0_i32 : i32, i32
  }
  func.func @transform_1(%arg0: i32) -> (i32, i32) {
    %c0_i32 = arith.constant 0 : i32
    %c0_i32_0 = arith.constant 0 : i32
    %c0_i32_1 = arith.constant 0 : i32
    return %c0_i32, %c0_i32_0 : i32, i32
  }
  func.func @transform_2(%arg0: i32) -> (i32, i32) {
    %c0_i32 = arith.constant 0 : i32
    %c0_i32_0 = arith.constant 0 : i32
    %c0_i32_1 = arith.constant 0 : i32
    return %c0_i32, %c0_i32_0 : i32, i32
  }
  func.func @transform_3(%arg0: i32) -> (i32, i32) {
    %c0_i32 = arith.constant 0 : i32
    %c0_i32_0 = arith.constant 0 : i32
    return %arg0, %c0_i32 : i32, i32
  }
}

module attributes {stable_mosaic.version = 11 : i64} {
  func.func @_ln_linear_kernel(%arg0: i32, %arg1: memref<32x32xbf16, #tpu.memory_space<vmem>>, %arg2: memref<1x32xf32, #tpu.memory_space<vmem>>, %arg3: memref<1x32xf32, #tpu.memory_space<vmem>>, %arg4: memref<32x32xbf16, #tpu.memory_space<vmem>>, %arg5: memref<1x32xf32, #tpu.memory_space<vmem>>, %arg6: memref<32x32xbf16, #tpu.memory_space<vmem>>) attributes {dimension_semantics = [#tpu.dimension_semantics<parallel>], iteration_bounds = array<i64: 1>, scalar_prefetch = 0 : i64, scratch_operands = 0 : i64, tpu.core_type = #tpu.core_type<tc>, window_params = [{transform_indices = @transform_0, window_bounds = array<i64: 32, 32>}, {pipeline_mode = #tpu.pipeline_mode<synchronous>, transform_indices = @transform_1, window_bounds = array<i64: 1, 32>}, {pipeline_mode = #tpu.pipeline_mode<synchronous>, transform_indices = @transform_2, window_bounds = array<i64: 1, 32>}, {pipeline_mode = #tpu.pipeline_mode<synchronous>, transform_indices = @transform_3, window_bounds = array<i64: 32, 32>}, {pipeline_mode = #tpu.pipeline_mode<synchronous>, transform_indices = @transform_4, window_bounds = array<i64: 1, 32>}, {transform_indices = @transform_5, window_bounds = array<i64: 32, 32>}]} {
    %c0 = arith.constant 0 : index
    %c0_0 = arith.constant 0 : index
    %0 = vector.load %arg1[%c0, %c0_0] : memref<32x32xbf16, #tpu.memory_space<vmem>>, vector<32x32xbf16>
    %1 = arith.extf %0 : vector<32x32xbf16> to vector<32x32xf32>
    %cst = arith.constant dense<0.000000e+00> : vector<32xf32>
    %2 = vector.multi_reduction <add>, %1, %cst [1] : vector<32x32xf32> to vector<32xf32>
    %3 = vector.shape_cast %2 : vector<32xf32> to vector<32x1xf32>
    %cst_1 = arith.constant 3.200000e+01 : f32
    %4 = vector.broadcast %cst_1 : f32 to vector<32x1xf32>
    %5 = arith.divf %3, %4 : vector<32x1xf32>
    %6 = vector.broadcast %5 : vector<32x1xf32> to vector<32x32xf32>
    %7 = arith.subf %1, %6 : vector<32x32xf32>
    %8 = arith.mulf %7, %7 : vector<32x32xf32>
    %cst_2 = arith.constant dense<0.000000e+00> : vector<32xf32>
    %9 = vector.multi_reduction <add>, %8, %cst_2 [1] : vector<32x32xf32> to vector<32xf32>
    %10 = vector.shape_cast %9 : vector<32xf32> to vector<32x1xf32>
    %cst_3 = arith.constant 3.200000e+01 : f32
    %11 = vector.broadcast %cst_3 : f32 to vector<32x1xf32>
    %12 = arith.divf %10, %11 : vector<32x1xf32>
    %13 = vector.broadcast %5 : vector<32x1xf32> to vector<32x32xf32>
    %14 = arith.subf %1, %13 : vector<32x32xf32>
    %cst_4 = arith.constant 9.99999974E-6 : f32
    %15 = vector.broadcast %cst_4 : f32 to vector<32x1xf32>
    %16 = arith.addf %12, %15 : vector<32x1xf32>
    %17 = math.rsqrt %16 : vector<32x1xf32>
    %18 = vector.broadcast %17 : vector<32x1xf32> to vector<32x32xf32>
    %19 = arith.mulf %14, %18 : vector<32x32xf32>
    %c0_5 = arith.constant 0 : index
    %c0_6 = arith.constant 0 : index
    %20 = vector.load %arg2[%c0_5, %c0_6] : memref<1x32xf32, #tpu.memory_space<vmem>>, vector<1x32xf32>
    %21 = vector.broadcast %20 : vector<1x32xf32> to vector<32x32xf32>
    %22 = arith.mulf %19, %21 : vector<32x32xf32>
    %c0_7 = arith.constant 0 : index
    %c0_8 = arith.constant 0 : index
    %23 = vector.load %arg3[%c0_7, %c0_8] : memref<1x32xf32, #tpu.memory_space<vmem>>, vector<1x32xf32>
    %24 = vector.broadcast %23 : vector<1x32xf32> to vector<32x32xf32>
    %25 = arith.addf %22, %24 : vector<32x32xf32>
    %26 = arith.truncf %25 : vector<32x32xf32> to vector<32x32xbf16>
    %c0_9 = arith.constant 0 : index
    %c0_10 = arith.constant 0 : index
    %27 = vector.load %arg4[%c0_9, %c0_10] : memref<32x32xbf16, #tpu.memory_space<vmem>>, vector<32x32xbf16>
    %cst_11 = arith.constant dense<0.000000e+00> : vector<32x32xf32>
    %28 = tpu.matmul %26, %27, %cst_11 {dimension_numbers = #tpu.dot_dimension_numbers<[1], [0], [0], [1], [0, 0, 1, 1], [], []>} : vector<32x32xbf16>, vector<32x32xbf16>, vector<32x32xf32> -> vector<32x32xf32>
    %c0_12 = arith.constant 0 : index
    %c0_13 = arith.constant 0 : index
    %29 = vector.load %arg5[%c0_12, %c0_13] : memref<1x32xf32, #tpu.memory_space<vmem>>, vector<1x32xf32>
    %30 = vector.broadcast %29 : vector<1x32xf32> to vector<32x32xf32>
    %31 = arith.addf %28, %30 : vector<32x32xf32>
    %32 = arith.truncf %31 : vector<32x32xf32> to vector<32x32xbf16>
    %c0_14 = arith.constant 0 : index
    %c0_15 = arith.constant 0 : index
    %33 = vector.load %arg6[%c0_14, %c0_15] : memref<32x32xbf16, #tpu.memory_space<vmem>>, vector<32x32xbf16>
    tpu.vector_store %arg6[%c0_14, %c0_15], %32 {strides = array<i32>} : memref<32x32xbf16, #tpu.memory_space<vmem>>, vector<32x32xbf16>,
    return
  }
  func.func @transform_0(%arg0: i32) -> (i32, i32) {
    %c0_i32 = arith.constant 0 : i32
    %c0_i32_0 = arith.constant 0 : i32
    return %arg0, %c0_i32 : i32, i32
  }
  func.func @transform_1(%arg0: i32) -> (i32, i32) {
    %c0_i32 = arith.constant 0 : i32
    %c0_i32_0 = arith.constant 0 : i32
    %c0_i32_1 = arith.constant 0 : i32
    return %c0_i32, %c0_i32_0 : i32, i32
  }
  func.func @transform_2(%arg0: i32) -> (i32, i32) {
    %c0_i32 = arith.constant 0 : i32
    %c0_i32_0 = arith.constant 0 : i32
    %c0_i32_1 = arith.constant 0 : i32
    return %c0_i32, %c0_i32_0 : i32, i32
  }
  func.func @transform_3(%arg0: i32) -> (i32, i32) {
    %c0_i32 = arith.constant 0 : i32
    %c0_i32_0 = arith.constant 0 : i32
    %c0_i32_1 = arith.constant 0 : i32
    return %c0_i32, %c0_i32_0 : i32, i32
  }
  func.func @transform_4(%arg0: i32) -> (i32, i32) {
    %c0_i32 = arith.constant 0 : i32
    %c0_i32_0 = arith.constant 0 : i32
    %c0_i32_1 = arith.constant 0 : i32
    return %c0_i32, %c0_i32_0 : i32, i32
  }
  func.func @transform_5(%arg0: i32) -> (i32, i32) {
    %c0_i32 = arith.constant 0 : i32
    %c0_i32_0 = arith.constant 0 : i32
    return %arg0, %c0_i32 : i32, i32
  }
}

module attributes {stable_mosaic.version = 11 : i64} {
  func.func @_matmul_kernel(%arg0: i32, %arg1: memref<32x128xbf16, #tpu.memory_space<vmem>>, %arg2: memref<128x32xbf16, #tpu.memory_space<vmem>>, %arg3: memref<32x32xbf16, #tpu.memory_space<vmem>>) attributes {dimension_semantics = [#tpu.dimension_semantics<parallel>], iteration_bounds = array<i64: 1>, scalar_prefetch = 0 : i64, scratch_operands = 0 : i64, tpu.core_type = #tpu.core_type<tc>, window_params = [{transform_indices = @transform_0, window_bounds = array<i64: 32, 128>}, {pipeline_mode = #tpu.pipeline_mode<synchronous>, transform_indices = @transform_1, window_bounds = array<i64: 128, 32>}, {transform_indices = @transform_2, window_bounds = array<i64: 32, 32>}]} {
    %c0 = arith.constant 0 : index
    %c0_0 = arith.constant 0 : index
    %0 = vector.load %arg1[%c0, %c0_0] : memref<32x128xbf16, #tpu.memory_space<vmem>>, vector<32x128xbf16>
    %c0_1 = arith.constant 0 : index
    %c0_2 = arith.constant 0 : index
    %1 = vector.load %arg2[%c0_1, %c0_2] : memref<128x32xbf16, #tpu.memory_space<vmem>>, vector<128x32xbf16>
    %cst = arith.constant dense<0.000000e+00> : vector<32x32xf32>
    %2 = tpu.matmul %0, %1, %cst {dimension_numbers = #tpu.dot_dimension_numbers<[1], [0], [0], [1], [0, 0, 1, 1], [], []>} : vector<32x128xbf16>, vector<128x32xbf16>, vector<32x32xf32> -> vector<32x32xf32>
    %3 = arith.truncf %2 : vector<32x32xf32> to vector<32x32xbf16>
    %c0_3 = arith.constant 0 : index
    %c0_4 = arith.constant 0 : index
    %4 = vector.load %arg3[%c0_3, %c0_4] : memref<32x32xbf16, #tpu.memory_space<vmem>>, vector<32x32xbf16>
    tpu.vector_store %arg3[%c0_3, %c0_4], %3 {strides = array<i32>} : memref<32x32xbf16, #tpu.memory_space<vmem>>, vector<32x32xbf16>,
    return
  }
  func.func @transform_0(%arg0: i32) -> (i32, i32) {
    %c0_i32 = arith.constant 0 : i32
    %c0_i32_0 = arith.constant 0 : i32
    return %arg0, %c0_i32 : i32, i32
  }
  func.func @transform_1(%arg0: i32) -> (i32, i32) {
    %c0_i32 = arith.constant 0 : i32
    %c0_i32_0 = arith.constant 0 : i32
    %c0_i32_1 = arith.constant 0 : i32
    return %c0_i32, %c0_i32_0 : i32, i32
  }
  func.func @transform_2(%arg0: i32) -> (i32, i32) {
    %c0_i32 = arith.constant 0 : i32
    %c0_i32_0 = arith.constant 0 : i32
    return %arg0, %c0_i32 : i32, i32
  }
}

module attributes {stable_mosaic.version = 11 : i64} {
  func.func @_layernorm_kernel(%arg0: i32, %arg1: memref<64x32xf32, #tpu.memory_space<vmem>>, %arg2: memref<1x32xf32, #tpu.memory_space<vmem>>, %arg3: memref<1x32xf32, #tpu.memory_space<vmem>>, %arg4: memref<64x32xbf16, #tpu.memory_space<vmem>>) attributes {dimension_semantics = [#tpu.dimension_semantics<parallel>], iteration_bounds = array<i64: 1>, scalar_prefetch = 0 : i64, scratch_operands = 0 : i64, tpu.core_type = #tpu.core_type<tc>, window_params = [{transform_indices = @transform_0, window_bounds = array<i64: 64, 32>}, {pipeline_mode = #tpu.pipeline_mode<synchronous>, transform_indices = @transform_1, window_bounds = array<i64: 1, 32>}, {pipeline_mode = #tpu.pipeline_mode<synchronous>, transform_indices = @transform_2, window_bounds = array<i64: 1, 32>}, {transform_indices = @transform_3, window_bounds = array<i64: 64, 32>}]} {
    %c0 = arith.constant 0 : index
    %c0_0 = arith.constant 0 : index
    %0 = vector.load %arg1[%c0, %c0_0] : memref<64x32xf32, #tpu.memory_space<vmem>>, vector<64x32xf32>
    %cst = arith.constant dense<0.000000e+00> : vector<64xf32>
    %1 = vector.multi_reduction <add>, %0, %cst [1] : vector<64x32xf32> to vector<64xf32>
    %2 = vector.shape_cast %1 : vector<64xf32> to vector<64x1xf32>
    %cst_1 = arith.constant 3.200000e+01 : f32
    %3 = vector.broadcast %cst_1 : f32 to vector<64x1xf32>
    %4 = arith.divf %2, %3 : vector<64x1xf32>
    %5 = vector.broadcast %4 : vector<64x1xf32> to vector<64x32xf32>
    %6 = arith.subf %0, %5 : vector<64x32xf32>
    %7 = arith.mulf %6, %6 : vector<64x32xf32>
    %cst_2 = arith.constant dense<0.000000e+00> : vector<64xf32>
    %8 = vector.multi_reduction <add>, %7, %cst_2 [1] : vector<64x32xf32> to vector<64xf32>
    %9 = vector.shape_cast %8 : vector<64xf32> to vector<64x1xf32>
    %cst_3 = arith.constant 3.200000e+01 : f32
    %10 = vector.broadcast %cst_3 : f32 to vector<64x1xf32>
    %11 = arith.divf %9, %10 : vector<64x1xf32>
    %12 = vector.broadcast %4 : vector<64x1xf32> to vector<64x32xf32>
    %13 = arith.subf %0, %12 : vector<64x32xf32>
    %cst_4 = arith.constant 9.99999974E-6 : f32
    %14 = vector.broadcast %cst_4 : f32 to vector<64x1xf32>
    %15 = arith.addf %11, %14 : vector<64x1xf32>
    %16 = math.rsqrt %15 : vector<64x1xf32>
    %17 = vector.broadcast %16 : vector<64x1xf32> to vector<64x32xf32>
    %18 = arith.mulf %13, %17 : vector<64x32xf32>
    %c0_5 = arith.constant 0 : index
    %c0_6 = arith.constant 0 : index
    %19 = vector.load %arg2[%c0_5, %c0_6] : memref<1x32xf32, #tpu.memory_space<vmem>>, vector<1x32xf32>
    %20 = vector.broadcast %19 : vector<1x32xf32> to vector<64x32xf32>
    %21 = arith.mulf %18, %20 : vector<64x32xf32>
    %c0_7 = arith.constant 0 : index
    %c0_8 = arith.constant 0 : index
    %22 = vector.load %arg3[%c0_7, %c0_8] : memref<1x32xf32, #tpu.memory_space<vmem>>, vector<1x32xf32>
    %23 = vector.broadcast %22 : vector<1x32xf32> to vector<64x32xf32>
    %24 = arith.addf %21, %23 : vector<64x32xf32>
    %25 = arith.truncf %24 : vector<64x32xf32> to vector<64x32xbf16>
    %c0_9 = arith.constant 0 : index
    %c0_10 = arith.constant 0 : index
    %26 = vector.load %arg4[%c0_9, %c0_10] : memref<64x32xbf16, #tpu.memory_space<vmem>>, vector<64x32xbf16>
    tpu.vector_store %arg4[%c0_9, %c0_10], %25 {strides = array<i32>} : memref<64x32xbf16, #tpu.memory_space<vmem>>, vector<64x32xbf16>,
    return
  }
  func.func @transform_0(%arg0: i32) -> (i32, i32) {
    %c0_i32 = arith.constant 0 : i32
    %c0_i32_0 = arith.constant 0 : i32
    return %arg0, %c0_i32 : i32, i32
  }
  func.func @transform_1(%arg0: i32) -> (i32, i32) {
    %c0_i32 = arith.constant 0 : i32
    %c0_i32_0 = arith.constant 0 : i32
    %c0_i32_1 = arith.constant 0 : i32
    return %c0_i32, %c0_i32_0 : i32, i32
  }
  func.func @transform_2(%arg0: i32) -> (i32, i32) {
    %c0_i32 = arith.constant 0 : i32
    %c0_i32_0 = arith.constant 0 : i32
    %c0_i32_1 = arith.constant 0 : i32
    return %c0_i32, %c0_i32_0 : i32, i32
  }
  func.func @transform_3(%arg0: i32) -> (i32, i32) {
    %c0_i32 = arith.constant 0 : i32
    %c0_i32_0 = arith.constant 0 : i32
    return %arg0, %c0_i32 : i32, i32
  }
}

module attributes {stable_mosaic.version = 11 : i64} {
  func.func @_ln_linear_kernel(%arg0: i32, %arg1: memref<64x32xbf16, #tpu.memory_space<vmem>>, %arg2: memref<1x32xf32, #tpu.memory_space<vmem>>, %arg3: memref<1x32xf32, #tpu.memory_space<vmem>>, %arg4: memref<32x96xbf16, #tpu.memory_space<vmem>>, %arg5: memref<1x96xf32, #tpu.memory_space<vmem>>, %arg6: memref<64x96xbf16, #tpu.memory_space<vmem>>) attributes {dimension_semantics = [#tpu.dimension_semantics<parallel>], iteration_bounds = array<i64: 1>, scalar_prefetch = 0 : i64, scratch_operands = 0 : i64, tpu.core_type = #tpu.core_type<tc>, window_params = [{transform_indices = @transform_0, window_bounds = array<i64: 64, 32>}, {pipeline_mode = #tpu.pipeline_mode<synchronous>, transform_indices = @transform_1, window_bounds = array<i64: 1, 32>}, {pipeline_mode = #tpu.pipeline_mode<synchronous>, transform_indices = @transform_2, window_bounds = array<i64: 1, 32>}, {pipeline_mode = #tpu.pipeline_mode<synchronous>, transform_indices = @transform_3, window_bounds = array<i64: 32, 96>}, {pipeline_mode = #tpu.pipeline_mode<synchronous>, transform_indices = @transform_4, window_bounds = array<i64: 1, 96>}, {transform_indices = @transform_5, window_bounds = array<i64: 64, 96>}]} {
    %c0 = arith.constant 0 : index
    %c0_0 = arith.constant 0 : index
    %0 = vector.load %arg1[%c0, %c0_0] : memref<64x32xbf16, #tpu.memory_space<vmem>>, vector<64x32xbf16>
    %1 = arith.extf %0 : vector<64x32xbf16> to vector<64x32xf32>
    %cst = arith.constant dense<0.000000e+00> : vector<64xf32>
    %2 = vector.multi_reduction <add>, %1, %cst [1] : vector<64x32xf32> to vector<64xf32>
    %3 = vector.shape_cast %2 : vector<64xf32> to vector<64x1xf32>
    %cst_1 = arith.constant 3.200000e+01 : f32
    %4 = vector.broadcast %cst_1 : f32 to vector<64x1xf32>
    %5 = arith.divf %3, %4 : vector<64x1xf32>
    %6 = vector.broadcast %5 : vector<64x1xf32> to vector<64x32xf32>
    %7 = arith.subf %1, %6 : vector<64x32xf32>
    %8 = arith.mulf %7, %7 : vector<64x32xf32>
    %cst_2 = arith.constant dense<0.000000e+00> : vector<64xf32>
    %9 = vector.multi_reduction <add>, %8, %cst_2 [1] : vector<64x32xf32> to vector<64xf32>
    %10 = vector.shape_cast %9 : vector<64xf32> to vector<64x1xf32>
    %cst_3 = arith.constant 3.200000e+01 : f32
    %11 = vector.broadcast %cst_3 : f32 to vector<64x1xf32>
    %12 = arith.divf %10, %11 : vector<64x1xf32>
    %13 = vector.broadcast %5 : vector<64x1xf32> to vector<64x32xf32>
    %14 = arith.subf %1, %13 : vector<64x32xf32>
    %cst_4 = arith.constant 9.99999974E-6 : f32
    %15 = vector.broadcast %cst_4 : f32 to vector<64x1xf32>
    %16 = arith.addf %12, %15 : vector<64x1xf32>
    %17 = math.rsqrt %16 : vector<64x1xf32>
    %18 = vector.broadcast %17 : vector<64x1xf32> to vector<64x32xf32>
    %19 = arith.mulf %14, %18 : vector<64x32xf32>
    %c0_5 = arith.constant 0 : index
    %c0_6 = arith.constant 0 : index
    %20 = vector.load %arg2[%c0_5, %c0_6] : memref<1x32xf32, #tpu.memory_space<vmem>>, vector<1x32xf32>
    %21 = vector.broadcast %20 : vector<1x32xf32> to vector<64x32xf32>
    %22 = arith.mulf %19, %21 : vector<64x32xf32>
    %c0_7 = arith.constant 0 : index
    %c0_8 = arith.constant 0 : index
    %23 = vector.load %arg3[%c0_7, %c0_8] : memref<1x32xf32, #tpu.memory_space<vmem>>, vector<1x32xf32>
    %24 = vector.broadcast %23 : vector<1x32xf32> to vector<64x32xf32>
    %25 = arith.addf %22, %24 : vector<64x32xf32>
    %26 = arith.truncf %25 : vector<64x32xf32> to vector<64x32xbf16>
    %c0_9 = arith.constant 0 : index
    %c0_10 = arith.constant 0 : index
    %27 = vector.load %arg4[%c0_9, %c0_10] : memref<32x96xbf16, #tpu.memory_space<vmem>>, vector<32x96xbf16>
    %cst_11 = arith.constant dense<0.000000e+00> : vector<64x96xf32>
    %28 = tpu.matmul %26, %27, %cst_11 {dimension_numbers = #tpu.dot_dimension_numbers<[1], [0], [0], [1], [0, 0, 1, 1], [], []>} : vector<64x32xbf16>, vector<32x96xbf16>, vector<64x96xf32> -> vector<64x96xf32>
    %c0_12 = arith.constant 0 : index
    %c0_13 = arith.constant 0 : index
    %29 = vector.load %arg5[%c0_12, %c0_13] : memref<1x96xf32, #tpu.memory_space<vmem>>, vector<1x96xf32>
    %30 = vector.broadcast %29 : vector<1x96xf32> to vector<64x96xf32>
    %31 = arith.addf %28, %30 : vector<64x96xf32>
    %32 = arith.truncf %31 : vector<64x96xf32> to vector<64x96xbf16>
    %c0_14 = arith.constant 0 : index
    %c0_15 = arith.constant 0 : index
    %33 = vector.load %arg6[%c0_14, %c0_15] : memref<64x96xbf16, #tpu.memory_space<vmem>>, vector<64x96xbf16>
    tpu.vector_store %arg6[%c0_14, %c0_15], %32 {strides = array<i32>} : memref<64x96xbf16, #tpu.memory_space<vmem>>, vector<64x96xbf16>,
    return
  }
  func.func @transform_0(%arg0: i32) -> (i32, i32) {
    %c0_i32 = arith.constant 0 : i32
    %c0_i32_0 = arith.constant 0 : i32
    return %arg0, %c0_i32 : i32, i32
  }
  func.func @transform_1(%arg0: i32) -> (i32, i32) {
    %c0_i32 = arith.constant 0 : i32
    %c0_i32_0 = arith.constant 0 : i32
    %c0_i32_1 = arith.constant 0 : i32
    return %c0_i32, %c0_i32_0 : i32, i32
  }
  func.func @transform_2(%arg0: i32) -> (i32, i32) {
    %c0_i32 = arith.constant 0 : i32
    %c0_i32_0 = arith.constant 0 : i32
    %c0_i32_1 = arith.constant 0 : i32
    return %c0_i32, %c0_i32_0 : i32, i32
  }
  func.func @transform_3(%arg0: i32) -> (i32, i32) {
    %c0_i32 = arith.constant 0 : i32
    %c0_i32_0 = arith.constant 0 : i32
    %c0_i32_1 = arith.constant 0 : i32
    return %c0_i32, %c0_i32_0 : i32, i32
  }
  func.func @transform_4(%arg0: i32) -> (i32, i32) {
    %c0_i32 = arith.constant 0 : i32
    %c0_i32_0 = arith.constant 0 : i32
    %c0_i32_1 = arith.constant 0 : i32
    return %c0_i32, %c0_i32_0 : i32, i32
  }
  func.func @transform_5(%arg0: i32) -> (i32, i32) {
    %c0_i32 = arith.constant 0 : i32
    %c0_i32_0 = arith.constant 0 : i32
    return %arg0, %c0_i32 : i32, i32
  }
}

module attributes {stable_mosaic.version = 11 : i64} {
  func.func @_mlp_kernel(%arg0: i32, %arg1: i32, %arg2: memref<32x32xbf16, #tpu.memory_space<vmem>>, %arg3: memref<1x32xf32, #tpu.memory_space<vmem>>, %arg4: memref<1x32xf32, #tpu.memory_space<vmem>>, %arg5: memref<32x128xbf16, #tpu.memory_space<vmem>>, %arg6: memref<1x128xf32, #tpu.memory_space<vmem>>, %arg7: memref<128x32xbf16, #tpu.memory_space<vmem>>, %arg8: memref<1x32xf32, #tpu.memory_space<vmem>>, %arg9: memref<32x32xbf16, #tpu.memory_space<vmem>>, %arg10: memref<32x32xbf16, #tpu.memory_space<vmem>>, %arg11: memref<32x32xf32, #tpu.memory_space<vmem>>) attributes {dimension_semantics = [#tpu.dimension_semantics<parallel>, #tpu.dimension_semantics<arbitrary>], iteration_bounds = array<i64: 1, 1>, scalar_prefetch = 0 : i64, scratch_operands = 2 : i64, tpu.core_type = #tpu.core_type<tc>, window_params = [{transform_indices = @transform_0, window_bounds = array<i64: 32, 32>}, {pipeline_mode = #tpu.pipeline_mode<synchronous>, transform_indices = @transform_1, window_bounds = array<i64: 1, 32>}, {pipeline_mode = #tpu.pipeline_mode<synchronous>, transform_indices = @transform_2, window_bounds = array<i64: 1, 32>}, {transform_indices = @transform_3, window_bounds = array<i64: 32, 128>}, {transform_indices = @transform_4, window_bounds = array<i64: 1, 128>}, {transform_indices = @transform_5, window_bounds = array<i64: 128, 32>}, {pipeline_mode = #tpu.pipeline_mode<synchronous>, transform_indices = @transform_6, window_bounds = array<i64: 1, 32>}, {transform_indices = @transform_7, window_bounds = array<i64: 32, 32>}]} {
    %c0_i32 = arith.constant 0 : i32
    %0 = arith.cmpi eq, %arg1, %c0_i32 : i32
    %1 = arith.extui %0 : i1 to i32
    %c0_i32_0 = arith.constant 0 : i32
    %2 = arith.cmpi ne, %1, %c0_i32_0 : i32
    scf.if %2 {
      %c0_17 = arith.constant 0 : index
      %c0_18 = arith.constant 0 : index
      %26 = vector.load %arg2[%c0_17, %c0_18] : memref<32x32xbf16, #tpu.memory_space<vmem>>, vector<32x32xbf16>
      %27 = arith.extf %26 : vector<32x32xbf16> to vector<32x32xf32>
      %cst_19 = arith.constant dense<0.000000e+00> : vector<32xf32>
      %28 = vector.multi_reduction <add>, %27, %cst_19 [1] : vector<32x32xf32> to vector<32xf32>
      %29 = vector.shape_cast %28 : vector<32xf32> to vector<32x1xf32>
      %cst_20 = arith.constant 3.200000e+01 : f32
      %30 = vector.broadcast %cst_20 : f32 to vector<32x1xf32>
      %31 = arith.divf %29, %30 : vector<32x1xf32>
      %32 = vector.broadcast %31 : vector<32x1xf32> to vector<32x32xf32>
      %33 = arith.subf %27, %32 : vector<32x32xf32>
      %34 = arith.mulf %33, %33 : vector<32x32xf32>
      %cst_21 = arith.constant dense<0.000000e+00> : vector<32xf32>
      %35 = vector.multi_reduction <add>, %34, %cst_21 [1] : vector<32x32xf32> to vector<32xf32>
      %36 = vector.shape_cast %35 : vector<32xf32> to vector<32x1xf32>
      %cst_22 = arith.constant 3.200000e+01 : f32
      %37 = vector.broadcast %cst_22 : f32 to vector<32x1xf32>
      %38 = arith.divf %36, %37 : vector<32x1xf32>
      %39 = vector.broadcast %31 : vector<32x1xf32> to vector<32x32xf32>
      %40 = arith.subf %27, %39 : vector<32x32xf32>
      %cst_23 = arith.constant 9.99999974E-6 : f32
      %41 = vector.broadcast %cst_23 : f32 to vector<32x1xf32>
      %42 = arith.addf %38, %41 : vector<32x1xf32>
      %43 = math.rsqrt %42 : vector<32x1xf32>
      %44 = vector.broadcast %43 : vector<32x1xf32> to vector<32x32xf32>
      %45 = arith.mulf %40, %44 : vector<32x32xf32>
      %c0_24 = arith.constant 0 : index
      %c0_25 = arith.constant 0 : index
      %46 = vector.load %arg3[%c0_24, %c0_25] : memref<1x32xf32, #tpu.memory_space<vmem>>, vector<1x32xf32>
      %47 = vector.broadcast %46 : vector<1x32xf32> to vector<32x32xf32>
      %48 = arith.mulf %45, %47 : vector<32x32xf32>
      %c0_26 = arith.constant 0 : index
      %c0_27 = arith.constant 0 : index
      %49 = vector.load %arg4[%c0_26, %c0_27] : memref<1x32xf32, #tpu.memory_space<vmem>>, vector<1x32xf32>
      %50 = vector.broadcast %49 : vector<1x32xf32> to vector<32x32xf32>
      %51 = arith.addf %48, %50 : vector<32x32xf32>
      %52 = arith.truncf %51 : vector<32x32xf32> to vector<32x32xbf16>
      %c0_28 = arith.constant 0 : index
      %c0_29 = arith.constant 0 : index
      %53 = vector.load %arg10[%c0_28, %c0_29] : memref<32x32xbf16, #tpu.memory_space<vmem>>, vector<32x32xbf16>
      tpu.vector_store %arg10[%c0_28, %c0_29], %52 {strides = array<i32>} : memref<32x32xbf16, #tpu.memory_space<vmem>>, vector<32x32xbf16>,
      %cst_30 = arith.constant 0.000000e+00 : f32
      %54 = vector.broadcast %cst_30 : f32 to vector<32x32xf32>
      %c0_31 = arith.constant 0 : index
      %c0_32 = arith.constant 0 : index
      %55 = vector.load %arg11[%c0_31, %c0_32] : memref<32x32xf32, #tpu.memory_space<vmem>>, vector<32x32xf32>
      tpu.vector_store %arg11[%c0_31, %c0_32], %54 {strides = array<i32>} : memref<32x32xf32, #tpu.memory_space<vmem>>, vector<32x32xf32>,
    } else {
    }
    %c0 = arith.constant 0 : index
    %c0_1 = arith.constant 0 : index
    %3 = vector.load %arg10[%c0, %c0_1] : memref<32x32xbf16, #tpu.memory_space<vmem>>, vector<32x32xbf16>
    %c0_2 = arith.constant 0 : index
    %c0_3 = arith.constant 0 : index
    %4 = vector.load %arg5[%c0_2, %c0_3] : memref<32x128xbf16, #tpu.memory_space<vmem>>, vector<32x128xbf16>
    %cst = arith.constant dense<0.000000e+00> : vector<32x128xf32>
    %5 = tpu.matmul %3, %4, %cst {dimension_numbers = #tpu.dot_dimension_numbers<[1], [0], [0], [1], [0, 0, 1, 1], [], []>} : vector<32x32xbf16>, vector<32x128xbf16>, vector<32x128xf32> -> vector<32x128xf32>
    %c0_4 = arith.constant 0 : index
    %c0_5 = arith.constant 0 : index
    %6 = vector.load %arg6[%c0_4, %c0_5] : memref<1x128xf32, #tpu.memory_space<vmem>>, vector<1x128xf32>
    %7 = vector.broadcast %6 : vector<1x128xf32> to vector<32x128xf32>
    %8 = arith.addf %5, %7 : vector<32x128xf32>
    %cst_6 = arith.constant 1.702000e+00 : f32
    %9 = vector.broadcast %cst_6 : f32 to vector<32x128xf32>
    %10 = arith.mulf %9, %8 : vector<32x128xf32>
    %11 = arith.negf %10 : vector<32x128xf32>
    %12 = math.exp %11 : vector<32x128xf32>
    %cst_7 = arith.constant 1.000000e+00 : f32
    %13 = vector.broadcast %cst_7 : f32 to vector<32x128xf32>
    %14 = arith.addf %13, %12 : vector<32x128xf32>
    %15 = arith.divf %13, %14 : vector<32x128xf32>
    %16 = arith.mulf %8, %15 : vector<32x128xf32>
    %c0_8 = arith.constant 0 : index
    %c0_9 = arith.constant 0 : index
    %17 = vector.load %arg11[%c0_8, %c0_9] : memref<32x32xf32, #tpu.memory_space<vmem>>, vector<32x32xf32>
    %18 = arith.truncf %16 : vector<32x128xf32> to vector<32x128xbf16>
    %c0_10 = arith.constant 0 : index
    %c0_11 = arith.constant 0 : index
    %19 = vector.load %arg7[%c0_10, %c0_11] : memref<128x32xbf16, #tpu.memory_space<vmem>>, vector<128x32xbf16>
    %cst_12 = arith.constant dense<0.000000e+00> : vector<32x32xf32>
    %20 = tpu.matmul %18, %19, %cst_12 {dimension_numbers = #tpu.dot_dimension_numbers<[1], [0], [0], [1], [0, 0, 1, 1], [], []>} : vector<32x128xbf16>, vector<128x32xbf16>, vector<32x32xf32> -> vector<32x32xf32>
    %21 = arith.addf %17, %20 : vector<32x32xf32>
    %c0_13 = arith.constant 0 : index
    %c0_14 = arith.constant 0 : index
    %22 = vector.load %arg11[%c0_13, %c0_14] : memref<32x32xf32, #tpu.memory_space<vmem>>, vector<32x32xf32>
    tpu.vector_store %arg11[%c0_13, %c0_14], %21 {strides = array<i32>} : memref<32x32xf32, #tpu.memory_space<vmem>>, vector<32x32xf32>,
    %c0_i32_15 = arith.constant 0 : i32
    %23 = arith.cmpi eq, %arg1, %c0_i32_15 : i32
    %24 = arith.extui %23 : i1 to i32
    %c0_i32_16 = arith.constant 0 : i32
    %25 = arith.cmpi ne, %24, %c0_i32_16 : i32
    scf.if %25 {
      %c0_17 = arith.constant 0 : index
      %c0_18 = arith.constant 0 : index
      %26 = vector.load %arg2[%c0_17, %c0_18] : memref<32x32xbf16, #tpu.memory_space<vmem>>, vector<32x32xbf16>
      %27 = arith.extf %26 : vector<32x32xbf16> to vector<32x32xf32>
      %c0_19 = arith.constant 0 : index
      %c0_20 = arith.constant 0 : index
      %28 = vector.load %arg11[%c0_19, %c0_20] : memref<32x32xf32, #tpu.memory_space<vmem>>, vector<32x32xf32>
      %29 = arith.addf %27, %28 : vector<32x32xf32>
      %c0_21 = arith.constant 0 : index
      %c0_22 = arith.constant 0 : index
      %30 = vector.load %arg8[%c0_21, %c0_22] : memref<1x32xf32, #tpu.memory_space<vmem>>, vector<1x32xf32>
      %31 = vector.broadcast %30 : vector<1x32xf32> to vector<32x32xf32>
      %32 = arith.addf %29, %31 : vector<32x32xf32>
      %33 = arith.truncf %32 : vector<32x32xf32> to vector<32x32xbf16>
      %c0_23 = arith.constant 0 : index
      %c0_24 = arith.constant 0 : index
      %34 = vector.load %arg9[%c0_23, %c0_24] : memref<32x32xbf16, #tpu.memory_space<vmem>>, vector<32x32xbf16>
      tpu.vector_store %arg9[%c0_23, %c0_24], %33 {strides = array<i32>} : memref<32x32xbf16, #tpu.memory_space<vmem>>, vector<32x32xbf16>,
    } else {
    }
    return
  }
  func.func @transform_0(%arg0: i32, %arg1: i32) -> (i32, i32) {
    %c0_i32 = arith.constant 0 : i32
    %c0_i32_0 = arith.constant 0 : i32
    return %arg0, %c0_i32 : i32, i32
  }
  func.func @transform_1(%arg0: i32, %arg1: i32) -> (i32, i32) {
    %c0_i32 = arith.constant 0 : i32
    %c0_i32_0 = arith.constant 0 : i32
    %c0_i32_1 = arith.constant 0 : i32
    return %c0_i32, %c0_i32_0 : i32, i32
  }
  func.func @transform_2(%arg0: i32, %arg1: i32) -> (i32, i32) {
    %c0_i32 = arith.constant 0 : i32
    %c0_i32_0 = arith.constant 0 : i32
    %c0_i32_1 = arith.constant 0 : i32
    return %c0_i32, %c0_i32_0 : i32, i32
  }
  func.func @transform_3(%arg0: i32, %arg1: i32) -> (i32, i32) {
    %c0_i32 = arith.constant 0 : i32
    %c0_i32_0 = arith.constant 0 : i32
    return %c0_i32, %arg1 : i32, i32
  }
  func.func @transform_4(%arg0: i32, %arg1: i32) -> (i32, i32) {
    %c0_i32 = arith.constant 0 : i32
    %c0_i32_0 = arith.constant 0 : i32
    return %c0_i32, %arg1 : i32, i32
  }
  func.func @transform_5(%arg0: i32, %arg1: i32) -> (i32, i32) {
    %c0_i32 = arith.constant 0 : i32
    %c0_i32_0 = arith.constant 0 : i32
    return %arg1, %c0_i32 : i32, i32
  }
  func.func @transform_6(%arg0: i32, %arg1: i32) -> (i32, i32) {
    %c0_i32 = arith.constant 0 : i32
    %c0_i32_0 = arith.constant 0 : i32
    %c0_i32_1 = arith.constant 0 : i32
    return %c0_i32, %c0_i32_0 : i32, i32
  }
  func.func @transform_7(%arg0: i32, %arg1: i32) -> (i32, i32) {
    %c0_i32 = arith.constant 0 : i32
    %c0_i32_0 = arith.constant 0 : i32
    return %arg0, %c0_i32 : i32, i32
  }
}

module attributes {stable_mosaic.version = 11 : i64} {
  func.func @_attn_kernel(%arg0: i32, %arg1: i32, %arg2: memref<1x1x16x8xbf16, #tpu.memory_space<vmem>>, %arg3: memref<1x1x32x8xbf16, #tpu.memory_space<vmem>>, %arg4: memref<1x1x8x32xbf16, #tpu.memory_space<vmem>>, %arg5: memref<1x1x32x8xbf16, #tpu.memory_space<vmem>>, %arg6: memref<1x16x32xf32, #tpu.memory_space<vmem>>, %arg7: memref<1x32xf32, #tpu.memory_space<vmem>>, %arg8: memref<1x8x32xbf16, #tpu.memory_space<vmem>>, %arg9: memref<1x32xf32, #tpu.memory_space<vmem>>, %arg10: memref<1x16x32xbf16, #tpu.memory_space<vmem>>, %arg11: memref<1x32x32xbf16, #tpu.memory_space<vmem>>, %arg12: memref<1x16x32xbf16, #tpu.memory_space<vmem>>, %arg13: memref<1x32x32xbf16, #tpu.memory_space<vmem>>, %arg14: memref<16x32xf32, #tpu.memory_space<vmem>>, %arg15: memref<32x32xf32, #tpu.memory_space<vmem>>) attributes {dimension_semantics = [#tpu.dimension_semantics<parallel>, #tpu.dimension_semantics<arbitrary>], iteration_bounds = array<i64: 2, 4>, scalar_prefetch = 0 : i64, scratch_operands = 2 : i64, tpu.core_type = #tpu.core_type<tc>, window_params = [{transform_indices = @transform_0, window_bounds = array<i64: 1, 1, 16, 8>}, {transform_indices = @transform_1, window_bounds = array<i64: 1, 1, 32, 8>}, {transform_indices = @transform_2, window_bounds = array<i64: 1, 1, 8, 32>}, {transform_indices = @transform_3, window_bounds = array<i64: 1, 1, 32, 8>}, {transform_indices = @transform_4, window_bounds = array<i64: 1, 16, 32>}, {pipeline_mode = #tpu.pipeline_mode<synchronous>, transform_indices = @transform_5, window_bounds = array<i64: 1, 32>}, {transform_indices = @transform_6, window_bounds = array<i64: 1, 8, 32>}, {pipeline_mode = #tpu.pipeline_mode<synchronous>, transform_indices = @transform_7, window_bounds = array<i64: 1, 32>}, {transform_indices = @transform_8, window_bounds = array<i64: 1, 16, 32>}, {transform_indices = @transform_9, window_bounds = array<i64: 1, 32, 32>}, {transform_indices = @transform_10, window_bounds = array<i64: 1, 16, 32>}, {transform_indices = @transform_11, window_bounds = array<i64: 1, 32, 32>}]} {
    %c0_i32 = arith.constant 0 : i32
    %0 = arith.cmpi eq, %arg1, %c0_i32 : i32
    %1 = arith.extui %0 : i1 to i32
    %c0_i32_0 = arith.constant 0 : i32
    %2 = arith.cmpi ne, %1, %c0_i32_0 : i32
    scf.if %2 {
      %cst_44 = arith.constant 0.000000e+00 : f32
      %62 = vector.broadcast %cst_44 : f32 to vector<16x32xf32>
      %c0_45 = arith.constant 0 : index
      %c0_46 = arith.constant 0 : index
      %63 = vector.load %arg14[%c0_45, %c0_46] : memref<16x32xf32, #tpu.memory_space<vmem>>, vector<16x32xf32>
      tpu.vector_store %arg14[%c0_45, %c0_46], %62 {strides = array<i32>} : memref<16x32xf32, #tpu.memory_space<vmem>>, vector<16x32xf32>,
      %cst_47 = arith.constant 0.000000e+00 : f32
      %64 = vector.broadcast %cst_47 : f32 to vector<32x32xf32>
      %c0_48 = arith.constant 0 : index
      %c0_49 = arith.constant 0 : index
      %65 = vector.load %arg15[%c0_48, %c0_49] : memref<32x32xf32, #tpu.memory_space<vmem>>, vector<32x32xf32>
      tpu.vector_store %arg15[%c0_48, %c0_49], %64 {strides = array<i32>} : memref<32x32xf32, #tpu.memory_space<vmem>>, vector<32x32xf32>,
    } else {
    }
    %c0 = arith.constant 0 : index
    %c0_1 = arith.constant 0 : index
    %c0_2 = arith.constant 0 : index
    %c0_3 = arith.constant 0 : index
    %3 = vector.load %arg4[%c0, %c0_1, %c0_2, %c0_3] : memref<1x1x8x32xbf16, #tpu.memory_space<vmem>>, vector<1x1x8x32xbf16>
    %4 = vector.shape_cast %3 : vector<1x1x8x32xbf16> to vector<8x32xbf16>
    %c0_4 = arith.constant 0 : index
    %c0_5 = arith.constant 0 : index
    %c0_6 = arith.constant 0 : index
    %c0_7 = arith.constant 0 : index
    %5 = vector.load %arg5[%c0_4, %c0_5, %c0_6, %c0_7] : memref<1x1x32x8xbf16, #tpu.memory_space<vmem>>, vector<1x1x32x8xbf16>
    %6 = vector.shape_cast %5 : vector<1x1x32x8xbf16> to vector<32x8xbf16>
    %c0_8 = arith.constant 0 : index
    %c0_9 = arith.constant 0 : index
    %c0_10 = arith.constant 0 : index
    %7 = vector.load %arg8[%c0_8, %c0_9, %c0_10] : memref<1x8x32xbf16, #tpu.memory_space<vmem>>, vector<1x8x32xbf16>
    %8 = vector.shape_cast %7 : vector<1x8x32xbf16> to vector<8x32xbf16>
    %c0_11 = arith.constant 0 : index
    %c0_12 = arith.constant 0 : index
    %c0_13 = arith.constant 0 : index
    %c0_14 = arith.constant 0 : index
    %9 = vector.load %arg2[%c0_11, %c0_12, %c0_13, %c0_14] : memref<1x1x16x8xbf16, #tpu.memory_space<vmem>>, vector<1x1x16x8xbf16>
    %10 = vector.shape_cast %9 : vector<1x1x16x8xbf16> to vector<16x8xbf16>
    %c0_15 = arith.constant 0 : index
    %c0_16 = arith.constant 0 : index
    %c0_17 = arith.constant 0 : index
    %11 = vector.load %arg6[%c0_15, %c0_16, %c0_17] : memref<1x16x32xf32, #tpu.memory_space<vmem>>, vector<1x16x32xf32>
    %12 = vector.shape_cast %11 : vector<1x16x32xf32> to vector<16x32xf32>
    %cst = arith.constant dense<0.000000e+00> : vector<16x32xf32>
    %13 = tpu.matmul %10, %4, %cst {dimension_numbers = #tpu.dot_dimension_numbers<[1], [0], [0], [1], [0, 0, 1, 1], [], []>} : vector<16x8xbf16>, vector<8x32xbf16>, vector<16x32xf32> -> vector<16x32xf32>
    %cst_18 = arith.constant 0.353553385 : f32
    %14 = vector.broadcast %cst_18 : f32 to vector<16x32xf32>
    %15 = arith.mulf %13, %14 : vector<16x32xf32>
    %16 = arith.addf %15, %12 : vector<16x32xf32>
    %cst_19 = arith.constant dense<0xFF800000> : vector<16xf32>
    %17 = vector.multi_reduction <maximumf>, %16, %cst_19 [1] : vector<16x32xf32> to vector<16xf32>
    %18 = vector.shape_cast %17 : vector<16xf32> to vector<16x1xf32>
    %19 = vector.broadcast %18 : vector<16x1xf32> to vector<16x32xf32>
    %20 = arith.subf %16, %19 : vector<16x32xf32>
    %21 = math.exp %20 : vector<16x32xf32>
    %cst_20 = arith.constant dense<0.000000e+00> : vector<16xf32>
    %22 = vector.multi_reduction <add>, %21, %cst_20 [1] : vector<16x32xf32> to vector<16xf32>
    %23 = vector.shape_cast %22 : vector<16xf32> to vector<16x1xf32>
    %24 = tpu.reciprocal %23 {approx = true} : vector<16x1xf32> -> vector<16x1xf32>
    %25 = vector.broadcast %24 : vector<16x1xf32> to vector<16x32xf32>
    %26 = arith.mulf %21, %25 : vector<16x32xf32>
    %27 = arith.truncf %26 : vector<16x32xf32> to vector<16x32xbf16>
    %cst_21 = arith.constant dense<0.000000e+00> : vector<16x8xf32>
    %28 = tpu.matmul %27, %6, %cst_21 {dimension_numbers = #tpu.dot_dimension_numbers<[1], [0], [0], [1], [0, 0, 1, 1], [], []>} : vector<16x32xbf16>, vector<32x8xbf16>, vector<16x8xf32> -> vector<16x8xf32>
    %c0_22 = arith.constant 0 : index
    %c0_23 = arith.constant 0 : index
    %c0_24 = arith.constant 0 : index
    %c0_25 = arith.constant 0 : index
    %29 = vector.load %arg3[%c0_22, %c0_23, %c0_24, %c0_25] : memref<1x1x32x8xbf16, #tpu.memory_space<vmem>>, vector<1x1x32x8xbf16>
    %30 = vector.shape_cast %29 : vector<1x1x32x8xbf16> to vector<32x8xbf16>
    %c0_26 = arith.constant 0 : index
    %c0_27 = arith.constant 0 : index
    %31 = vector.load %arg7[%c0_26, %c0_27] : memref<1x32xf32, #tpu.memory_space<vmem>>, vector<1x32xf32>
    %cst_28 = arith.constant dense<0.000000e+00> : vector<32x32xf32>
    %32 = tpu.matmul %30, %4, %cst_28 {dimension_numbers = #tpu.dot_dimension_numbers<[1], [0], [0], [1], [0, 0, 1, 1], [], []>} : vector<32x8xbf16>, vector<8x32xbf16>, vector<32x32xf32> -> vector<32x32xf32>
    %cst_29 = arith.constant 0.353553385 : f32
    %33 = vector.broadcast %cst_29 : f32 to vector<32x32xf32>
    %34 = arith.mulf %32, %33 : vector<32x32xf32>
    %35 = vector.broadcast %31 : vector<1x32xf32> to vector<32x32xf32>
    %36 = arith.addf %34, %35 : vector<32x32xf32>
    %cst_30 = arith.constant dense<0xFF800000> : vector<32xf32>
    %37 = vector.multi_reduction <maximumf>, %36, %cst_30 [1] : vector<32x32xf32> to vector<32xf32>
    %38 = vector.shape_cast %37 : vector<32xf32> to vector<32x1xf32>
    %39 = vector.broadcast %38 : vector<32x1xf32> to vector<32x32xf32>
    %40 = arith.subf %36, %39 : vector<32x32xf32>
    %41 = math.exp %40 : vector<32x32xf32>
    %cst_31 = arith.constant dense<0.000000e+00> : vector<32xf32>
    %42 = vector.multi_reduction <add>, %41, %cst_31 [1] : vector<32x32xf32> to vector<32xf32>
    %43 = vector.shape_cast %42 : vector<32xf32> to vector<32x1xf32>
    %44 = tpu.reciprocal %43 {approx = true} : vector<32x1xf32> -> vector<32x1xf32>
    %45 = vector.broadcast %44 : vector<32x1xf32> to vector<32x32xf32>
    %46 = arith.mulf %41, %45 : vector<32x32xf32>
    %47 = arith.truncf %46 : vector<32x32xf32> to vector<32x32xbf16>
    %cst_32 = arith.constant dense<0.000000e+00> : vector<32x8xf32>
    %48 = tpu.matmul %47, %6, %cst_32 {dimension_numbers = #tpu.dot_dimension_numbers<[1], [0], [0], [1], [0, 0, 1, 1], [], []>} : vector<32x32xbf16>, vector<32x8xbf16>, vector<32x8xf32> -> vector<32x8xf32>
    %c0_33 = arith.constant 0 : index
    %c0_34 = arith.constant 0 : index
    %49 = vector.load %arg14[%c0_33, %c0_34] : memref<16x32xf32, #tpu.memory_space<vmem>>, vector<16x32xf32>
    %50 = arith.truncf %28 : vector<16x8xf32> to vector<16x8xbf16>
    %cst_35 = arith.constant dense<0.000000e+00> : vector<16x32xf32>
    %51 = tpu.matmul %50, %8, %cst_35 {dimension_numbers = #tpu.dot_dimension_numbers<[1], [0], [0], [1], [0, 0, 1, 1], [], []>} : vector<16x8xbf16>, vector<8x32xbf16>, vector<16x32xf32> -> vector<16x32xf32>
    %52 = arith.addf %49, %51 : vector<16x32xf32>
    %c0_36 = arith.constant 0 : index
    %c0_37 = arith.constant 0 : index
    %53 = vector.load %arg14[%c0_36, %c0_37] : memref<16x32xf32, #tpu.memory_space<vmem>>, vector<16x32xf32>
    tpu.vector_store %arg14[%c0_36, %c0_37], %52 {strides = array<i32>} : memref<16x32xf32, #tpu.memory_space<vmem>>, vector<16x32xf32>,
    %c0_38 = arith.constant 0 : index
    %c0_39 = arith.constant 0 : index
    %54 = vector.load %arg15[%c0_38, %c0_39] : memref<32x32xf32, #tpu.memory_space<vmem>>, vector<32x32xf32>
    %55 = arith.truncf %48 : vector<32x8xf32> to vector<32x8xbf16>
    %cst_40 = arith.constant dense<0.000000e+00> : vector<32x32xf32>
    %56 = tpu.matmul %55, %8, %cst_40 {dimension_numbers = #tpu.dot_dimension_numbers<[1], [0], [0], [1], [0, 0, 1, 1], [], []>} : vector<32x8xbf16>, vector<8x32xbf16>, vector<32x32xf32> -> vector<32x32xf32>
    %57 = arith.addf %54, %56 : vector<32x32xf32>
    %c0_41 = arith.constant 0 : index
    %c0_42 = arith.constant 0 : index
    %58 = vector.load %arg15[%c0_41, %c0_42] : memref<32x32xf32, #tpu.memory_space<vmem>>, vector<32x32xf32>
    tpu.vector_store %arg15[%c0_41, %c0_42], %57 {strides = array<i32>} : memref<32x32xf32, #tpu.memory_space<vmem>>, vector<32x32xf32>,
    %c3_i32 = arith.constant 3 : i32
    %59 = arith.cmpi eq, %arg1, %c3_i32 : i32
    %60 = arith.extui %59 : i1 to i32
    %c0_i32_43 = arith.constant 0 : i32
    %61 = arith.cmpi ne, %60, %c0_i32_43 : i32
    scf.if %61 {
      %c0_44 = arith.constant 0 : index
      %c0_45 = arith.constant 0 : index
      %62 = vector.load %arg9[%c0_44, %c0_45] : memref<1x32xf32, #tpu.memory_space<vmem>>, vector<1x32xf32>
      %c0_46 = arith.constant 0 : index
      %c0_47 = arith.constant 0 : index
      %c0_48 = arith.constant 0 : index
      %63 = vector.load %arg10[%c0_46, %c0_47, %c0_48] : memref<1x16x32xbf16, #tpu.memory_space<vmem>>, vector<1x16x32xbf16>
      %64 = vector.shape_cast %63 : vector<1x16x32xbf16> to vector<16x32xbf16>
      %65 = arith.extf %64 : vector<16x32xbf16> to vector<16x32xf32>
      %c0_49 = arith.constant 0 : index
      %c0_50 = arith.constant 0 : index
      %66 = vector.load %arg14[%c0_49, %c0_50] : memref<16x32xf32, #tpu.memory_space<vmem>>, vector<16x32xf32>
      %67 = arith.addf %65, %66 : vector<16x32xf32>
      %68 = vector.broadcast %62 : vector<1x32xf32> to vector<16x32xf32>
      %69 = arith.addf %67, %68 : vector<16x32xf32>
      %70 = arith.truncf %69 : vector<16x32xf32> to vector<16x32xbf16>
      %c0_51 = arith.constant 0 : index
      %c0_52 = arith.constant 0 : index
      %c0_53 = arith.constant 0 : index
      %71 = vector.load %arg12[%c0_51, %c0_52, %c0_53] : memref<1x16x32xbf16, #tpu.memory_space<vmem>>, vector<1x16x32xbf16>
      %72 = vector.shape_cast %71 : vector<1x16x32xbf16> to vector<16x32xbf16>
      %73 = vector.shape_cast %70 : vector<16x32xbf16> to vector<1x16x32xbf16>
      tpu.vector_store %arg12[%c0_51, %c0_52, %c0_53], %73 {strides = array<i32>} : memref<1x16x32xbf16, #tpu.memory_space<vmem>>, vector<1x16x32xbf16>,
      %c0_54 = arith.constant 0 : index
      %c0_55 = arith.constant 0 : index
      %c0_56 = arith.constant 0 : index
      %74 = vector.load %arg11[%c0_54, %c0_55, %c0_56] : memref<1x32x32xbf16, #tpu.memory_space<vmem>>, vector<1x32x32xbf16>
      %75 = vector.shape_cast %74 : vector<1x32x32xbf16> to vector<32x32xbf16>
      %76 = arith.extf %75 : vector<32x32xbf16> to vector<32x32xf32>
      %c0_57 = arith.constant 0 : index
      %c0_58 = arith.constant 0 : index
      %77 = vector.load %arg15[%c0_57, %c0_58] : memref<32x32xf32, #tpu.memory_space<vmem>>, vector<32x32xf32>
      %78 = arith.addf %76, %77 : vector<32x32xf32>
      %79 = vector.broadcast %62 : vector<1x32xf32> to vector<32x32xf32>
      %80 = arith.addf %78, %79 : vector<32x32xf32>
      %81 = arith.truncf %80 : vector<32x32xf32> to vector<32x32xbf16>
      %c0_59 = arith.constant 0 : index
      %c0_60 = arith.constant 0 : index
      %c0_61 = arith.constant 0 : index
      %82 = vector.load %arg13[%c0_59, %c0_60, %c0_61] : memref<1x32x32xbf16, #tpu.memory_space<vmem>>, vector<1x32x32xbf16>
      %83 = vector.shape_cast %82 : vector<1x32x32xbf16> to vector<32x32xbf16>
      %84 = vector.shape_cast %81 : vector<32x32xbf16> to vector<1x32x32xbf16>
      tpu.vector_store %arg13[%c0_59, %c0_60, %c0_61], %84 {strides = array<i32>} : memref<1x32x32xbf16, #tpu.memory_space<vmem>>, vector<1x32x32xbf16>,
    } else {
    }
    return
  }
  func.func @transform_0(%arg0: i32, %arg1: i32) -> (i32, i32, i32, i32) {
    %c0_i32 = arith.constant 0 : i32
    %c0_i32_0 = arith.constant 0 : i32
    %c0_i32_1 = arith.constant 0 : i32
    return %arg0, %arg1, %c0_i32, %c0_i32_0 : i32, i32, i32, i32
  }
  func.func @transform_1(%arg0: i32, %arg1: i32) -> (i32, i32, i32, i32) {
    %c0_i32 = arith.constant 0 : i32
    %c0_i32_0 = arith.constant 0 : i32
    %c0_i32_1 = arith.constant 0 : i32
    return %arg0, %arg1, %c0_i32, %c0_i32_0 : i32, i32, i32, i32
  }
  func.func @transform_2(%arg0: i32, %arg1: i32) -> (i32, i32, i32, i32) {
    %c0_i32 = arith.constant 0 : i32
    %c0_i32_0 = arith.constant 0 : i32
    %c0_i32_1 = arith.constant 0 : i32
    return %arg0, %arg1, %c0_i32, %c0_i32_0 : i32, i32, i32, i32
  }
  func.func @transform_3(%arg0: i32, %arg1: i32) -> (i32, i32, i32, i32) {
    %c0_i32 = arith.constant 0 : i32
    %c0_i32_0 = arith.constant 0 : i32
    %c0_i32_1 = arith.constant 0 : i32
    return %arg0, %arg1, %c0_i32, %c0_i32_0 : i32, i32, i32, i32
  }
  func.func @transform_4(%arg0: i32, %arg1: i32) -> (i32, i32, i32) {
    %c0_i32 = arith.constant 0 : i32
    %c0_i32_0 = arith.constant 0 : i32
    %c0_i32_1 = arith.constant 0 : i32
    return %arg0, %c0_i32, %c0_i32_0 : i32, i32, i32
  }
  func.func @transform_5(%arg0: i32, %arg1: i32) -> (i32, i32) {
    %c0_i32 = arith.constant 0 : i32
    %c0_i32_0 = arith.constant 0 : i32
    %c0_i32_1 = arith.constant 0 : i32
    return %c0_i32, %c0_i32_0 : i32, i32
  }
  func.func @transform_6(%arg0: i32, %arg1: i32) -> (i32, i32, i32) {
    %c0_i32 = arith.constant 0 : i32
    %c0_i32_0 = arith.constant 0 : i32
    %c0_i32_1 = arith.constant 0 : i32
    return %arg1, %c0_i32, %c0_i32_0 : i32, i32, i32
  }
  func.func @transform_7(%arg0: i32, %arg1: i32) -> (i32, i32) {
    %c0_i32 = arith.constant 0 : i32
    %c0_i32_0 = arith.constant 0 : i32
    %c0_i32_1 = arith.constant 0 : i32
    return %c0_i32, %c0_i32_0 : i32, i32
  }
  func.func @transform_8(%arg0: i32, %arg1: i32) -> (i32, i32, i32) {
    %c0_i32 = arith.constant 0 : i32
    %c0_i32_0 = arith.constant 0 : i32
    %c0_i32_1 = arith.constant 0 : i32
    return %arg0, %c0_i32, %c0_i32_0 : i32, i32, i32
  }
  func.func @transform_9(%arg0: i32, %arg1: i32) -> (i32, i32, i32) {
    %c0_i32 = arith.constant 0 : i32
    %c0_i32_0 = arith.constant 0 : i32
    %c0_i32_1 = arith.constant 0 : i32
    return %arg0, %c0_i32, %c0_i32_0 : i32, i32, i32
  }
  func.func @transform_10(%arg0: i32, %arg1: i32) -> (i32, i32, i32) {
    %c0_i32 = arith.constant 0 : i32
    %c0_i32_0 = arith.constant 0 : i32
    %c0_i32_1 = arith.constant 0 : i32
    return %arg0, %c0_i32, %c0_i32_0 : i32, i32, i32
  }
  func.func @transform_11(%arg0: i32, %arg1: i32) -> (i32, i32, i32) {
    %c0_i32 = arith.constant 0 : i32
    %c0_i32_0 = arith.constant 0 : i32
    %c0_i32_1 = arith.constant 0 : i32
    return %arg0, %c0_i32, %c0_i32_0 : i32, i32, i32
  }
}

module attributes {stable_mosaic.version = 11 : i64} {
  func.func @_mlp_kernel(%arg0: i32, %arg1: i32, %arg2: memref<64x32xbf16, #tpu.memory_space<vmem>>, %arg3: memref<1x32xf32, #tpu.memory_space<vmem>>, %arg4: memref<1x32xf32, #tpu.memory_space<vmem>>, %arg5: memref<32x128xbf16, #tpu.memory_space<vmem>>, %arg6: memref<1x128xf32, #tpu.memory_space<vmem>>, %arg7: memref<128x32xbf16, #tpu.memory_space<vmem>>, %arg8: memref<1x32xf32, #tpu.memory_space<vmem>>, %arg9: memref<64x32xbf16, #tpu.memory_space<vmem>>, %arg10: memref<64x32xbf16, #tpu.memory_space<vmem>>, %arg11: memref<64x32xf32, #tpu.memory_space<vmem>>) attributes {dimension_semantics = [#tpu.dimension_semantics<parallel>, #tpu.dimension_semantics<arbitrary>], iteration_bounds = array<i64: 1, 1>, scalar_prefetch = 0 : i64, scratch_operands = 2 : i64, tpu.core_type = #tpu.core_type<tc>, window_params = [{transform_indices = @transform_0, window_bounds = array<i64: 64, 32>}, {pipeline_mode = #tpu.pipeline_mode<synchronous>, transform_indices = @transform_1, window_bounds = array<i64: 1, 32>}, {pipeline_mode = #tpu.pipeline_mode<synchronous>, transform_indices = @transform_2, window_bounds = array<i64: 1, 32>}, {transform_indices = @transform_3, window_bounds = array<i64: 32, 128>}, {transform_indices = @transform_4, window_bounds = array<i64: 1, 128>}, {transform_indices = @transform_5, window_bounds = array<i64: 128, 32>}, {pipeline_mode = #tpu.pipeline_mode<synchronous>, transform_indices = @transform_6, window_bounds = array<i64: 1, 32>}, {transform_indices = @transform_7, window_bounds = array<i64: 64, 32>}]} {
    %c0_i32 = arith.constant 0 : i32
    %0 = arith.cmpi eq, %arg1, %c0_i32 : i32
    %1 = arith.extui %0 : i1 to i32
    %c0_i32_0 = arith.constant 0 : i32
    %2 = arith.cmpi ne, %1, %c0_i32_0 : i32
    scf.if %2 {
      %c0_17 = arith.constant 0 : index
      %c0_18 = arith.constant 0 : index
      %26 = vector.load %arg2[%c0_17, %c0_18] : memref<64x32xbf16, #tpu.memory_space<vmem>>, vector<64x32xbf16>
      %27 = arith.extf %26 : vector<64x32xbf16> to vector<64x32xf32>
      %cst_19 = arith.constant dense<0.000000e+00> : vector<64xf32>
      %28 = vector.multi_reduction <add>, %27, %cst_19 [1] : vector<64x32xf32> to vector<64xf32>
      %29 = vector.shape_cast %28 : vector<64xf32> to vector<64x1xf32>
      %cst_20 = arith.constant 3.200000e+01 : f32
      %30 = vector.broadcast %cst_20 : f32 to vector<64x1xf32>
      %31 = arith.divf %29, %30 : vector<64x1xf32>
      %32 = vector.broadcast %31 : vector<64x1xf32> to vector<64x32xf32>
      %33 = arith.subf %27, %32 : vector<64x32xf32>
      %34 = arith.mulf %33, %33 : vector<64x32xf32>
      %cst_21 = arith.constant dense<0.000000e+00> : vector<64xf32>
      %35 = vector.multi_reduction <add>, %34, %cst_21 [1] : vector<64x32xf32> to vector<64xf32>
      %36 = vector.shape_cast %35 : vector<64xf32> to vector<64x1xf32>
      %cst_22 = arith.constant 3.200000e+01 : f32
      %37 = vector.broadcast %cst_22 : f32 to vector<64x1xf32>
      %38 = arith.divf %36, %37 : vector<64x1xf32>
      %39 = vector.broadcast %31 : vector<64x1xf32> to vector<64x32xf32>
      %40 = arith.subf %27, %39 : vector<64x32xf32>
      %cst_23 = arith.constant 9.99999974E-6 : f32
      %41 = vector.broadcast %cst_23 : f32 to vector<64x1xf32>
      %42 = arith.addf %38, %41 : vector<64x1xf32>
      %43 = math.rsqrt %42 : vector<64x1xf32>
      %44 = vector.broadcast %43 : vector<64x1xf32> to vector<64x32xf32>
      %45 = arith.mulf %40, %44 : vector<64x32xf32>
      %c0_24 = arith.constant 0 : index
      %c0_25 = arith.constant 0 : index
      %46 = vector.load %arg3[%c0_24, %c0_25] : memref<1x32xf32, #tpu.memory_space<vmem>>, vector<1x32xf32>
      %47 = vector.broadcast %46 : vector<1x32xf32> to vector<64x32xf32>
      %48 = arith.mulf %45, %47 : vector<64x32xf32>
      %c0_26 = arith.constant 0 : index
      %c0_27 = arith.constant 0 : index
      %49 = vector.load %arg4[%c0_26, %c0_27] : memref<1x32xf32, #tpu.memory_space<vmem>>, vector<1x32xf32>
      %50 = vector.broadcast %49 : vector<1x32xf32> to vector<64x32xf32>
      %51 = arith.addf %48, %50 : vector<64x32xf32>
      %52 = arith.truncf %51 : vector<64x32xf32> to vector<64x32xbf16>
      %c0_28 = arith.constant 0 : index
      %c0_29 = arith.constant 0 : index
      %53 = vector.load %arg10[%c0_28, %c0_29] : memref<64x32xbf16, #tpu.memory_space<vmem>>, vector<64x32xbf16>
      tpu.vector_store %arg10[%c0_28, %c0_29], %52 {strides = array<i32>} : memref<64x32xbf16, #tpu.memory_space<vmem>>, vector<64x32xbf16>,
      %cst_30 = arith.constant 0.000000e+00 : f32
      %54 = vector.broadcast %cst_30 : f32 to vector<64x32xf32>
      %c0_31 = arith.constant 0 : index
      %c0_32 = arith.constant 0 : index
      %55 = vector.load %arg11[%c0_31, %c0_32] : memref<64x32xf32, #tpu.memory_space<vmem>>, vector<64x32xf32>
      tpu.vector_store %arg11[%c0_31, %c0_32], %54 {strides = array<i32>} : memref<64x32xf32, #tpu.memory_space<vmem>>, vector<64x32xf32>,
    } else {
    }
    %c0 = arith.constant 0 : index
    %c0_1 = arith.constant 0 : index
    %3 = vector.load %arg10[%c0, %c0_1] : memref<64x32xbf16, #tpu.memory_space<vmem>>, vector<64x32xbf16>
    %c0_2 = arith.constant 0 : index
    %c0_3 = arith.constant 0 : index
    %4 = vector.load %arg5[%c0_2, %c0_3] : memref<32x128xbf16, #tpu.memory_space<vmem>>, vector<32x128xbf16>
    %cst = arith.constant dense<0.000000e+00> : vector<64x128xf32>
    %5 = tpu.matmul %3, %4, %cst {dimension_numbers = #tpu.dot_dimension_numbers<[1], [0], [0], [1], [0, 0, 1, 1], [], []>} : vector<64x32xbf16>, vector<32x128xbf16>, vector<64x128xf32> -> vector<64x128xf32>
    %c0_4 = arith.constant 0 : index
    %c0_5 = arith.constant 0 : index
    %6 = vector.load %arg6[%c0_4, %c0_5] : memref<1x128xf32, #tpu.memory_space<vmem>>, vector<1x128xf32>
    %7 = vector.broadcast %6 : vector<1x128xf32> to vector<64x128xf32>
    %8 = arith.addf %5, %7 : vector<64x128xf32>
    %cst_6 = arith.constant 1.702000e+00 : f32
    %9 = vector.broadcast %cst_6 : f32 to vector<64x128xf32>
    %10 = arith.mulf %9, %8 : vector<64x128xf32>
    %11 = arith.negf %10 : vector<64x128xf32>
    %12 = math.exp %11 : vector<64x128xf32>
    %cst_7 = arith.constant 1.000000e+00 : f32
    %13 = vector.broadcast %cst_7 : f32 to vector<64x128xf32>
    %14 = arith.addf %13, %12 : vector<64x128xf32>
    %15 = arith.divf %13, %14 : vector<64x128xf32>
    %16 = arith.mulf %8, %15 : vector<64x128xf32>
    %c0_8 = arith.constant 0 : index
    %c0_9 = arith.constant 0 : index
    %17 = vector.load %arg11[%c0_8, %c0_9] : memref<64x32xf32, #tpu.memory_space<vmem>>, vector<64x32xf32>
    %18 = arith.truncf %16 : vector<64x128xf32> to vector<64x128xbf16>
    %c0_10 = arith.constant 0 : index
    %c0_11 = arith.constant 0 : index
    %19 = vector.load %arg7[%c0_10, %c0_11] : memref<128x32xbf16, #tpu.memory_space<vmem>>, vector<128x32xbf16>
    %cst_12 = arith.constant dense<0.000000e+00> : vector<64x32xf32>
    %20 = tpu.matmul %18, %19, %cst_12 {dimension_numbers = #tpu.dot_dimension_numbers<[1], [0], [0], [1], [0, 0, 1, 1], [], []>} : vector<64x128xbf16>, vector<128x32xbf16>, vector<64x32xf32> -> vector<64x32xf32>
    %21 = arith.addf %17, %20 : vector<64x32xf32>
    %c0_13 = arith.constant 0 : index
    %c0_14 = arith.constant 0 : index
    %22 = vector.load %arg11[%c0_13, %c0_14] : memref<64x32xf32, #tpu.memory_space<vmem>>, vector<64x32xf32>
    tpu.vector_store %arg11[%c0_13, %c0_14], %21 {strides = array<i32>} : memref<64x32xf32, #tpu.memory_space<vmem>>, vector<64x32xf32>,
    %c0_i32_15 = arith.constant 0 : i32
    %23 = arith.cmpi eq, %arg1, %c0_i32_15 : i32
    %24 = arith.extui %23 : i1 to i32
    %c0_i32_16 = arith.constant 0 : i32
    %25 = arith.cmpi ne, %24, %c0_i32_16 : i32
    scf.if %25 {
      %c0_17 = arith.constant 0 : index
      %c0_18 = arith.constant 0 : index
      %26 = vector.load %arg2[%c0_17, %c0_18] : memref<64x32xbf16, #tpu.memory_space<vmem>>, vector<64x32xbf16>
      %27 = arith.extf %26 : vector<64x32xbf16> to vector<64x32xf32>
      %c0_19 = arith.constant 0 : index
      %c0_20 = arith.constant 0 : index
      %28 = vector.load %arg11[%c0_19, %c0_20] : memref<64x32xf32, #tpu.memory_space<vmem>>, vector<64x32xf32>
      %29 = arith.addf %27, %28 : vector<64x32xf32>
      %c0_21 = arith.constant 0 : index
      %c0_22 = arith.constant 0 : index
      %30 = vector.load %arg8[%c0_21, %c0_22] : memref<1x32xf32, #tpu.memory_space<vmem>>, vector<1x32xf32>
      %31 = vector.broadcast %30 : vector<1x32xf32> to vector<64x32xf32>
      %32 = arith.addf %29, %31 : vector<64x32xf32>
      %33 = arith.truncf %32 : vector<64x32xf32> to vector<64x32xbf16>
      %c0_23 = arith.constant 0 : index
      %c0_24 = arith.constant 0 : index
      %34 = vector.load %arg9[%c0_23, %c0_24] : memref<64x32xbf16, #tpu.memory_space<vmem>>, vector<64x32xbf16>
      tpu.vector_store %arg9[%c0_23, %c0_24], %33 {strides = array<i32>} : memref<64x32xbf16, #tpu.memory_space<vmem>>, vector<64x32xbf16>,
    } else {
    }
    return
  }
  func.func @transform_0(%arg0: i32, %arg1: i32) -> (i32, i32) {
    %c0_i32 = arith.constant 0 : i32
    %c0_i32_0 = arith.constant 0 : i32
    return %arg0, %c0_i32 : i32, i32
  }
  func.func @transform_1(%arg0: i32, %arg1: i32) -> (i32, i32) {
    %c0_i32 = arith.constant 0 : i32
    %c0_i32_0 = arith.constant 0 : i32
    %c0_i32_1 = arith.constant 0 : i32
    return %c0_i32, %c0_i32_0 : i32, i32
  }
  func.func @transform_2(%arg0: i32, %arg1: i32) -> (i32, i32) {
    %c0_i32 = arith.constant 0 : i32
    %c0_i32_0 = arith.constant 0 : i32
    %c0_i32_1 = arith.constant 0 : i32
    return %c0_i32, %c0_i32_0 : i32, i32
  }
  func.func @transform_3(%arg0: i32, %arg1: i32) -> (i32, i32) {
    %c0_i32 = arith.constant 0 : i32
    %c0_i32_0 = arith.constant 0 : i32
    return %c0_i32, %arg1 : i32, i32
  }
  func.func @transform_4(%arg0: i32, %arg1: i32) -> (i32, i32) {
    %c0_i32 = arith.constant 0 : i32
    %c0_i32_0 = arith.constant 0 : i32
    return %c0_i32, %arg1 : i32, i32
  }
  func.func @transform_5(%arg0: i32, %arg1: i32) -> (i32, i32) {
    %c0_i32 = arith.constant 0 : i32
    %c0_i32_0 = arith.constant 0 : i32
    return %arg1, %c0_i32 : i32, i32
  }
  func.func @transform_6(%arg0: i32, %arg1: i32) -> (i32, i32) {
    %c0_i32 = arith.constant 0 : i32
    %c0_i32_0 = arith.constant 0 : i32
    %c0_i32_1 = arith.constant 0 : i32
    return %c0_i32, %c0_i32_0 : i32, i32
  }
  func.func @transform_7(%arg0: i32, %arg1: i32) -> (i32, i32) {
    %c0_i32 = arith.constant 0 : i32
    %c0_i32_0 = arith.constant 0 : i32
    return %arg0, %c0_i32 : i32, i32
  }
}

</mosaic_0001>

<llo_original>
// kernel: vision_transformer_forward.14
$region0: #{vision_transformer_forward.14}
  #allocation0 [shape = 'u32[]', space=smem, size = 0x4, offset = 0x4, fixed_abs, tag = 'smem constant byte address 0x4 - core index']
  #allocation1 [shape = 'u32[72,128]{1,0:T(1,128)}', space=vmem, size = 0x9000, scoped, tag = 'internal scratch']
  %s0 = inlined_call_operand.vmem [shape: f32[32,32], index: 0, kind: input, shape index: {}]
  %s1 = inlined_call_operand.vmem [shape: f32[1,32], index: 1, kind: input, shape index: {}]
  %s2 = inlined_call_operand.vmem [shape: f32[1,32], index: 2, kind: input, shape index: {}]
  %s3 = inlined_call_operand.vmem [shape: bf16[32,32], index: 3, kind: output, shape index: {}]
  %s4 = sld [smem:[#allocation0]]
  $region22: #{vision_transformer_forward.14} parent=0
    _
  %s6 = ssub.s32 1, %s4
  %s7 = scalar_select 0, %s6, %s4
  // Predicated region
  $region2: #{vision_transformer_forward.14} parent=0 // pred_check
    _
  $region3: #{vision_transformer_forward.14} parent=0 // pred_check_branch
    %9 = sbr.rel (0) target = $region5
  $region4: #{vision_transformer_forward.14} parent=0 // pred_region
    _
  $region5: #{vision_transformer_forward.14} parent=0 // pred_fallthru
    _
  // Predicated region
  $region6: #{vision_transformer_forward.14} parent=0 // pred_check
    _
  $region7: #{vision_transformer_forward.14} parent=0 // pred_check_branch
    %11 = sbr.rel (0) target = $region9
  $region8: #{vision_transformer_forward.14} parent=0 // pred_region
    _
  $region9: #{vision_transformer_forward.14} parent=0 // pred_fallthru
    _
  // Predicated region
  $region10: #{vision_transformer_forward.14} parent=0 // pred_check
    _
  $region11: #{vision_transformer_forward.14} parent=0 // pred_check_branch
    %13 = sbr.rel (0) target = $region13
  $region12: #{vision_transformer_forward.14} parent=0 // pred_region
    _
  $region13: #{vision_transformer_forward.14} parent=0 // pred_fallthru
    _
  %v14 = vld [vmem:[%s0] sm:$0xff]
  %v15 = vld [vmem:[%s0 + $0x8] sm:$0xff]
  %v16 = vld [vmem:[%s0 + $0x10] sm:$0xff]
  %v17 = vld [vmem:[%s0 + $0x18] sm:$0xff]
  %vm18 = vcmask 261120
  %v19 = vsel %vm18, %v14, 0.0
  %20 = vadd.xlane.f32.xlu0 %v19
  %v21 = vpop.xlane.xlu0 %20
  %v22 = vsel %vm18, %v15, 0.0
  %23 = vadd.xlane.f32.xlu0 %v22
  %v24 = vpop.xlane.xlu0 %23
  %v25 = vsel %vm18, %v16, 0.0
  %26 = vadd.xlane.f32.xlu0 %v25
  %v27 = vpop.xlane.xlu0 %26
  %v28 = vsel %vm18, %v17, 0.0
  %29 = vadd.xlane.f32.xlu0 %v28
  %v30 = vpop.xlane.xlu0 %29
  %v31 = vrcp.pop 32.0
  %v32 = vmul.f32 32.0, %v31
  %v33 = vsub.f32 1.0, %v32
  %v34 = vmul.f32 %v31, %v33
  %v35 = vadd.f32 %v31, %v34
  %vm36 = vweird.f32 %v31
  %v37 = vsel %vm36, %v31, %v35
  %v38 = vmul.f32 %v21, %v37
  %v39 = vmul.f32 %v24, %v37
  %v40 = vmul.f32 %v27, %v37
  %v41 = vmul.f32 %v30, %v37
  %v42 = vsub.f32 %v14, %v38
  %v43 = vsub.f32 %v15, %v39
  %v44 = vsub.f32 %v16, %v40
  %v45 = vsub.f32 %v17, %v41
  %v46 = vmul.f32 %v42, %v42
  %v47 = vmul.f32 %v43, %v43
  %v48 = vmul.f32 %v44, %v44
  %v49 = vmul.f32 %v45, %v45
  %v50 = vsel %vm18, %v46, 0.0
  %51 = vadd.xlane.f32.xlu0 %v50
  %v52 = vpop.xlane.xlu0 %51
  %v53 = vsel %vm18, %v47, 0.0
  %54 = vadd.xlane.f32.xlu0 %v53
  %v55 = vpop.xlane.xlu0 %54
  %v56 = vsel %vm18, %v48, 0.0
  %57 = vadd.xlane.f32.xlu0 %v56
  %v58 = vpop.xlane.xlu0 %57
  %v59 = vsel %vm18, %v49, 0.0
  %60 = vadd.xlane.f32.xlu0 %v59
  %v61 = vpop.xlane.xlu0 %60
  %v62 = vmul.f32 %v52, %v37
  %v63 = vmul.f32 %v55, %v37
  %v64 = vmul.f32 %v58, %v37
  %v65 = vmul.f32 %v61, %v37
  %v66 = vadd.f32 %v62, 1e-05
  %v67 = vadd.f32 %v63, 1e-05
  %v68 = vadd.f32 %v64, 1e-05
  %v69 = vadd.f32 %v65, 1e-05
  %v70 = vrsqrt.pop %v66
  %v71 = vmul.f32 %v70, %v66
  %v72 = vmul.f32 %v71, %v70
  %v73 = vmul.f32 0.5, %v72
  %v74 = vsub.f32 1.5, %v73
  %v75 = vmul.f32 %v70, %v74
  %vm76 = vweird.f32 %v66
  %vm77 = vweird.f32 %v70
  %vm78 = vmor %vm76, %vm77
  %v79 = vsel %vm78, %v70, %v75
  %v80 = vrsqrt.pop %v67
  %v81 = vmul.f32 %v80, %v67
  %v82 = vmul.f32 %v81, %v80
  %v83 = vmul.f32 0.5, %v82
  %v84 = vsub.f32 1.5, %v83
  %v85 = vmul.f32 %v80, %v84
  %vm86 = vweird.f32 %v67
  %vm87 = vweird.f32 %v80
  %vm88 = vmor %vm86, %vm87
  %v89 = vsel %vm88, %v80, %v85
  %v90 = vrsqrt.pop %v68
  %v91 = vmul.f32 %v90, %v68
  %v92 = vmul.f32 %v91, %v90
  %v93 = vmul.f32 0.5, %v92
  %v94 = vsub.f32 1.5, %v93
  %v95 = vmul.f32 %v90, %v94
  %vm96 = vweird.f32 %v68
  %vm97 = vweird.f32 %v90
  %vm98 = vmor %vm96, %vm97
  %v99 = vsel %vm98, %v90, %v95
  %v100 = vrsqrt.pop %v69
  %v101 = vmul.f32 %v100, %v69
  %v102 = vmul.f32 %v101, %v100
  %v103 = vmul.f32 0.5, %v102
  %v104 = vsub.f32 1.5, %v103
  %v105 = vmul.f32 %v100, %v104
  %vm106 = vweird.f32 %v69
  %vm107 = vweird.f32 %v100
  %vm108 = vmor %vm106, %vm107
  %v109 = vsel %vm108, %v100, %v105
  %v110 = vmul.f32 %v42, %v79
  %v111 = vmul.f32 %v43, %v89
  %v112 = vmul.f32 %v44, %v99
  %v113 = vmul.f32 %v45, %v109
  %v114 = vld [vmem:[%s1] sm:$0x1]
  %v116 = vperm.slane %v114, 0
  %v118 = vmul.f32 %v110, %v116
  %v119 = vmul.f32 %v111, %v116
  %v120 = vmul.f32 %v112, %v116
  %v121 = vmul.f32 %v113, %v116
  %v122 = vld [vmem:[%s2] sm:$0x1]
  %v124 = vperm.slane %v122, 0
  %v126 = vadd.f32 %v118, %v124
  %v127 = vadd.f32 %v119, %v124
  %v128 = vadd.f32 %v120, %v124
  %v129 = vadd.f32 %v121, %v124
  %v130 = vpack.c.bf16 %v126, %v126
  %v131 = vpack.c.bf16 %v127, %v127
  %v132 = vpack.c.bf16 %v128, %v128
  %v133 = vpack.c.bf16 %v129, %v129
  %vm134 = vcmask 257024
  %135 = vst.msk [vmem:[%s3] sm:$0xf] %vm134, %v130
  %136 = vst.msk [vmem:[%s3 + $0x4] sm:$0xf] %vm134, %v131
  %137 = vst.msk [vmem:[%s3 + $0x8] sm:$0xf] %vm134, %v132
  %138 = vst.msk [vmem:[%s3 + $0xc] sm:$0xf] %vm134, %v133
  // Predicated region
  $region14: #{vision_transformer_forward.14} parent=0 // pred_check
    _
  $region15: #{vision_transformer_forward.14} parent=0 // pred_check_branch
    %140 = sbr.rel (0) target = $region17
  $region16: #{vision_transformer_forward.14} parent=0 // pred_region
    _
  $region17: #{vision_transformer_forward.14} parent=0 // pred_fallthru
    _
  // Predicated region
  $region18: #{vision_transformer_forward.14} parent=0 // pred_check
    _
  $region19: #{vision_transformer_forward.14} parent=0 // pred_check_branch
    %142 = sbr.rel (0) target = $region21
  $region20: #{vision_transformer_forward.14} parent=0 // pred_region
    _
  $region21: #{vision_transformer_forward.14} parent=0 // pred_fallthru
    _

// kernel: vision_transformer_forward.17
$region0: #{vision_transformer_forward.17}
  #allocation0 [shape = 'u32[]', space=smem, size = 0x4, offset = 0x4, fixed_abs, tag = 'smem constant byte address 0x4 - core index']
  #allocation1 [shape = 'u32[72,128]{1,0:T(1,128)}', space=vmem, size = 0x9000, scoped, tag = 'internal scratch']
  %s0 = inlined_call_operand.vmem [shape: bf16[32,32], index: 0, kind: input, shape index: {}]
  %s1 = inlined_call_operand.vmem [shape: f32[1,32], index: 1, kind: input, shape index: {}]
  %s2 = inlined_call_operand.vmem [shape: f32[1,32], index: 2, kind: input, shape index: {}]
  %s3 = inlined_call_operand.vmem [shape: bf16[32,32], index: 3, kind: input, shape index: {}]
  %s4 = inlined_call_operand.vmem [shape: f32[1,32], index: 4, kind: input, shape index: {}]
  %s5 = inlined_call_operand.vmem [shape: bf16[32,32], index: 5, kind: output, shape index: {}]
  %s6 = sld [smem:[#allocation0]]
  $region30: #{vision_transformer_forward.17} parent=0
    _
  %s8 = ssub.s32 1, %s6
  %s9 = scalar_select 0, %s8, %s6
  // Predicated region
  $region2: #{vision_transformer_forward.17} parent=0 // pred_check
    _
  $region3: #{vision_transformer_forward.17} parent=0 // pred_check_branch
    %11 = sbr.rel (0) target = $region5
  $region4: #{vision_transformer_forward.17} parent=0 // pred_region
    _
  $region5: #{vision_transformer_forward.17} parent=0 // pred_fallthru
    _
  // Predicated region
  $region6: #{vision_transformer_forward.17} parent=0 // pred_check
    _
  $region7: #{vision_transformer_forward.17} parent=0 // pred_check_branch
    %13 = sbr.rel (0) target = $region9
  $region8: #{vision_transformer_forward.17} parent=0 // pred_region
    _
  $region9: #{vision_transformer_forward.17} parent=0 // pred_fallthru
    _
  // Predicated region
  $region10: #{vision_transformer_forward.17} parent=0 // pred_check
    _
  $region11: #{vision_transformer_forward.17} parent=0 // pred_check_branch
    %15 = sbr.rel (0) target = $region13
  $region12: #{vision_transformer_forward.17} parent=0 // pred_region
    _
  $region13: #{vision_transformer_forward.17} parent=0 // pred_fallthru
    _
  // Predicated region
  $region14: #{vision_transformer_forward.17} parent=0 // pred_check
    _
  $region15: #{vision_transformer_forward.17} parent=0 // pred_check_branch
    %17 = sbr.rel (0) target = $region17
  $region16: #{vision_transformer_forward.17} parent=0 // pred_region
    _
  $region17: #{vision_transformer_forward.17} parent=0 // pred_fallthru
    _
  // Predicated region
  $region18: #{vision_transformer_forward.17} parent=0 // pred_check
    _
  $region19: #{vision_transformer_forward.17} parent=0 // pred_check_branch
    %19 = sbr.rel (0) target = $region21
  $region20: #{vision_transformer_forward.17} parent=0 // pred_region
    _
  $region21: #{vision_transformer_forward.17} parent=0 // pred_fallthru
    _
  %v21 = vld [vmem:[%s0] sm:$0xf]
  %v22 = vld [vmem:[%s0 + $0x4] sm:$0xf]
  %v23 = vld [vmem:[%s0 + $0x8] sm:$0xf]
  %v24 = vld [vmem:[%s0 + $0xc] sm:$0xf]
  %v25 = vunpack.c.l.bf16 %v21
  %v26 = vunpack.c.l.bf16 %v22
  %v27 = vunpack.c.l.bf16 %v23
  %v28 = vunpack.c.l.bf16 %v24
  %vm29 = vcmask 261120
  %v30 = vsel %vm29, %v25, 0.0
  %31 = vadd.xlane.f32.xlu0 %v30
  %v32 = vpop.xlane.xlu0 %31
  %v33 = vsel %vm29, %v26, 0.0
  %34 = vadd.xlane.f32.xlu0 %v33
  %v35 = vpop.xlane.xlu0 %34
  %v36 = vsel %vm29, %v27, 0.0
  %37 = vadd.xlane.f32.xlu0 %v36
  %v38 = vpop.xlane.xlu0 %37
  %v39 = vsel %vm29, %v28, 0.0
  %40 = vadd.xlane.f32.xlu0 %v39
  %v41 = vpop.xlane.xlu0 %40
  %v42 = vrcp.pop 32.0
  %v43 = vmul.f32 32.0, %v42
  %v44 = vsub.f32 1.0, %v43
  %v45 = vmul.f32 %v42, %v44
  %v46 = vadd.f32 %v42, %v45
  %vm47 = vweird.f32 %v42
  %v48 = vsel %vm47, %v42, %v46
  %v49 = vmul.f32 %v32, %v48
  %v50 = vmul.f32 %v35, %v48
  %v51 = vmul.f32 %v38, %v48
  %v52 = vmul.f32 %v41, %v48
  %v53 = vsub.f32 %v25, %v49
  %v54 = vsub.f32 %v26, %v50
  %v55 = vsub.f32 %v27, %v51
  %v56 = vsub.f32 %v28, %v52
  %v57 = vmul.f32 %v53, %v53
  %v58 = vmul.f32 %v54, %v54
  %v59 = vmul.f32 %v55, %v55
  %v60 = vmul.f32 %v56, %v56
  %v61 = vsel %vm29, %v57, 0.0
  %62 = vadd.xlane.f32.xlu0 %v61
  %v63 = vpop.xlane.xlu0 %62
  %v64 = vsel %vm29, %v58, 0.0
  %65 = vadd.xlane.f32.xlu0 %v64
  %v66 = vpop.xlane.xlu0 %65
  %v67 = vsel %vm29, %v59, 0.0
  %68 = vadd.xlane.f32.xlu0 %v67
  %v69 = vpop.xlane.xlu0 %68
  %v70 = vsel %vm29, %v60, 0.0
  %71 = vadd.xlane.f32.xlu0 %v70
  %v72 = vpop.xlane.xlu0 %71
  %v73 = vmul.f32 %v63, %v48
  %v74 = vmul.f32 %v66, %v48
  %v75 = vmul.f32 %v69, %v48
  %v76 = vmul.f32 %v72, %v48
  %v77 = vadd.f32 %v73, 1e-05
  %v78 = vadd.f32 %v74, 1e-05
  %v79 = vadd.f32 %v75, 1e-05
  %v80 = vadd.f32 %v76, 1e-05
  %v81 = vrsqrt.pop %v77
  %v82 = vmul.f32 %v81, %v77
  %v83 = vmul.f32 %v82, %v81
  %v84 = vmul.f32 0.5, %v83
  %v85 = vsub.f32 1.5, %v84
  %v86 = vmul.f32 %v81, %v85
  %vm87 = vweird.f32 %v77
  %vm88 = vweird.f32 %v81
  %vm89 = vmor %vm87, %vm88
  %v90 = vsel %vm89, %v81, %v86
  %v91 = vrsqrt.pop %v78
  %v92 = vmul.f32 %v91, %v78
  %v93 = vmul.f32 %v92, %v91
  %v94 = vmul.f32 0.5, %v93
  %v95 = vsub.f32 1.5, %v94
  %v96 = vmul.f32 %v91, %v95
  %vm97 = vweird.f32 %v78
  %vm98 = vweird.f32 %v91
  %vm99 = vmor %vm97, %vm98
  %v100 = vsel %vm99, %v91, %v96
  %v101 = vrsqrt.pop %v79
  %v102 = vmul.f32 %v101, %v79
  %v103 = vmul.f32 %v102, %v101
  %v104 = vmul.f32 0.5, %v103
  %v105 = vsub.f32 1.5, %v104
  %v106 = vmul.f32 %v101, %v105
  %vm107 = vweird.f32 %v79
  %vm108 = vweird.f32 %v101
  %vm109 = vmor %vm107, %vm108
  %v110 = vsel %vm109, %v101, %v106
  %v111 = vrsqrt.pop %v80
  %v112 = vmul.f32 %v111, %v80
  %v113 = vmul.f32 %v112, %v111
  %v114 = vmul.f32 0.5, %v113
  %v115 = vsub.f32 1.5, %v114
  %v116 = vmul.f32 %v111, %v115
  %vm117 = vweird.f32 %v80
  %vm118 = vweird.f32 %v111
  %vm119 = vmor %vm117, %vm118
  %v120 = vsel %vm119, %v111, %v116
  %v121 = vmul.f32 %v53, %v90
  %v122 = vmul.f32 %v54, %v100
  %v123 = vmul.f32 %v55, %v110
  %v124 = vmul.f32 %v56, %v120
  %v125 = vld [vmem:[%s1] sm:$0x1]
  %v127 = vperm.slane %v125, 0
  %v129 = vmul.f32 %v121, %v127
  %v130 = vmul.f32 %v122, %v127
  %v131 = vmul.f32 %v123, %v127
  %v132 = vmul.f32 %v124, %v127
  %v133 = vld [vmem:[%s2] sm:$0x1]
  %v135 = vperm.slane %v133, 0
  %v137 = vadd.f32 %v129, %v135
  %v138 = vadd.f32 %v130, %v135
  %v139 = vadd.f32 %v131, %v135
  %v140 = vadd.f32 %v132, %v135
  %v141 = vpack.c.bf16 %v138, %v137
  %v142 = vpack.c.bf16 %v140, %v139
  %v143 = vld [vmem:[%s3] sm:$0xf]
  %v144 = vld [vmem:[%s3 + $0x4] sm:$0xf]
  %v145 = vld [vmem:[%s3 + $0x8] sm:$0xf]
  %v146 = vld [vmem:[%s3 + $0xc] sm:$0xf]
  %v147 = vld [vmem:[%s4] sm:$0x1]
  %v149 = vperm.slane %v147, 0
  %v155 = vunpack.c.l.b16 %v143
  %v156 = vunpack.c.l.b16 %v144
  %v157 = vunpack.c.l.b16 %v145
  %v158 = vunpack.c.l.b16 %v146
  %v159 = vpack.c.b16 %v156, %v155
  %v160 = vpack.c.b16 %v158, %v157
  %v164 = vsel %vm29, %v141, 0
  %v167 = vsel %vm29, %v142, 0
  %169 = vmatpush.bf16.msra.mxu0 0
  %170 = vmatpush.bf16.msra.mxu0 0
  %171 = vmatpush.bf16.msra.mxu0 0
  %172 = vmatpush.bf16.msra.mxu0 0
  %173 = vmatpush.bf16.msra.mxu0 0
  %174 = vmatpush.bf16.msra.mxu0 0
  %175 = vmatpush.bf16.msra.mxu0 %v160
  %176 = vmatpush.bf16.msra.mxu0 %v159
  %177 = vmatmul.bf16.gmra.mxu0 %v164
  %v178 = vpop.f32.mrf.mxu0
  %v179 = vadd.f32 %v149, %v178
  %v180 = vpop.f32.mrf.mxu0
  %v181 = vadd.f32 %v149, %v180
  %182 = vmatmul.bf16.gmra.mxu0 %v167
  %v183 = vpop.f32.mrf.mxu0
  %v184 = vadd.f32 %v149, %v183
  %v185 = vpop.f32.mrf.mxu0
  %v186 = vadd.f32 %v149, %v185
  %187 = vdwg.mxu0
  %v188 = vpack.c.bf16 %v179, %v179
  %v189 = vpack.c.bf16 %v181, %v181
  %v190 = vpack.c.bf16 %v184, %v184
  %v191 = vpack.c.bf16 %v186, %v186
  %vm192 = vcmask 257024
  %193 = vst.msk [vmem:[%s5] sm:$0xf] %vm192, %v188
  %194 = vst.msk [vmem:[%s5 + $0x4] sm:$0xf] %vm192, %v189
  %195 = vst.msk [vmem:[%s5 + $0x8] sm:$0xf] %vm192, %v190
  %196 = vst.msk [vmem:[%s5 + $0xc] sm:$0xf] %vm192, %v191
  // Predicated region
  $region22: #{vision_transformer_forward.17} parent=0 // pred_check
    _
  $region23: #{vision_transformer_forward.17} parent=0 // pred_check_branch
    %198 = sbr.rel (0) target = $region25
  $region24: #{vision_transformer_forward.17} parent=0 // pred_region
    _
  $region25: #{vision_transformer_forward.17} parent=0 // pred_fallthru
    _
  // Predicated region
  $region26: #{vision_transformer_forward.17} parent=0 // pred_check
    _
  $region27: #{vision_transformer_forward.17} parent=0 // pred_check_branch
    %200 = sbr.rel (0) target = $region29
  $region28: #{vision_transformer_forward.17} parent=0 // pred_region
    _
  $region29: #{vision_transformer_forward.17} parent=0 // pred_fallthru
    _

// kernel: vision_transformer_forward.13
$region0: #{vision_transformer_forward.13}
  #allocation0 [shape = 'u32[]', space=smem, size = 0x4, offset = 0x4, fixed_abs, tag = 'smem constant byte address 0x4 - core index']
  #allocation1 [shape = 'u32[72,128]{1,0:T(1,128)}', space=vmem, size = 0x9000, scoped, tag = 'internal scratch']
  %s0 = inlined_call_operand.vmem [shape: bf16[32,128], index: 0, kind: input, shape index: {}]
  %s1 = inlined_call_operand.vmem [shape: bf16[128,32], index: 1, kind: input, shape index: {}]
  %s2 = inlined_call_operand.vmem [shape: bf16[32,32], index: 2, kind: output, shape index: {}]
  %s3 = sld [smem:[#allocation0]]
  $region18: #{vision_transformer_forward.13} parent=0
    _
  %s5 = ssub.s32 1, %s3
  %s6 = scalar_select 0, %s5, %s3
  // Predicated region
  $region2: #{vision_transformer_forward.13} parent=0 // pred_check
    _
  $region3: #{vision_transformer_forward.13} parent=0 // pred_check_branch
    %8 = sbr.rel (0) target = $region5
  $region4: #{vision_transformer_forward.13} parent=0 // pred_region
    _
  $region5: #{vision_transformer_forward.13} parent=0 // pred_fallthru
    _
  // Predicated region
  $region6: #{vision_transformer_forward.13} parent=0 // pred_check
    _
  $region7: #{vision_transformer_forward.13} parent=0 // pred_check_branch
    %10 = sbr.rel (0) target = $region9
  $region8: #{vision_transformer_forward.13} parent=0 // pred_region
    _
  $region9: #{vision_transformer_forward.13} parent=0 // pred_fallthru
    _
  %v11 = vld [vmem:[%s0] sm:$0xf]
  %v12 = vld [vmem:[%s0 + $0x4] sm:$0xf]
  %v13 = vld [vmem:[%s0 + $0x8] sm:$0xf]
  %v14 = vld [vmem:[%s0 + $0xc] sm:$0xf]
  %v15 = vld [vmem:[%s1] sm:$0xf]
  %v16 = vld [vmem:[%s1 + $0x4] sm:$0xf]
  %v17 = vld [vmem:[%s1 + $0x8] sm:$0xf]
  %v18 = vld [vmem:[%s1 + $0xc] sm:$0xf]
  %v19 = vld [vmem:[%s1 + $0x10] sm:$0xf]
  %v20 = vld [vmem:[%s1 + $0x14] sm:$0xf]
  %v21 = vld [vmem:[%s1 + $0x18] sm:$0xf]
  %v22 = vld [vmem:[%s1 + $0x1c] sm:$0xf]
  %v23 = vld [vmem:[%s1 + $0x20] sm:$0xf]
  %v24 = vld [vmem:[%s1 + $0x24] sm:$0xf]
  %v25 = vld [vmem:[%s1 + $0x28] sm:$0xf]
  %v26 = vld [vmem:[%s1 + $0x2c] sm:$0xf]
  %v27 = vld [vmem:[%s1 + $0x30] sm:$0xf]
  %v28 = vld [vmem:[%s1 + $0x34] sm:$0xf]
  %v29 = vld [vmem:[%s1 + $0x38] sm:$0xf]
  %v30 = vld [vmem:[%s1 + $0x3c] sm:$0xf]
  %v35 = vunpack.c.l.b16 %v11
  %v36 = vunpack.c.l.b16 %v12
  %v37 = vunpack.c.l.b16 %v13
  %v38 = vunpack.c.l.b16 %v14
  %v39 = vpack.c.b16 %v36, %v35
  %v40 = vpack.c.b16 %v38, %v37
  %v59 = vunpack.c.l.b16 %v15
  %v60 = vunpack.c.l.b16 %v16
  %v61 = vunpack.c.l.b16 %v17
  %v62 = vunpack.c.l.b16 %v18
  %v63 = vunpack.c.l.b16 %v19
  %v64 = vunpack.c.l.b16 %v20
  %v65 = vunpack.c.l.b16 %v21
  %v66 = vunpack.c.l.b16 %v22
  %v67 = vunpack.c.l.b16 %v23
  %v68 = vunpack.c.l.b16 %v24
  %v69 = vunpack.c.l.b16 %v25
  %v70 = vunpack.c.l.b16 %v26
  %v71 = vunpack.c.l.b16 %v27
  %v72 = vunpack.c.l.b16 %v28
  %v73 = vunpack.c.l.b16 %v29
  %v74 = vunpack.c.l.b16 %v30
  %v75 = vpack.c.b16 %v60, %v59
  %v76 = vpack.c.b16 %v62, %v61
  %v77 = vpack.c.b16 %v64, %v63
  %v78 = vpack.c.b16 %v66, %v65
  %v79 = vpack.c.b16 %v68, %v67
  %v80 = vpack.c.b16 %v70, %v69
  %v81 = vpack.c.b16 %v72, %v71
  %v82 = vpack.c.b16 %v74, %v73
  %91 = vmatpush.bf16.msra.mxu0 %v82
  %92 = vmatpush.bf16.msra.mxu0 %v81
  %93 = vmatpush.bf16.msra.mxu0 %v80
  %94 = vmatpush.bf16.msra.mxu0 %v79
  %95 = vmatpush.bf16.msra.mxu0 %v78
  %96 = vmatpush.bf16.msra.mxu0 %v77
  %97 = vmatpush.bf16.msra.mxu0 %v76
  %98 = vmatpush.bf16.msra.mxu0 %v75
  %99 = vmatmul.bf16.gmra.mxu0 %v39
  %v100 = vpop.f32.mrf.mxu0
  %v101 = vadd.f32 0.0, %v100
  %v102 = vpop.f32.mrf.mxu0
  %v103 = vadd.f32 0.0, %v102
  %104 = vmatmul.bf16.gmra.mxu0 %v40
  %v105 = vpop.f32.mrf.mxu0
  %v106 = vadd.f32 0.0, %v105
  %v107 = vpop.f32.mrf.mxu0
  %v108 = vadd.f32 0.0, %v107
  %109 = vdwg.mxu0
  %v110 = vpack.c.bf16 %v101, %v101
  %v111 = vpack.c.bf16 %v103, %v103
  %v112 = vpack.c.bf16 %v106, %v106
  %v113 = vpack.c.bf16 %v108, %v108
  %vm114 = vcmask 257024
  %115 = vst.msk [vmem:[%s2] sm:$0xf] %vm114, %v110
  %116 = vst.msk [vmem:[%s2 + $0x4] sm:$0xf] %vm114, %v111
  %117 = vst.msk [vmem:[%s2 + $0x8] sm:$0xf] %vm114, %v112
  %118 = vst.msk [vmem:[%s2 + $0xc] sm:$0xf] %vm114, %v113
  // Predicated region
  $region10: #{vision_transformer_forward.13} parent=0 // pred_check
    _
  $region11: #{vision_transformer_forward.13} parent=0 // pred_check_branch
    %120 = sbr.rel (0) target = $region13
  $region12: #{vision_transformer_forward.13} parent=0 // pred_region
    _
  $region13: #{vision_transformer_forward.13} parent=0 // pred_fallthru
    _
  // Predicated region
  $region14: #{vision_transformer_forward.13} parent=0 // pred_check
    _
  $region15: #{vision_transformer_forward.13} parent=0 // pred_check_branch
    %122 = sbr.rel (0) target = $region17
  $region16: #{vision_transformer_forward.13} parent=0 // pred_region
    _
  $region17: #{vision_transformer_forward.13} parent=0 // pred_fallthru
    _

// kernel: vision_transformer_forward.15
$region0: #{vision_transformer_forward.15}
  #allocation0 [shape = 'u32[]', space=smem, size = 0x4, offset = 0x4, fixed_abs, tag = 'smem constant byte address 0x4 - core index']
  #allocation1 [shape = 'u32[72,128]{1,0:T(1,128)}', space=vmem, size = 0x9000, scoped, tag = 'internal scratch']
  %s0 = inlined_call_operand.vmem [shape: f32[64,32], index: 0, kind: input, shape index: {}]
  %s1 = inlined_call_operand.vmem [shape: f32[1,32], index: 1, kind: input, shape index: {}]
  %s2 = inlined_call_operand.vmem [shape: f32[1,32], index: 2, kind: input, shape index: {}]
  %s3 = inlined_call_operand.vmem [shape: bf16[64,32], index: 3, kind: output, shape index: {}]
  %s4 = sld [smem:[#allocation0]]
  $region22: #{vision_transformer_forward.15} parent=0
    _
  %s6 = ssub.s32 1, %s4
  %s7 = scalar_select 0, %s6, %s4
  // Predicated region
  $region2: #{vision_transformer_forward.15} parent=0 // pred_check
    _
  $region3: #{vision_transformer_forward.15} parent=0 // pred_check_branch
    %9 = sbr.rel (0) target = $region5
  $region4: #{vision_transformer_forward.15} parent=0 // pred_region
    _
  $region5: #{vision_transformer_forward.15} parent=0 // pred_fallthru
    _
  // Predicated region
  $region6: #{vision_transformer_forward.15} parent=0 // pred_check
    _
  $region7: #{vision_transformer_forward.15} parent=0 // pred_check_branch
    %11 = sbr.rel (0) target = $region9
  $region8: #{vision_transformer_forward.15} parent=0 // pred_region
    _
  $region9: #{vision_transformer_forward.15} parent=0 // pred_fallthru
    _
  // Predicated region
  $region10: #{vision_transformer_forward.15} parent=0 // pred_check
    _
  $region11: #{vision_transformer_forward.15} parent=0 // pred_check_branch
    %13 = sbr.rel (0) target = $region13
  $region12: #{vision_transformer_forward.15} parent=0 // pred_region
    _
  $region13: #{vision_transformer_forward.15} parent=0 // pred_fallthru
    _
  %v14 = vld [vmem:[%s0] sm:$0xff]
  %v15 = vld [vmem:[%s0 + $0x8] sm:$0xff]
  %v16 = vld [vmem:[%s0 + $0x10] sm:$0xff]
  %v17 = vld [vmem:[%s0 + $0x18] sm:$0xff]
  %v18 = vld [vmem:[%s0 + $0x20] sm:$0xff]
  %v19 = vld [vmem:[%s0 + $0x28] sm:$0xff]
  %v20 = vld [vmem:[%s0 + $0x30] sm:$0xff]
  %v21 = vld [vmem:[%s0 + $0x38] sm:$0xff]
  %vm22 = vcmask 261120
  %v23 = vsel %vm22, %v14, 0.0
  %24 = vadd.xlane.f32.xlu0 %v23
  %v25 = vpop.xlane.xlu0 %24
  %v26 = vsel %vm22, %v15, 0.0
  %27 = vadd.xlane.f32.xlu0 %v26
  %v28 = vpop.xlane.xlu0 %27
  %v29 = vsel %vm22, %v16, 0.0
  %30 = vadd.xlane.f32.xlu0 %v29
  %v31 = vpop.xlane.xlu0 %30
  %v32 = vsel %vm22, %v17, 0.0
  %33 = vadd.xlane.f32.xlu0 %v32
  %v34 = vpop.xlane.xlu0 %33
  %v35 = vsel %vm22, %v18, 0.0
  %36 = vadd.xlane.f32.xlu0 %v35
  %v37 = vpop.xlane.xlu0 %36
  %v38 = vsel %vm22, %v19, 0.0
  %39 = vadd.xlane.f32.xlu0 %v38
  %v40 = vpop.xlane.xlu0 %39
  %v41 = vsel %vm22, %v20, 0.0
  %42 = vadd.xlane.f32.xlu0 %v41
  %v43 = vpop.xlane.xlu0 %42
  %v44 = vsel %vm22, %v21, 0.0
  %45 = vadd.xlane.f32.xlu0 %v44
  %v46 = vpop.xlane.xlu0 %45
  %v47 = vrcp.pop 32.0
  %v48 = vmul.f32 32.0, %v47
  %v49 = vsub.f32 1.0, %v48
  %v50 = vmul.f32 %v47, %v49
  %v51 = vadd.f32 %v47, %v50
  %vm52 = vweird.f32 %v47
  %v53 = vsel %vm52, %v47, %v51
  %v54 = vmul.f32 %v25, %v53
  %v55 = vmul.f32 %v28, %v53
  %v56 = vmul.f32 %v31, %v53
  %v57 = vmul.f32 %v34, %v53
  %v58 = vmul.f32 %v37, %v53
  %v59 = vmul.f32 %v40, %v53
  %v60 = vmul.f32 %v43, %v53
  %v61 = vmul.f32 %v46, %v53
  %v62 = vsub.f32 %v14, %v54
  %v63 = vsub.f32 %v15, %v55
  %v64 = vsub.f32 %v16, %v56
  %v65 = vsub.f32 %v17, %v57
  %v66 = vsub.f32 %v18, %v58
  %v67 = vsub.f32 %v19, %v59
  %v68 = vsub.f32 %v20, %v60
  %v69 = vsub.f32 %v21, %v61
  %v70 = vmul.f32 %v62, %v62
  %v71 = vmul.f32 %v63, %v63
  %v72 = vmul.f32 %v64, %v64
  %v73 = vmul.f32 %v65, %v65
  %v74 = vmul.f32 %v66, %v66
  %v75 = vmul.f32 %v67, %v67
  %v76 = vmul.f32 %v68, %v68
  %v77 = vmul.f32 %v69, %v69
  %v78 = vsel %vm22, %v70, 0.0
  %79 = vadd.xlane.f32.xlu0 %v78
  %v80 = vpop.xlane.xlu0 %79
  %v81 = vsel %vm22, %v71, 0.0
  %82 = vadd.xlane.f32.xlu0 %v81
  %v83 = vpop.xlane.xlu0 %82
  %v84 = vsel %vm22, %v72, 0.0
  %85 = vadd.xlane.f32.xlu0 %v84
  %v86 = vpop.xlane.xlu0 %85
  %v87 = vsel %vm22, %v73, 0.0
  %88 = vadd.xlane.f32.xlu0 %v87
  %v89 = vpop.xlane.xlu0 %88
  %v90 = vsel %vm22, %v74, 0.0
  %91 = vadd.xlane.f32.xlu0 %v90
  %v92 = vpop.xlane.xlu0 %91
  %v93 = vsel %vm22, %v75, 0.0
  %94 = vadd.xlane.f32.xlu0 %v93
  %v95 = vpop.xlane.xlu0 %94
  %v96 = vsel %vm22, %v76, 0.0
  %97 = vadd.xlane.f32.xlu0 %v96
  %v98 = vpop.xlane.xlu0 %97
  %v99 = vsel %vm22, %v77, 0.0
  %100 = vadd.xlane.f32.xlu0 %v99
  %v101 = vpop.xlane.xlu0 %100
  %v102 = vmul.f32 %v80, %v53
  %v103 = vmul.f32 %v83, %v53
  %v104 = vmul.f32 %v86, %v53
  %v105 = vmul.f32 %v89, %v53
  %v106 = vmul.f32 %v92, %v53
  %v107 = vmul.f32 %v95, %v53
  %v108 = vmul.f32 %v98, %v53
  %v109 = vmul.f32 %v101, %v53
  %v110 = vadd.f32 %v102, 1e-05
  %v111 = vadd.f32 %v103, 1e-05
  %v112 = vadd.f32 %v104, 1e-05
  %v113 = vadd.f32 %v105, 1e-05
  %v114 = vadd.f32 %v106, 1e-05
  %v115 = vadd.f32 %v107, 1e-05
  %v116 = vadd.f32 %v108, 1e-05
  %v117 = vadd.f32 %v109, 1e-05
  %v118 = vrsqrt.pop %v110
  %v119 = vmul.f32 %v118, %v110
  %v120 = vmul.f32 %v119, %v118
  %v121 = vmul.f32 0.5, %v120
  %v122 = vsub.f32 1.5, %v121
  %v123 = vmul.f32 %v118, %v122
  %vm124 = vweird.f32 %v110
  %vm125 = vweird.f32 %v118
  %vm126 = vmor %vm124, %vm125
  %v127 = vsel %vm126, %v118, %v123
  %v128 = vrsqrt.pop %v111
  %v129 = vmul.f32 %v128, %v111
  %v130 = vmul.f32 %v129, %v128
  %v131 = vmul.f32 0.5, %v130
  %v132 = vsub.f32 1.5, %v131
  %v133 = vmul.f32 %v128, %v132
  %vm134 = vweird.f32 %v111
  %vm135 = vweird.f32 %v128
  %vm136 = vmor %vm134, %vm135
  %v137 = vsel %vm136, %v128, %v133
  %v138 = vrsqrt.pop %v112
  %v139 = vmul.f32 %v138, %v112
  %v140 = vmul.f32 %v139, %v138
  %v141 = vmul.f32 0.5, %v140
  %v142 = vsub.f32 1.5, %v141
  %v143 = vmul.f32 %v138, %v142
  %vm144 = vweird.f32 %v112
  %vm145 = vweird.f32 %v138
  %vm146 = vmor %vm144, %vm145
  %v147 = vsel %vm146, %v138, %v143
  %v148 = vrsqrt.pop %v113
  %v149 = vmul.f32 %v148, %v113
  %v150 = vmul.f32 %v149, %v148
  %v151 = vmul.f32 0.5, %v150
  %v152 = vsub.f32 1.5, %v151
  %v153 = vmul.f32 %v148, %v152
  %vm154 = vweird.f32 %v113
  %vm155 = vweird.f32 %v148
  %vm156 = vmor %vm154, %vm155
  %v157 = vsel %vm156, %v148, %v153
  %v158 = vrsqrt.pop %v114
  %v159 = vmul.f32 %v158, %v114
  %v160 = vmul.f32 %v159, %v158
  %v161 = vmul.f32 0.5, %v160
  %v162 = vsub.f32 1.5, %v161
  %v163 = vmul.f32 %v158, %v162
  %vm164 = vweird.f32 %v114
  %vm165 = vweird.f32 %v158
  %vm166 = vmor %vm164, %vm165
  %v167 = vsel %vm166, %v158, %v163
  %v168 = vrsqrt.pop %v115
  %v169 = vmul.f32 %v168, %v115
  %v170 = vmul.f32 %v169, %v168
  %v171 = vmul.f32 0.5, %v170
  %v172 = vsub.f32 1.5, %v171
  %v173 = vmul.f32 %v168, %v172
  %vm174 = vweird.f32 %v115
  %vm175 = vweird.f32 %v168
  %vm176 = vmor %vm174, %vm175
  %v177 = vsel %vm176, %v168, %v173
  %v178 = vrsqrt.pop %v116
  %v179 = vmul.f32 %v178, %v116
  %v180 = vmul.f32 %v179, %v178
  %v181 = vmul.f32 0.5, %v180
  %v182 = vsub.f32 1.5, %v181
  %v183 = vmul.f32 %v178, %v182
  %vm184 = vweird.f32 %v116
  %vm185 = vweird.f32 %v178
  %vm186 = vmor %vm184, %vm185
  %v187 = vsel %vm186, %v178, %v183
  %v188 = vrsqrt.pop %v117
  %v189 = vmul.f32 %v188, %v117
  %v190 = vmul.f32 %v189, %v188
  %v191 = vmul.f32 0.5, %v190
  %v192 = vsub.f32 1.5, %v191
  %v193 = vmul.f32 %v188, %v192
  %vm194 = vweird.f32 %v117
  %vm195 = vweird.f32 %v188
  %vm196 = vmor %vm194, %vm195
  %v197 = vsel %vm196, %v188, %v193
  %v198 = vmul.f32 %v62, %v127
  %v199 = vmul.f32 %v63, %v137
  %v200 = vmul.f32 %v64, %v147
  %v201 = vmul.f32 %v65, %v157
  %v202 = vmul.f32 %v66, %v167
  %v203 = vmul.f32 %v67, %v177
  %v204 = vmul.f32 %v68, %v187
  %v205 = vmul.f32 %v69, %v197
  %v206 = vld [vmem:[%s1] sm:$0x1]
  %v208 = vperm.slane %v206, 0
  %v210 = vmul.f32 %v198, %v208
  %v211 = vmul.f32 %v199, %v208
  %v212 = vmul.f32 %v200, %v208
  %v213 = vmul.f32 %v201, %v208
  %v214 = vmul.f32 %v202, %v208
  %v215 = vmul.f32 %v203, %v208
  %v216 = vmul.f32 %v204, %v208
  %v217 = vmul.f32 %v205, %v208
  %v218 = vld [vmem:[%s2] sm:$0x1]
  %v220 = vperm.slane %v218, 0
  %v222 = vadd.f32 %v210, %v220
  %v223 = vadd.f32 %v211, %v220
  %v224 = vadd.f32 %v212, %v220
  %v225 = vadd.f32 %v213, %v220
  %v226 = vadd.f32 %v214, %v220
  %v227 = vadd.f32 %v215, %v220
  %v228 = vadd.f32 %v216, %v220
  %v229 = vadd.f32 %v217, %v220
  %v230 = vpack.c.bf16 %v222, %v222
  %v231 = vpack.c.bf16 %v223, %v223
  %v232 = vpack.c.bf16 %v224, %v224
  %v233 = vpack.c.bf16 %v225, %v225
  %v234 = vpack.c.bf16 %v226, %v226
  %v235 = vpack.c.bf16 %v227, %v227
  %v236 = vpack.c.bf16 %v228, %v228
  %v237 = vpack.c.bf16 %v229, %v229
  %vm238 = vcmask 257024
  %239 = vst.msk [vmem:[%s3] sm:$0xf] %vm238, %v230
  %240 = vst.msk [vmem:[%s3 + $0x4] sm:$0xf] %vm238, %v231
  %241 = vst.msk [vmem:[%s3 + $0x8] sm:$0xf] %vm238, %v232
  %242 = vst.msk [vmem:[%s3 + $0xc] sm:$0xf] %vm238, %v233
  %243 = vst.msk [vmem:[%s3 + $0x10] sm:$0xf] %vm238, %v234
  %244 = vst.msk [vmem:[%s3 + $0x14] sm:$0xf] %vm238, %v235
  %245 = vst.msk [vmem:[%s3 + $0x18] sm:$0xf] %vm238, %v236
  %246 = vst.msk [vmem:[%s3 + $0x1c] sm:$0xf] %vm238, %v237
  // Predicated region
  $region14: #{vision_transformer_forward.15} parent=0 // pred_check
    _
  $region15: #{vision_transformer_forward.15} parent=0 // pred_check_branch
    %248 = sbr.rel (0) target = $region17
  $region16: #{vision_transformer_forward.15} parent=0 // pred_region
    _
  $region17: #{vision_transformer_forward.15} parent=0 // pred_fallthru
    _
  // Predicated region
  $region18: #{vision_transformer_forward.15} parent=0 // pred_check
    _
  $region19: #{vision_transformer_forward.15} parent=0 // pred_check_branch
    %250 = sbr.rel (0) target = $region21
  $region20: #{vision_transformer_forward.15} parent=0 // pred_region
    _
  $region21: #{vision_transformer_forward.15} parent=0 // pred_fallthru
    _

// kernel: vision_transformer_forward.16
$region0: #{vision_transformer_forward.16}
  #allocation0 [shape = 'u32[]', space=smem, size = 0x4, offset = 0x4, fixed_abs, tag = 'smem constant byte address 0x4 - core index']
  #allocation1 [shape = 'u32[72,128]{1,0:T(1,128)}', space=vmem, size = 0x9000, scoped, tag = 'internal scratch']
  %s0 = inlined_call_operand.vmem [shape: bf16[64,32], index: 0, kind: input, shape index: {}]
  %s1 = inlined_call_operand.vmem [shape: f32[1,32], index: 1, kind: input, shape index: {}]
  %s2 = inlined_call_operand.vmem [shape: f32[1,32], index: 2, kind: input, shape index: {}]
  %s3 = inlined_call_operand.vmem [shape: bf16[32,96], index: 3, kind: input, shape index: {}]
  %s4 = inlined_call_operand.vmem [shape: f32[1,96], index: 4, kind: input, shape index: {}]
  %s5 = inlined_call_operand.vmem [shape: bf16[64,96], index: 5, kind: output, shape index: {}]
  %s6 = sld [smem:[#allocation0]]
  $region30: #{vision_transformer_forward.16} parent=0
    _
  %s8 = ssub.s32 1, %s6
  %s9 = scalar_select 0, %s8, %s6
  // Predicated region
  $region2: #{vision_transformer_forward.16} parent=0 // pred_check
    _
  $region3: #{vision_transformer_forward.16} parent=0 // pred_check_branch
    %11 = sbr.rel (0) target = $region5
  $region4: #{vision_transformer_forward.16} parent=0 // pred_region
    _
  $region5: #{vision_transformer_forward.16} parent=0 // pred_fallthru
    _
  // Predicated region
  $region6: #{vision_transformer_forward.16} parent=0 // pred_check
    _
  $region7: #{vision_transformer_forward.16} parent=0 // pred_check_branch
    %13 = sbr.rel (0) target = $region9
  $region8: #{vision_transformer_forward.16} parent=0 // pred_region
    _
  $region9: #{vision_transformer_forward.16} parent=0 // pred_fallthru
    _
  // Predicated region
  $region10: #{vision_transformer_forward.16} parent=0 // pred_check
    _
  $region11: #{vision_transformer_forward.16} parent=0 // pred_check_branch
    %15 = sbr.rel (0) target = $region13
  $region12: #{vision_transformer_forward.16} parent=0 // pred_region
    _
  $region13: #{vision_transformer_forward.16} parent=0 // pred_fallthru
    _
  // Predicated region
  $region14: #{vision_transformer_forward.16} parent=0 // pred_check
    _
  $region15: #{vision_transformer_forward.16} parent=0 // pred_check_branch
    %17 = sbr.rel (0) target = $region17
  $region16: #{vision_transformer_forward.16} parent=0 // pred_region
    _
  $region17: #{vision_transformer_forward.16} parent=0 // pred_fallthru
    _
  // Predicated region
  $region18: #{vision_transformer_forward.16} parent=0 // pred_check
    _
  $region19: #{vision_transformer_forward.16} parent=0 // pred_check_branch
    %19 = sbr.rel (0) target = $region21
  $region20: #{vision_transformer_forward.16} parent=0 // pred_region
    _
  $region21: #{vision_transformer_forward.16} parent=0 // pred_fallthru
    _
  %v21 = vld [vmem:[%s0] sm:$0xf]
  %v22 = vld [vmem:[%s0 + $0x4] sm:$0xf]
  %v23 = vld [vmem:[%s0 + $0x8] sm:$0xf]
  %v24 = vld [vmem:[%s0 + $0xc] sm:$0xf]
  %v25 = vld [vmem:[%s0 + $0x10] sm:$0xf]
  %v26 = vld [vmem:[%s0 + $0x14] sm:$0xf]
  %v27 = vld [vmem:[%s0 + $0x18] sm:$0xf]
  %v28 = vld [vmem:[%s0 + $0x1c] sm:$0xf]
  %v29 = vunpack.c.l.bf16 %v21
  %v30 = vunpack.c.l.bf16 %v22
  %v31 = vunpack.c.l.bf16 %v23
  %v32 = vunpack.c.l.bf16 %v24
  %v33 = vunpack.c.l.bf16 %v25
  %v34 = vunpack.c.l.bf16 %v26
  %v35 = vunpack.c.l.bf16 %v27
  %v36 = vunpack.c.l.bf16 %v28
  %vm37 = vcmask 261120
  %v38 = vsel %vm37, %v29, 0.0
  %39 = vadd.xlane.f32.xlu0 %v38
  %v40 = vpop.xlane.xlu0 %39
  %v41 = vsel %vm37, %v30, 0.0
  %42 = vadd.xlane.f32.xlu0 %v41
  %v43 = vpop.xlane.xlu0 %42
  %v44 = vsel %vm37, %v31, 0.0
  %45 = vadd.xlane.f32.xlu0 %v44
  %v46 = vpop.xlane.xlu0 %45
  %v47 = vsel %vm37, %v32, 0.0
  %48 = vadd.xlane.f32.xlu0 %v47
  %v49 = vpop.xlane.xlu0 %48
  %v50 = vsel %vm37, %v33, 0.0
  %51 = vadd.xlane.f32.xlu0 %v50
  %v52 = vpop.xlane.xlu0 %51
  %v53 = vsel %vm37, %v34, 0.0
  %54 = vadd.xlane.f32.xlu0 %v53
  %v55 = vpop.xlane.xlu0 %54
  %v56 = vsel %vm37, %v35, 0.0
  %57 = vadd.xlane.f32.xlu0 %v56
  %v58 = vpop.xlane.xlu0 %57
  %v59 = vsel %vm37, %v36, 0.0
  %60 = vadd.xlane.f32.xlu0 %v59
  %v61 = vpop.xlane.xlu0 %60
  %v62 = vrcp.pop 32.0
  %v63 = vmul.f32 32.0, %v62
  %v64 = vsub.f32 1.0, %v63
  %v65 = vmul.f32 %v62, %v64
  %v66 = vadd.f32 %v62, %v65
  %vm67 = vweird.f32 %v62
  %v68 = vsel %vm67, %v62, %v66
  %v69 = vmul.f32 %v40, %v68
  %v70 = vmul.f32 %v43, %v68
  %v71 = vmul.f32 %v46, %v68
  %v72 = vmul.f32 %v49, %v68
  %v73 = vmul.f32 %v52, %v68
  %v74 = vmul.f32 %v55, %v68
  %v75 = vmul.f32 %v58, %v68
  %v76 = vmul.f32 %v61, %v68
  %v77 = vsub.f32 %v29, %v69
  %v78 = vsub.f32 %v30, %v70
  %v79 = vsub.f32 %v31, %v71
  %v80 = vsub.f32 %v32, %v72
  %v81 = vsub.f32 %v33, %v73
  %v82 = vsub.f32 %v34, %v74
  %v83 = vsub.f32 %v35, %v75
  %v84 = vsub.f32 %v36, %v76
  %v85 = vmul.f32 %v77, %v77
  %v86 = vmul.f32 %v78, %v78
  %v87 = vmul.f32 %v79, %v79
  %v88 = vmul.f32 %v80, %v80
  %v89 = vmul.f32 %v81, %v81
  %v90 = vmul.f32 %v82, %v82
  %v91 = vmul.f32 %v83, %v83
  %v92 = vmul.f32 %v84, %v84
  %v93 = vsel %vm37, %v85, 0.0
  %94 = vadd.xlane.f32.xlu0 %v93
  %v95 = vpop.xlane.xlu0 %94
  %v96 = vsel %vm37, %v86, 0.0
  %97 = vadd.xlane.f32.xlu0 %v96
  %v98 = vpop.xlane.xlu0 %97
  %v99 = vsel %vm37, %v87, 0.0
  %100 = vadd.xlane.f32.xlu0 %v99
  %v101 = vpop.xlane.xlu0 %100
  %v102 = vsel %vm37, %v88, 0.0
  %103 = vadd.xlane.f32.xlu0 %v102
  %v104 = vpop.xlane.xlu0 %103
  %v105 = vsel %vm37, %v89, 0.0
  %106 = vadd.xlane.f32.xlu0 %v105
  %v107 = vpop.xlane.xlu0 %106
  %v108 = vsel %vm37, %v90, 0.0
  %109 = vadd.xlane.f32.xlu0 %v108
  %v110 = vpop.xlane.xlu0 %109
  %v111 = vsel %vm37, %v91, 0.0
  %112 = vadd.xlane.f32.xlu0 %v111
  %v113 = vpop.xlane.xlu0 %112
  %v114 = vsel %vm37, %v92, 0.0
  %115 = vadd.xlane.f32.xlu0 %v114
  %v116 = vpop.xlane.xlu0 %115
  %v117 = vmul.f32 %v95, %v68
  %v118 = vmul.f32 %v98, %v68
  %v119 = vmul.f32 %v101, %v68
  %v120 = vmul.f32 %v104, %v68
  %v121 = vmul.f32 %v107, %v68
  %v122 = vmul.f32 %v110, %v68
  %v123 = vmul.f32 %v113, %v68
  %v124 = vmul.f32 %v116, %v68
  %v125 = vadd.f32 %v117, 1e-05
  %v126 = vadd.f32 %v118, 1e-05
  %v127 = vadd.f32 %v119, 1e-05
  %v128 = vadd.f32 %v120, 1e-05
  %v129 = vadd.f32 %v121, 1e-05
  %v130 = vadd.f32 %v122, 1e-05
  %v131 = vadd.f32 %v123, 1e-05
  %v132 = vadd.f32 %v124, 1e-05
  %v133 = vrsqrt.pop %v125
  %v134 = vmul.f32 %v133, %v125
  %v135 = vmul.f32 %v134, %v133
  %v136 = vmul.f32 0.5, %v135
  %v137 = vsub.f32 1.5, %v136
  %v138 = vmul.f32 %v133, %v137
  %vm139 = vweird.f32 %v125
  %vm140 = vweird.f32 %v133
  %vm141 = vmor %vm139, %vm140
  %v142 = vsel %vm141, %v133, %v138
  %v143 = vrsqrt.pop %v126
  %v144 = vmul.f32 %v143, %v126
  %v145 = vmul.f32 %v144, %v143
  %v146 = vmul.f32 0.5, %v145
  %v147 = vsub.f32 1.5, %v146
  %v148 = vmul.f32 %v143, %v147
  %vm149 = vweird.f32 %v126
  %vm150 = vweird.f32 %v143
  %vm151 = vmor %vm149, %vm150
  %v152 = vsel %vm151, %v143, %v148
  %v153 = vrsqrt.pop %v127
  %v154 = vmul.f32 %v153, %v127
  %v155 = vmul.f32 %v154, %v153
  %v156 = vmul.f32 0.5, %v155
  %v157 = vsub.f32 1.5, %v156
  %v158 = vmul.f32 %v153, %v157
  %vm159 = vweird.f32 %v127
  %vm160 = vweird.f32 %v153
  %vm161 = vmor %vm159, %vm160
  %v162 = vsel %vm161, %v153, %v158
  %v163 = vrsqrt.pop %v128
  %v164 = vmul.f32 %v163, %v128
  %v165 = vmul.f32 %v164, %v163
  %v166 = vmul.f32 0.5, %v165
  %v167 = vsub.f32 1.5, %v166
  %v168 = vmul.f32 %v163, %v167
  %vm169 = vweird.f32 %v128
  %vm170 = vweird.f32 %v163
  %vm171 = vmor %vm169, %vm170
  %v172 = vsel %vm171, %v163, %v168
  %v173 = vrsqrt.pop %v129
  %v174 = vmul.f32 %v173, %v129
  %v175 = vmul.f32 %v174, %v173
  %v176 = vmul.f32 0.5, %v175
  %v177 = vsub.f32 1.5, %v176
  %v178 = vmul.f32 %v173, %v177
  %vm179 = vweird.f32 %v129
  %vm180 = vweird.f32 %v173
  %vm181 = vmor %vm179, %vm180
  %v182 = vsel %vm181, %v173, %v178
  %v183 = vrsqrt.pop %v130
  %v184 = vmul.f32 %v183, %v130
  %v185 = vmul.f32 %v184, %v183
  %v186 = vmul.f32 0.5, %v185
  %v187 = vsub.f32 1.5, %v186
  %v188 = vmul.f32 %v183, %v187
  %vm189 = vweird.f32 %v130
  %vm190 = vweird.f32 %v183
  %vm191 = vmor %vm189, %vm190
  %v192 = vsel %vm191, %v183, %v188
  %v193 = vrsqrt.pop %v131
  %v194 = vmul.f32 %v193, %v131
  %v195 = vmul.f32 %v194, %v193
  %v196 = vmul.f32 0.5, %v195
  %v197 = vsub.f32 1.5, %v196
  %v198 = vmul.f32 %v193, %v197
  %vm199 = vweird.f32 %v131
  %vm200 = vweird.f32 %v193
  %vm201 = vmor %vm199, %vm200
  %v202 = vsel %vm201, %v193, %v198
  %v203 = vrsqrt.pop %v132
  %v204 = vmul.f32 %v203, %v132
  %v205 = vmul.f32 %v204, %v203
  %v206 = vmul.f32 0.5, %v205
  %v207 = vsub.f32 1.5, %v206
  %v208 = vmul.f32 %v203, %v207
  %vm209 = vweird.f32 %v132
  %vm210 = vweird.f32 %v203
  %vm211 = vmor %vm209, %vm210
  %v212 = vsel %vm211, %v203, %v208
  %v213 = vmul.f32 %v77, %v142
  %v214 = vmul.f32 %v78, %v152
  %v215 = vmul.f32 %v79, %v162
  %v216 = vmul.f32 %v80, %v172
  %v217 = vmul.f32 %v81, %v182
  %v218 = vmul.f32 %v82, %v192
  %v219 = vmul.f32 %v83, %v202
  %v220 = vmul.f32 %v84, %v212
  %v221 = vld [vmem:[%s1] sm:$0x1]
  %v223 = vperm.slane %v221, 0
  %v225 = vmul.f32 %v213, %v223
  %v226 = vmul.f32 %v214, %v223
  %v227 = vmul.f32 %v215, %v223
  %v228 = vmul.f32 %v216, %v223
  %v229 = vmul.f32 %v217, %v223
  %v230 = vmul.f32 %v218, %v223
  %v231 = vmul.f32 %v219, %v223
  %v232 = vmul.f32 %v220, %v223
  %v233 = vld [vmem:[%s2] sm:$0x1]
  %v235 = vperm.slane %v233, 0
  %v237 = vadd.f32 %v225, %v235
  %v238 = vadd.f32 %v226, %v235
  %v239 = vadd.f32 %v227, %v235
  %v240 = vadd.f32 %v228, %v235
  %v241 = vadd.f32 %v229, %v235
  %v242 = vadd.f32 %v230, %v235
  %v243 = vadd.f32 %v231, %v235
  %v244 = vadd.f32 %v232, %v235
  %v245 = vpack.c.bf16 %v238, %v237
  %v246 = vpack.c.bf16 %v240, %v239
  %v247 = vpack.c.bf16 %v242, %v241
  %v248 = vpack.c.bf16 %v244, %v243
  %v249 = vld [vmem:[%s3] sm:$0xf]
  %v250 = vld [vmem:[%s3 + $0x4] sm:$0xf]
  %v251 = vld [vmem:[%s3 + $0x8] sm:$0xf]
  %v252 = vld [vmem:[%s3 + $0xc] sm:$0xf]
  %v253 = vld [vmem:[%s4] sm:$0x1]
  %v255 = vperm.slane %v253, 0
  %v261 = vunpack.c.l.b16 %v249
  %v262 = vunpack.c.l.b16 %v250
  %v263 = vunpack.c.l.b16 %v251
  %v264 = vunpack.c.l.b16 %v252
  %v265 = vpack.c.b16 %v262, %v261
  %v266 = vpack.c.b16 %v264, %v263
  %v270 = vsel %vm37, %v245, 0
  %v273 = vsel %vm37, %v246, 0
  %v276 = vsel %vm37, %v247, 0
  %v279 = vsel %vm37, %v248, 0
  %281 = vmatpush.bf16.msra.mxu0 0
  %282 = vmatpush.bf16.msra.mxu0 0
  %283 = vmatpush.bf16.msra.mxu0 0
  %284 = vmatpush.bf16.msra.mxu0 0
  %285 = vmatpush.bf16.msra.mxu0 0
  %286 = vmatpush.bf16.msra.mxu0 0
  %287 = vmatpush.bf16.msra.mxu0 %v266
  %288 = vmatpush.bf16.msra.mxu0 %v265
  %289 = vmatmul.bf16.gmra.mxu0 %v270
  %v290 = vpop.f32.mrf.mxu0
  %v291 = vadd.f32 %v255, %v290
  %v292 = vpop.f32.mrf.mxu0
  %v293 = vadd.f32 %v255, %v292
  %294 = vmatmul.bf16.gmra.mxu0 %v273
  %v295 = vpop.f32.mrf.mxu0
  %v296 = vadd.f32 %v255, %v295
  %v297 = vpop.f32.mrf.mxu0
  %v298 = vadd.f32 %v255, %v297
  %299 = vmatmul.bf16.gmra.mxu0 %v276
  %v300 = vpop.f32.mrf.mxu0
  %v301 = vadd.f32 %v255, %v300
  %v302 = vpop.f32.mrf.mxu0
  %v303 = vadd.f32 %v255, %v302
  %304 = vmatmul.bf16.gmra.mxu0 %v279
  %v305 = vpop.f32.mrf.mxu0
  %v306 = vadd.f32 %v255, %v305
  %v307 = vpop.f32.mrf.mxu0
  %v308 = vadd.f32 %v255, %v307
  %309 = vdwg.mxu0
  %v310 = vpack.c.bf16 %v291, %v291
  %v311 = vpack.c.bf16 %v293, %v293
  %v312 = vpack.c.bf16 %v296, %v296
  %v313 = vpack.c.bf16 %v298, %v298
  %v314 = vpack.c.bf16 %v301, %v301
  %v315 = vpack.c.bf16 %v303, %v303
  %v316 = vpack.c.bf16 %v306, %v306
  %v317 = vpack.c.bf16 %v308, %v308
  %vm318 = vcmask 781312
  %319 = vst.msk [vmem:[%s5] sm:$0xf] %vm318, %v310
  %320 = vst.msk [vmem:[%s5 + $0x4] sm:$0xf] %vm318, %v311
  %321 = vst.msk [vmem:[%s5 + $0x8] sm:$0xf] %vm318, %v312
  %322 = vst.msk [vmem:[%s5 + $0xc] sm:$0xf] %vm318, %v313
  %323 = vst.msk [vmem:[%s5 + $0x10] sm:$0xf] %vm318, %v314
  %324 = vst.msk [vmem:[%s5 + $0x14] sm:$0xf] %vm318, %v315
  %325 = vst.msk [vmem:[%s5 + $0x18] sm:$0xf] %vm318, %v316
  %326 = vst.msk [vmem:[%s5 + $0x1c] sm:$0xf] %vm318, %v317
  // Predicated region
  $region22: #{vision_transformer_forward.16} parent=0 // pred_check
    _
  $region23: #{vision_transformer_forward.16} parent=0 // pred_check_branch
    %328 = sbr.rel (0) target = $region25
  $region24: #{vision_transformer_forward.16} parent=0 // pred_region
    _
  $region25: #{vision_transformer_forward.16} parent=0 // pred_fallthru
    _
  // Predicated region
  $region26: #{vision_transformer_forward.16} parent=0 // pred_check
    _
  $region27: #{vision_transformer_forward.16} parent=0 // pred_check_branch
    %330 = sbr.rel (0) target = $region29
  $region28: #{vision_transformer_forward.16} parent=0 // pred_region
    _
  $region29: #{vision_transformer_forward.16} parent=0 // pred_fallthru
    _

// kernel: vision_transformer_forward.19
$region0: #{vision_transformer_forward.19}
  #allocation0 [shape = 'u32[]', space=smem, size = 0x4, offset = 0x4, fixed_abs, tag = 'smem constant byte address 0x4 - core index']
  #allocation1 [shape = 'u32[72,128]{1,0:T(1,128)}', space=vmem, size = 0x9000, scoped, tag = 'internal scratch']
  #allocation2 [shape = 'bf16[32,32]{1,0:T(8,128)(2,1)}', space=vmem, size = 0x2000, scoped, tag = 'scratch operand']
  #allocation3 [shape = 'f32[32,32]{1,0:T(8,128)}', space=vmem, size = 0x4000, scoped, tag = 'scratch operand']
  %s0 = inlined_call_operand.vmem [shape: bf16[32,32], index: 0, kind: input, shape index: {}]
  %s1 = inlined_call_operand.vmem [shape: f32[1,32], index: 1, kind: input, shape index: {}]
  %s2 = inlined_call_operand.vmem [shape: f32[1,32], index: 2, kind: input, shape index: {}]
  %s3 = inlined_call_operand.vmem [shape: bf16[32,128], index: 3, kind: input, shape index: {}]
  %s4 = inlined_call_operand.vmem [shape: f32[1,128], index: 4, kind: input, shape index: {}]
  %s5 = inlined_call_operand.vmem [shape: bf16[128,32], index: 5, kind: input, shape index: {}]
  %s6 = inlined_call_operand.vmem [shape: f32[1,32], index: 6, kind: input, shape index: {}]
  %s7 = inlined_call_operand.vmem [shape: bf16[32,32], index: 7, kind: output, shape index: {}]
  %s8 = sld [smem:[#allocation0]]
  $region46: #{vision_transformer_forward.19} parent=0
    _
  %s10 = ssub.s32 1, %s8
  %s11 = scalar_select 0, %s10, %s8
  // Predicated region
  $region2: #{vision_transformer_forward.19} parent=0 // pred_check
    _
  $region3: #{vision_transformer_forward.19} parent=0 // pred_check_branch
    %13 = sbr.rel (0) target = $region5
  $region4: #{vision_transformer_forward.19} parent=0 // pred_region
    _
  $region5: #{vision_transformer_forward.19} parent=0 // pred_fallthru
    _
  // Predicated region
  $region6: #{vision_transformer_forward.19} parent=0 // pred_check
    _
  $region7: #{vision_transformer_forward.19} parent=0 // pred_check_branch
    %15 = sbr.rel (0) target = $region9
  $region8: #{vision_transformer_forward.19} parent=0 // pred_region
    _
  $region9: #{vision_transformer_forward.19} parent=0 // pred_fallthru
    _
  // Predicated region
  $region10: #{vision_transformer_forward.19} parent=0 // pred_check
    _
  $region11: #{vision_transformer_forward.19} parent=0 // pred_check_branch
    %17 = sbr.rel (0) target = $region13
  $region12: #{vision_transformer_forward.19} parent=0 // pred_region
    _
  $region13: #{vision_transformer_forward.19} parent=0 // pred_fallthru
    _
  // Predicated region
  $region14: #{vision_transformer_forward.19} parent=0 // pred_check
    _
  $region15: #{vision_transformer_forward.19} parent=0 // pred_check_branch
    %19 = sbr.rel (0) target = $region17
  $region16: #{vision_transformer_forward.19} parent=0 // pred_region
    _
  $region17: #{vision_transformer_forward.19} parent=0 // pred_fallthru
    _
  // Predicated region
  $region18: #{vision_transformer_forward.19} parent=0 // pred_check
    _
  $region19: #{vision_transformer_forward.19} parent=0 // pred_check_branch
    %21 = sbr.rel (0) target = $region21
  $region20: #{vision_transformer_forward.19} parent=0 // pred_region
    _
  $region21: #{vision_transformer_forward.19} parent=0 // pred_fallthru
    _
  // Predicated region
  $region22: #{vision_transformer_forward.19} parent=0 // pred_check
    _
  $region23: #{vision_transformer_forward.19} parent=0 // pred_check_branch
    %23 = sbr.rel (0) target = $region25
  $region24: #{vision_transformer_forward.19} parent=0 // pred_region
    _
  $region25: #{vision_transformer_forward.19} parent=0 // pred_fallthru
    _
  // Predicated region
  $region26: #{vision_transformer_forward.19} parent=0 // pred_check
    _
  $region27: #{vision_transformer_forward.19} parent=0 // pred_check_branch
    %25 = sbr.rel (0) target = $region29
  $region28: #{vision_transformer_forward.19} parent=0 // pred_region
    _
  $region29: #{vision_transformer_forward.19} parent=0 // pred_fallthru
    _
  %p27 = scmp.eq.s32.totalorder 0, 0
  // Predicated region
  $region30: #{vision_transformer_forward.19} parent=0 // pred_check
    %p28 = pneg %p27
  $region31: #{vision_transformer_forward.19} parent=0 // pred_check_branch
    %30 = sbr.rel (%p28) target = $region33
  $region32: #{vision_transformer_forward.19} parent=0 // pred_region
    %v31 = vld [vmem:[%s0] sm:$0xf]
    %v32 = vld [vmem:[%s0 + $0x4] sm:$0xf]
    %v33 = vld [vmem:[%s0 + $0x8] sm:$0xf]
    %v34 = vld [vmem:[%s0 + $0xc] sm:$0xf]
    %v35 = vunpack.c.l.bf16 %v31
    %v36 = vunpack.c.l.bf16 %v32
    %v37 = vunpack.c.l.bf16 %v33
    %v38 = vunpack.c.l.bf16 %v34
    %vm39 = vcmask 261120
    %v40 = vsel %vm39, %v35, 0.0
    %41 = vadd.xlane.f32.xlu0 %v40
    %v42 = vpop.xlane.xlu0 %41
    %v43 = vsel %vm39, %v36, 0.0
    %44 = vadd.xlane.f32.xlu0 %v43
    %v45 = vpop.xlane.xlu0 %44
    %v46 = vsel %vm39, %v37, 0.0
    %47 = vadd.xlane.f32.xlu0 %v46
    %v48 = vpop.xlane.xlu0 %47
    %v49 = vsel %vm39, %v38, 0.0
    %50 = vadd.xlane.f32.xlu0 %v49
    %v51 = vpop.xlane.xlu0 %50
    %v52 = vrcp.pop 32.0
    %v53 = vmul.f32 32.0, %v52
    %v54 = vsub.f32 1.0, %v53
    %v55 = vmul.f32 %v52, %v54
    %v56 = vadd.f32 %v52, %v55
    %vm57 = vweird.f32 %v52
    %v58 = vsel %vm57, %v52, %v56
    %v59 = vmul.f32 %v42, %v58
    %v60 = vmul.f32 %v45, %v58
    %v61 = vmul.f32 %v48, %v58
    %v62 = vmul.f32 %v51, %v58
    %v63 = vsub.f32 %v35, %v59
    %v64 = vsub.f32 %v36, %v60
    %v65 = vsub.f32 %v37, %v61
    %v66 = vsub.f32 %v38, %v62
    %v67 = vmul.f32 %v63, %v63
    %v68 = vmul.f32 %v64, %v64
    %v69 = vmul.f32 %v65, %v65
    %v70 = vmul.f32 %v66, %v66
    %v71 = vsel %vm39, %v67, 0.0
    %72 = vadd.xlane.f32.xlu0 %v71
    %v73 = vpop.xlane.xlu0 %72
    %v74 = vsel %vm39, %v68, 0.0
    %75 = vadd.xlane.f32.xlu0 %v74
    %v76 = vpop.xlane.xlu0 %75
    %v77 = vsel %vm39, %v69, 0.0
    %78 = vadd.xlane.f32.xlu0 %v77
    %v79 = vpop.xlane.xlu0 %78
    %v80 = vsel %vm39, %v70, 0.0
    %81 = vadd.xlane.f32.xlu0 %v80
    %v82 = vpop.xlane.xlu0 %81
    %v83 = vmul.f32 %v73, %v58
    %v84 = vmul.f32 %v76, %v58
    %v85 = vmul.f32 %v79, %v58
    %v86 = vmul.f32 %v82, %v58
    %v87 = vadd.f32 %v83, 1e-05
    %v88 = vadd.f32 %v84, 1e-05
    %v89 = vadd.f32 %v85, 1e-05
    %v90 = vadd.f32 %v86, 1e-05
    %v91 = vrsqrt.pop %v87
    %v92 = vmul.f32 %v91, %v87
    %v93 = vmul.f32 %v92, %v91
    %v94 = vmul.f32 0.5, %v93
    %v95 = vsub.f32 1.5, %v94
    %v96 = vmul.f32 %v91, %v95
    %vm97 = vweird.f32 %v87
    %vm98 = vweird.f32 %v91
    %vm99 = vmor %vm97, %vm98
    %v100 = vsel %vm99, %v91, %v96
    %v101 = vrsqrt.pop %v88
    %v102 = vmul.f32 %v101, %v88
    %v103 = vmul.f32 %v102, %v101
    %v104 = vmul.f32 0.5, %v103
    %v105 = vsub.f32 1.5, %v104
    %v106 = vmul.f32 %v101, %v105
    %vm107 = vweird.f32 %v88
    %vm108 = vweird.f32 %v101
    %vm109 = vmor %vm107, %vm108
    %v110 = vsel %vm109, %v101, %v106
    %v111 = vrsqrt.pop %v89
    %v112 = vmul.f32 %v111, %v89
    %v113 = vmul.f32 %v112, %v111
    %v114 = vmul.f32 0.5, %v113
    %v115 = vsub.f32 1.5, %v114
    %v116 = vmul.f32 %v111, %v115
    %vm117 = vweird.f32 %v89
    %vm118 = vweird.f32 %v111
    %vm119 = vmor %vm117, %vm118
    %v120 = vsel %vm119, %v111, %v116
    %v121 = vrsqrt.pop %v90
    %v122 = vmul.f32 %v121, %v90
    %v123 = vmul.f32 %v122, %v121
    %v124 = vmul.f32 0.5, %v123
    %v125 = vsub.f32 1.5, %v124
    %v126 = vmul.f32 %v121, %v125
    %vm127 = vweird.f32 %v90
    %vm128 = vweird.f32 %v121
    %vm129 = vmor %vm127, %vm128
    %v130 = vsel %vm129, %v121, %v126
    %v131 = vmul.f32 %v63, %v100
    %v132 = vmul.f32 %v64, %v110
    %v133 = vmul.f32 %v65, %v120
    %v134 = vmul.f32 %v66, %v130
    %v135 = vld [vmem:[%s1] sm:$0x1]
    %v137 = vperm.slane %v135, 0
    %v139 = vmul.f32 %v131, %v137
    %v140 = vmul.f32 %v132, %v137
    %v141 = vmul.f32 %v133, %v137
    %v142 = vmul.f32 %v134, %v137
    %v143 = vld [vmem:[%s2] sm:$0x1]
    %v145 = vperm.slane %v143, 0
    %v147 = vadd.f32 %v139, %v145
    %v148 = vadd.f32 %v140, %v145
    %v149 = vadd.f32 %v141, %v145
    %v150 = vadd.f32 %v142, %v145
    %v151 = vpack.c.bf16 %v147, %v147
    %v152 = vpack.c.bf16 %v148, %v148
    %v153 = vpack.c.bf16 %v149, %v149
    %v154 = vpack.c.bf16 %v150, %v150
    %vm155 = vcmask 257024
    %156 = vst.msk [vmem:[#allocation2] sm:$0xf] %vm155, %v151
    %157 = vst.msk [vmem:[#allocation2 + $0x4] sm:$0xf] %vm155, %v152
    %158 = vst.msk [vmem:[#allocation2 + $0x8] sm:$0xf] %vm155, %v153
    %159 = vst.msk [vmem:[#allocation2 + $0xc] sm:$0xf] %vm155, %v154
    %160 = vst.msk [vmem:[#allocation3] sm:$0xff] %vm39, 0.0
    %161 = vst.msk [vmem:[#allocation3 + $0x8] sm:$0xff] %vm39, 0.0
    %162 = vst.msk [vmem:[#allocation3 + $0x10] sm:$0xff] %vm39, 0.0
    %163 = vst.msk [vmem:[#allocation3 + $0x18] sm:$0xff] %vm39, 0.0
  $region33: #{vision_transformer_forward.19} parent=0 // pred_fallthru
    _
  %v164 = vld [vmem:[#allocation2] sm:$0xf]
  %v165 = vld [vmem:[#allocation2 + $0x4] sm:$0xf]
  %v166 = vld [vmem:[#allocation2 + $0x8] sm:$0xf]
  %v167 = vld [vmem:[#allocation2 + $0xc] sm:$0xf]
  %v168 = vld [vmem:[%s3] sm:$0xf]
  %v169 = vld [vmem:[%s3 + $0x4] sm:$0xf]
  %v170 = vld [vmem:[%s3 + $0x8] sm:$0xf]
  %v171 = vld [vmem:[%s3 + $0xc] sm:$0xf]
  %v172 = vld [vmem:[%s4] sm:$0x1]
  %v174 = vperm.slane %v172, 0
  %v180 = vunpack.c.l.b16 %v164
  %v181 = vunpack.c.l.b16 %v165
  %v182 = vunpack.c.l.b16 %v166
  %v183 = vunpack.c.l.b16 %v167
  %v184 = vpack.c.b16 %v181, %v180
  %v185 = vpack.c.b16 %v183, %v182
  %v190 = vunpack.c.l.b16 %v168
  %v191 = vunpack.c.l.b16 %v169
  %v192 = vunpack.c.l.b16 %v170
  %v193 = vunpack.c.l.b16 %v171
  %v194 = vpack.c.b16 %v191, %v190
  %v195 = vpack.c.b16 %v193, %v192
  %vm198 = vcmask 261120
  %v200 = vsel %vm198, %v184, 0
  %v203 = vsel %vm198, %v185, 0
  %205 = vmatpush.bf16.msra.mxu0 0
  %206 = vmatpush.bf16.msra.mxu0 0
  %207 = vmatpush.bf16.msra.mxu0 0
  %208 = vmatpush.bf16.msra.mxu0 0
  %209 = vmatpush.bf16.msra.mxu0 0
  %210 = vmatpush.bf16.msra.mxu0 0
  %211 = vmatpush.bf16.msra.mxu0 %v195
  %212 = vmatpush.bf16.msra.mxu0 %v194
  %213 = vmatmul.bf16.gmra.mxu0 %v200
  %v214 = vpop.f32.mrf.mxu0
  %v215 = vadd.f32 %v174, %v214
  %v216 = vpop.f32.mrf.mxu0
  %v217 = vadd.f32 %v174, %v216
  %218 = vmatmul.bf16.gmra.mxu0 %v203
  %v219 = vpop.f32.mrf.mxu0
  %v220 = vadd.f32 %v174, %v219
  %v221 = vpop.f32.mrf.mxu0
  %v222 = vadd.f32 %v174, %v221
  %223 = vdwg.mxu0
  %v224 = vmul.f32 %v215, 1.702
  %v225 = vmul.f32 %v217, 1.702
  %v226 = vmul.f32 %v220, 1.702
  %v227 = vmul.f32 %v222, 1.702
  %v228 = vxor.u32 %v224, 2147483648
  %v229 = vxor.u32 %v225, 2147483648
  %v230 = vxor.u32 %v226, 2147483648
  %v231 = vxor.u32 %v227, 2147483648
  %v232 = vmul.f32 %v228, 1.442695
  %v233 = vpow.pop %v232
  %v234 = vmul.f32 %v229, 1.442695
  %v235 = vpow.pop %v234
  %v236 = vmul.f32 %v230, 1.442695
  %v237 = vpow.pop %v236
  %v238 = vmul.f32 %v231, 1.442695
  %v239 = vpow.pop %v238
  %v240 = vadd.f32 %v233, 1.0
  %v241 = vadd.f32 %v235, 1.0
  %v242 = vadd.f32 %v237, 1.0
  %v243 = vadd.f32 %v239, 1.0
  %v244 = vrcp.pop %v240
  %v245 = vmul.f32 %v240, %v244
  %v246 = vsub.f32 1.0, %v245
  %v247 = vmul.f32 %v244, %v246
  %v248 = vadd.f32 %v244, %v247
  %vm249 = vweird.f32 %v240
  %vm250 = vweird.f32 %v244
  %vm251 = vmor %vm249, %vm250
  %v252 = vsel %vm251, %v244, %v248
  %v253 = vand.u32 2147483647, %v240
  %vm254 = vcmp.eq.f32.partialorder %v253, 8.507059e+37
  %v255 = vand.u32 %v240, 2147483648
  %v256 = vor.u32 1.1754944e-38, %v255
  %v257 = vsel %vm254, %v256, %v252
  %v258 = vmul.f32 1.0, %v257
  %v259 = vrcp.pop %v241
  %v260 = vmul.f32 %v241, %v259
  %v261 = vsub.f32 1.0, %v260
  %v262 = vmul.f32 %v259, %v261
  %v263 = vadd.f32 %v259, %v262
  %vm264 = vweird.f32 %v241
  %vm265 = vweird.f32 %v259
  %vm266 = vmor %vm264, %vm265
  %v267 = vsel %vm266, %v259, %v263
  %v268 = vand.u32 2147483647, %v241
  %vm269 = vcmp.eq.f32.partialorder %v268, 8.507059e+37
  %v270 = vand.u32 %v241, 2147483648
  %v271 = vor.u32 1.1754944e-38, %v270
  %v272 = vsel %vm269, %v271, %v267
  %v273 = vmul.f32 1.0, %v272
  %v274 = vrcp.pop %v242
  %v275 = vmul.f32 %v242, %v274
  %v276 = vsub.f32 1.0, %v275
  %v277 = vmul.f32 %v274, %v276
  %v278 = vadd.f32 %v274, %v277
  %vm279 = vweird.f32 %v242
  %vm280 = vweird.f32 %v274
  %vm281 = vmor %vm279, %vm280
  %v282 = vsel %vm281, %v274, %v278
  %v283 = vand.u32 2147483647, %v242
  %vm284 = vcmp.eq.f32.partialorder %v283, 8.507059e+37
  %v285 = vand.u32 %v242, 2147483648
  %v286 = vor.u32 1.1754944e-38, %v285
  %v287 = vsel %vm284, %v286, %v282
  %v288 = vmul.f32 1.0, %v287
  %v289 = vrcp.pop %v243
  %v290 = vmul.f32 %v243, %v289
  %v291 = vsub.f32 1.0, %v290
  %v292 = vmul.f32 %v289, %v291
  %v293 = vadd.f32 %v289, %v292
  %vm294 = vweird.f32 %v243
  %vm295 = vweird.f32 %v289
  %vm296 = vmor %vm294, %vm295
  %v297 = vsel %vm296, %v289, %v293
  %v298 = vand.u32 2147483647, %v243
  %vm299 = vcmp.eq.f32.partialorder %v298, 8.507059e+37
  %v300 = vand.u32 %v243, 2147483648
  %v301 = vor.u32 1.1754944e-38, %v300
  %v302 = vsel %vm299, %v301, %v297
  %v303 = vmul.f32 1.0, %v302
  %v304 = vmul.f32 %v215, %v258
  %v305 = vmul.f32 %v217, %v273
  %v306 = vmul.f32 %v220, %v288
  %v307 = vmul.f32 %v222, %v303
  %v308 = vld [vmem:[#allocation3] sm:$0xff]
  %v309 = vld [vmem:[#allocation3 + $0x8] sm:$0xff]
  %v310 = vld [vmem:[#allocation3 + $0x10] sm:$0xff]
  %v311 = vld [vmem:[#allocation3 + $0x18] sm:$0xff]
  %v312 = vpack.c.bf16 %v305, %v304
  %v313 = vpack.c.bf16 %v307, %v306
  %v314 = vld [vmem:[%s5] sm:$0xf]
  %v315 = vld [vmem:[%s5 + $0x4] sm:$0xf]
  %v316 = vld [vmem:[%s5 + $0x8] sm:$0xf]
  %v317 = vld [vmem:[%s5 + $0xc] sm:$0xf]
  %v318 = vld [vmem:[%s5 + $0x10] sm:$0xf]
  %v319 = vld [vmem:[%s5 + $0x14] sm:$0xf]
  %v320 = vld [vmem:[%s5 + $0x18] sm:$0xf]
  %v321 = vld [vmem:[%s5 + $0x1c] sm:$0xf]
  %v322 = vld [vmem:[%s5 + $0x20] sm:$0xf]
  %v323 = vld [vmem:[%s5 + $0x24] sm:$0xf]
  %v324 = vld [vmem:[%s5 + $0x28] sm:$0xf]
  %v325 = vld [vmem:[%s5 + $0x2c] sm:$0xf]
  %v326 = vld [vmem:[%s5 + $0x30] sm:$0xf]
  %v327 = vld [vmem:[%s5 + $0x34] sm:$0xf]
  %v328 = vld [vmem:[%s5 + $0x38] sm:$0xf]
  %v329 = vld [vmem:[%s5 + $0x3c] sm:$0xf]
  %v346 = vunpack.c.l.b16 %v314
  %v347 = vunpack.c.l.b16 %v315
  %v348 = vunpack.c.l.b16 %v316
  %v349 = vunpack.c.l.b16 %v317
  %v350 = vunpack.c.l.b16 %v318
  %v351 = vunpack.c.l.b16 %v319
  %v352 = vunpack.c.l.b16 %v320
  %v353 = vunpack.c.l.b16 %v321
  %v354 = vunpack.c.l.b16 %v322
  %v355 = vunpack.c.l.b16 %v323
  %v356 = vunpack.c.l.b16 %v324
  %v357 = vunpack.c.l.b16 %v325
  %v358 = vunpack.c.l.b16 %v326
  %v359 = vunpack.c.l.b16 %v327
  %v360 = vunpack.c.l.b16 %v328
  %v361 = vunpack.c.l.b16 %v329
  %v362 = vpack.c.b16 %v347, %v346
  %v363 = vpack.c.b16 %v349, %v348
  %v364 = vpack.c.b16 %v351, %v350
  %v365 = vpack.c.b16 %v353, %v352
  %v366 = vpack.c.b16 %v355, %v354
  %v367 = vpack.c.b16 %v357, %v356
  %v368 = vpack.c.b16 %v359, %v358
  %v369 = vpack.c.b16 %v361, %v360
  %378 = vmatpush.bf16.msra.mxu0 %v369
  %379 = vmatpush.bf16.msra.mxu0 %v368
  %380 = vmatpush.bf16.msra.mxu0 %v367
  %381 = vmatpush.bf16.msra.mxu0 %v366
  %382 = vmatpush.bf16.msra.mxu0 %v365
  %383 = vmatpush.bf16.msra.mxu0 %v364
  %384 = vmatpush.bf16.msra.mxu0 %v363
  %385 = vmatpush.bf16.msra.mxu0 %v362
  %386 = vmatmul.bf16.gmra.mxu0 %v312
  %v387 = vpop.f32.mrf.mxu0
  %v388 = vadd.f32 0.0, %v387
  %v389 = vpop.f32.mrf.mxu0
  %v390 = vadd.f32 0.0, %v389
  %391 = vmatmul.bf16.gmra.mxu0 %v313
  %v392 = vpop.f32.mrf.mxu0
  %v393 = vadd.f32 0.0, %v392
  %v394 = vpop.f32.mrf.mxu0
  %v395 = vadd.f32 0.0, %v394
  %396 = vdwg.mxu0
  %v397 = vadd.f32 %v308, %v388
  %v398 = vadd.f32 %v309, %v390
  %v399 = vadd.f32 %v310, %v393
  %v400 = vadd.f32 %v311, %v395
  %401 = vst.msk [vmem:[#allocation3] sm:$0xff] %vm198, %v397
  %402 = vst.msk [vmem:[#allocation3 + $0x8] sm:$0xff] %vm198, %v398
  %403 = vst.msk [vmem:[#allocation3 + $0x10] sm:$0xff] %vm198, %v399
  %404 = vst.msk [vmem:[#allocation3 + $0x18] sm:$0xff] %vm198, %v400
  // Predicated region
  $region34: #{vision_transformer_forward.19} parent=0 // pred_check
    %p405 = pneg %p27
  $region35: #{vision_transformer_forward.19} parent=0 // pred_check_branch
    %407 = sbr.rel (%p405) target = $region37
  $region36: #{vision_transformer_forward.19} parent=0 // pred_region
    %v408 = vld [vmem:[%s0] sm:$0xf]
    %v409 = vld [vmem:[%s0 + $0x4] sm:$0xf]
    %v410 = vld [vmem:[%s0 + $0x8] sm:$0xf]
    %v411 = vld [vmem:[%s0 + $0xc] sm:$0xf]
    %v412 = vunpack.c.l.bf16 %v408
    %v413 = vunpack.c.l.bf16 %v409
    %v414 = vunpack.c.l.bf16 %v410
    %v415 = vunpack.c.l.bf16 %v411
    %v416 = vld [vmem:[#allocation3] sm:$0xff]
    %v417 = vld [vmem:[#allocation3 + $0x8] sm:$0xff]
    %v418 = vld [vmem:[#allocation3 + $0x10] sm:$0xff]
    %v419 = vld [vmem:[#allocation3 + $0x18] sm:$0xff]
    %v420 = vadd.f32 %v412, %v416
    %v421 = vadd.f32 %v413, %v417
    %v422 = vadd.f32 %v414, %v418
    %v423 = vadd.f32 %v415, %v419
    %v424 = vld [vmem:[%s6] sm:$0x1]
    %v426 = vperm.slane %v424, 0
    %v428 = vadd.f32 %v420, %v426
    %v429 = vadd.f32 %v421, %v426
    %v430 = vadd.f32 %v422, %v426
    %v431 = vadd.f32 %v423, %v426
    %v432 = vpack.c.bf16 %v428, %v428
    %v433 = vpack.c.bf16 %v429, %v429
    %v434 = vpack.c.bf16 %v430, %v430
    %v435 = vpack.c.bf16 %v431, %v431
    %vm436 = vcmask 257024
    %437 = vst.msk [vmem:[%s7] sm:$0xf] %vm436, %v432
    %438 = vst.msk [vmem:[%s7 + $0x4] sm:$0xf] %vm436, %v433
    %439 = vst.msk [vmem:[%s7 + $0x8] sm:$0xf] %vm436, %v434
    %440 = vst.msk [vmem:[%s7 + $0xc] sm:$0xf] %vm436, %v435
  $region37: #{vision_transformer_forward.19} parent=0 // pred_fallthru
    _
  // Predicated region
  $region38: #{vision_transformer_forward.19} parent=0 // pred_check
    _
  $region39: #{vision_transformer_forward.19} parent=0 // pred_check_branch
    %442 = sbr.rel (0) target = $region41
  $region40: #{vision_transformer_forward.19} parent=0 // pred_region
    _
  $region41: #{vision_transformer_forward.19} parent=0 // pred_fallthru
    _
  // Predicated region
  $region42: #{vision_transformer_forward.19} parent=0 // pred_check
    _
  $region43: #{vision_transformer_forward.19} parent=0 // pred_check_branch
    %444 = sbr.rel (0) target = $region45
  $region44: #{vision_transformer_forward.19} parent=0 // pred_region
    _
  $region45: #{vision_transformer_forward.19} parent=0 // pred_fallthru
    _

// kernel: vision_transformer_forward.18
$region0: #{vision_transformer_forward.18}
  #allocation0 [shape = 'u32[]', space=smem, size = 0x4, offset = 0x4, fixed_abs, tag = 'smem constant byte address 0x4 - core index']
  #allocation1 [shape = 'u32[72,128]{1,0:T(1,128)}', space=vmem, size = 0x9000, scoped, tag = 'internal scratch']
  #allocation2 [shape = 'f32[16,32]{1,0:T(8,128)}', space=vmem, size = 0x2000, scoped, tag = 'scratch operand']
  #allocation3 [shape = 'f32[32,32]{1,0:T(8,128)}', space=vmem, size = 0x4000, scoped, tag = 'scratch operand']
  %s0 = inlined_call_operand.vmem [shape: bf16[2,4,16,8], index: 0, kind: input, shape index: {}]
  %s1 = inlined_call_operand.vmem [shape: bf16[2,4,32,8], index: 1, kind: input, shape index: {}]
  %s2 = inlined_call_operand.vmem [shape: bf16[2,4,8,32], index: 2, kind: input, shape index: {}]
  %s3 = inlined_call_operand.vmem [shape: bf16[2,4,32,8], index: 3, kind: input, shape index: {}]
  %s4 = inlined_call_operand.vmem [shape: f32[2,16,32], index: 4, kind: input, shape index: {}]
  %s5 = inlined_call_operand.vmem [shape: f32[1,32], index: 5, kind: input, shape index: {}]
  %s6 = inlined_call_operand.vmem [shape: bf16[4,8,32], index: 6, kind: input, shape index: {}]
  %s7 = inlined_call_operand.vmem [shape: f32[1,32], index: 7, kind: input, shape index: {}]
  %s8 = inlined_call_operand.vmem [shape: bf16[2,16,32], index: 8, kind: input, shape index: {}]
  %s9 = inlined_call_operand.vmem [shape: bf16[2,32,32], index: 9, kind: input, shape index: {}]
  %s10 = inlined_call_operand.vmem [shape: bf16[2,16,32], index: 10, kind: output, shape index: {0}]
  %s11 = inlined_call_operand.vmem [shape: bf16[2,32,32], index: 11, kind: output, shape index: {1}]
  %12 = xla_tuple %s10, %s11
  %s13 = sld [smem:[#allocation0]]
  $region89: #{vision_transformer_forward.18} parent=0
    _
  %s15 = ssub.s32 1, %s13
  %s16 = scalar_select 0, %s15, %s13
  loop: start=0, step=1, limit=10
  $region2: #{vision_transformer_forward.18} parent=0 // loop_pre_header
    _
  $region3: #{vision_transformer_forward.18} parent=0 // loop_header
    %s18 = sphi 0, %s22
    %p19 = scmp.ge.s32.totalorder %s18, 10
    %s25 = sphi 0, %s37
    %s26 = sphi 0, %s33
    %s27 = sphi 0, %s25
    %s28 = sphi 0, %s26
    %s29 = sphi 0, %s27
    %s30 = sphi 0, %s28
    %s42 = sphi 0, %s44
    %s45 = sphi 0, %s42
    %s46 = sphi 0, %s45
    %s62 = sphi 0, %s46
    %s70 = sphi 0, %s72
    %s73 = sphi 0, %s70
    %s74 = sphi 0, %s73
    %s90 = sphi 0, %s74
    %s98 = sphi 0, %s100
    %s101 = sphi 0, %s98
    %s102 = sphi 0, %s101
    %s118 = sphi 0, %s102
    %s126 = sphi 0, %s128
    %s129 = sphi 0, %s126
    %s130 = sphi 0, %s129
    %s146 = sphi 0, %s130
    %s152 = sphi 0, %s154
    %s155 = sphi 0, %s152
    %s156 = sphi 0, %s155
    %s172 = sphi 0, %s156
    %s176 = sphi 0, %s176
    %s178 = sphi 0, %s176
    %s179 = sphi 0, %s178
    %s193 = sphi 0, %s179
    %s199 = sphi 0, %s201
    %s202 = sphi 0, %s199
    %s203 = sphi 0, %s202
    %s219 = sphi 0, %s203
    %s223 = sphi 0, %s223
    %s225 = sphi 0, %s223
    %s226 = sphi 0, %s225
    %s240 = sphi 0, %s226
    %s246 = sphi 0, %s248
    %s249 = sphi 0, %s246
    %s250 = sphi 0, %s249
    %s266 = sphi 0, %s250
    %s272 = sphi 0, %s274
    %s275 = sphi 0, %s272
    %s276 = sphi 0, %s275
    %s292 = sphi 0, %s276
    %s298 = sphi 0, %s300
    %s301 = sphi 0, %s298
    %s302 = sphi 0, %s301
    %s318 = sphi 0, %s302
    %s324 = sphi 0, %s326
    %s327 = sphi 0, %s324
    %s328 = sphi 0, %s327
    %s344 = sphi 0, %s328
  $region4: #{vision_transformer_forward.18} parent=0 // loop_header_branch
    %21 = sbr.rel (%p19) target = $region8
  $region5: #{vision_transformer_forward.18} parent=0 // loop_body
    %s23 = ssub.s32 %s18, 1
    %s24 = ssub.s32 %s18, 2
    %s31 = sadd.s32 1, %s26
    %p32 = scmp.ge.s32.totalorder %s31, 4
    %s33 = scalar_select %p32, 0, %s31
    %s34 = sadd.s32 1, %s25
    %s35 = scalar_select %p32, %s34, %s25
    %p36 = scmp.ge.s32.totalorder %s35, 2
    %s37 = scalar_select %p36, 0, %s35
    %s38 = ssub.s32 %s25, %s37
    %s39 = ssub.s32 %s26, %s33
    %s40 = sor.u32 %s38, %s39
    %p41 = scmp.eq.s32.totalorder %s40, 0
    %s43 = sadd.s32 %s42, 1
    %s44 = scalar_select %p41, %s42, %s43
    %p47 = pneg %p41
    %p48 = scmp.eq.s32.totalorder %s18, 7
    %p49 = por %p47, %p48
    %p50 = scmp.ne.s32.totalorder %s42, %s45
    %p51 = scmp.eq.s32.totalorder %s18, 0
    %p52 = por %p50, %p51
    %p53 = scmp.ne.s32.totalorder %s42, %s45
    %p54 = scmp.eq.s32.totalorder %s23, 7
    %p55 = por %p53, %p54
    %p56 = scmp.ne.s32.totalorder %s45, %s46
    %p57 = scmp.eq.s32.totalorder %s23, 0
    %p58 = por %p56, %p57
    %p59 = scmp.ne.s32.totalorder %s45, %s46
    %p60 = scmp.eq.s32.totalorder %s24, 7
    %p61 = por %p59, %p60
    %p63 = scmp.ne.s32.totalorder %s46, %s62
    %p64 = scmp.eq.s32.totalorder %s24, 0
    %p65 = por %p63, %p64
    %s66 = ssub.s32 %s25, %s37
    %s67 = ssub.s32 %s26, %s33
    %s68 = sor.u32 %s66, %s67
    %p69 = scmp.eq.s32.totalorder %s68, 0
    %s71 = sadd.s32 %s70, 1
    %s72 = scalar_select %p69, %s70, %s71
    %p75 = pneg %p69
    %p76 = scmp.eq.s32.totalorder %s18, 7
    %p77 = por %p75, %p76
    %p78 = scmp.ne.s32.totalorder %s70, %s73
    %p79 = scmp.eq.s32.totalorder %s18, 0
    %p80 = por %p78, %p79
    %p81 = scmp.ne.s32.totalorder %s70, %s73
    %p82 = scmp.eq.s32.totalorder %s23, 7
    %p83 = por %p81, %p82
    %p84 = scmp.ne.s32.totalorder %s73, %s74
    %p85 = scmp.eq.s32.totalorder %s23, 0
    %p86 = por %p84, %p85
    %p87 = scmp.ne.s32.totalorder %s73, %s74
    %p88 = scmp.eq.s32.totalorder %s24, 7
    %p89 = por %p87, %p88
    %p91 = scmp.ne.s32.totalorder %s74, %s90
    %p92 = scmp.eq.s32.totalorder %s24, 0
    %p93 = por %p91, %p92
    %s94 = ssub.s32 %s25, %s37
    %s95 = ssub.s32 %s26, %s33
    %s96 = sor.u32 %s94, %s95
    %p97 = scmp.eq.s32.totalorder %s96, 0
    %s99 = sadd.s32 %s98, 1
    %s100 = scalar_select %p97, %s98, %s99
    %p103 = pneg %p97
    %p104 = scmp.eq.s32.totalorder %s18, 7
    %p105 = por %p103, %p104
    %p106 = scmp.ne.s32.totalorder %s98, %s101
    %p107 = scmp.eq.s32.totalorder %s18, 0
    %p108 = por %p106, %p107
    %p109 = scmp.ne.s32.totalorder %s98, %s101
    %p110 = scmp.eq.s32.totalorder %s23, 7
    %p111 = por %p109, %p110
    %p112 = scmp.ne.s32.totalorder %s101, %s102
    %p113 = scmp.eq.s32.totalorder %s23, 0
    %p114 = por %p112, %p113
    %p115 = scmp.ne.s32.totalorder %s101, %s102
    %p116 = scmp.eq.s32.totalorder %s24, 7
    %p117 = por %p115, %p116
    %p119 = scmp.ne.s32.totalorder %s102, %s118
    %p120 = scmp.eq.s32.totalorder %s24, 0
    %p121 = por %p119, %p120
    %s122 = ssub.s32 %s25, %s37
    %s123 = ssub.s32 %s26, %s33
    %s124 = sor.u32 %s122, %s123
    %p125 = scmp.eq.s32.totalorder %s124, 0
    %s127 = sadd.s32 %s126, 1
    %s128 = scalar_select %p125, %s126, %s127
    %p131 = pneg %p125
    %p132 = scmp.eq.s32.totalorder %s18, 7
    %p133 = por %p131, %p132
    %p134 = scmp.ne.s32.totalorder %s126, %s129
    %p135 = scmp.eq.s32.totalorder %s18, 0
    %p136 = por %p134, %p135
    %p137 = scmp.ne.s32.totalorder %s126, %s129
    %p138 = scmp.eq.s32.totalorder %s23, 7
    %p139 = por %p137, %p138
    %p140 = scmp.ne.s32.totalorder %s129, %s130
    %p141 = scmp.eq.s32.totalorder %s23, 0
    %p142 = por %p140, %p141
    %p143 = scmp.ne.s32.totalorder %s129, %s130
    %p144 = scmp.eq.s32.totalorder %s24, 7
    %p145 = por %p143, %p144
    %p147 = scmp.ne.s32.totalorder %s130, %s146
    %p148 = scmp.eq.s32.totalorder %s24, 0
    %p149 = por %p147, %p148
    %s150 = ssub.s32 %s25, %s37
    %p151 = scmp.eq.s32.totalorder %s150, 0
    %s153 = sadd.s32 %s152, 1
    %s154 = scalar_select %p151, %s152, %s153
    %p157 = pneg %p151
    %p158 = scmp.eq.s32.totalorder %s18, 7
    %p159 = por %p157, %p158
    %p160 = scmp.ne.s32.totalorder %s152, %s155
    %p161 = scmp.eq.s32.totalorder %s18, 0
    %p162 = por %p160, %p161
    %p163 = scmp.ne.s32.totalorder %s152, %s155
    %p164 = scmp.eq.s32.totalorder %s23, 7
    %p165 = por %p163, %p164
    %p166 = scmp.ne.s32.totalorder %s155, %s156
    %p167 = scmp.eq.s32.totalorder %s23, 0
    %p168 = por %p166, %p167
    %p169 = scmp.ne.s32.totalorder %s155, %s156
    %p170 = scmp.eq.s32.totalorder %s24, 7
    %p171 = por %p169, %p170
    %p173 = scmp.ne.s32.totalorder %s156, %s172
    %p174 = scmp.eq.s32.totalorder %s24, 0
    %p175 = por %p173, %p174
    %s177 = sadd.s32 %s176, 1
    %p180 = scmp.eq.s32.totalorder %s18, 7
    %p181 = scmp.ne.s32.totalorder %s176, %s178
    %p182 = scmp.eq.s32.totalorder %s18, 0
    %p183 = por %p181, %p182
    %p184 = scmp.ne.s32.totalorder %s176, %s178
    %p185 = scmp.eq.s32.totalorder %s23, 7
    %p186 = por %p184, %p185
    %p187 = scmp.ne.s32.totalorder %s178, %s179
    %p188 = scmp.eq.s32.totalorder %s23, 0
    %p189 = por %p187, %p188
    %p190 = scmp.ne.s32.totalorder %s178, %s179
    %p191 = scmp.eq.s32.totalorder %s24, 7
    %p192 = por %p190, %p191
    %p194 = scmp.ne.s32.totalorder %s179, %s193
    %p195 = scmp.eq.s32.totalorder %s24, 0
    %p196 = por %p194, %p195
    %s197 = ssub.s32 %s26, %s33
    %p198 = scmp.eq.s32.totalorder %s197, 0
    %s200 = sadd.s32 %s199, 1
    %s201 = scalar_select %p198, %s199, %s200
    %p204 = pneg %p198
    %p205 = scmp.eq.s32.totalorder %s18, 7
    %p206 = por %p204, %p205
    %p207 = scmp.ne.s32.totalorder %s199, %s202
    %p208 = scmp.eq.s32.totalorder %s18, 0
    %p209 = por %p207, %p208
    %p210 = scmp.ne.s32.totalorder %s199, %s202
    %p211 = scmp.eq.s32.totalorder %s23, 7
    %p212 = por %p210, %p211
    %p213 = scmp.ne.s32.totalorder %s202, %s203
    %p214 = scmp.eq.s32.totalorder %s23, 0
    %p215 = por %p213, %p214
    %p216 = scmp.ne.s32.totalorder %s202, %s203
    %p217 = scmp.eq.s32.totalorder %s24, 7
    %p218 = por %p216, %p217
    %p220 = scmp.ne.s32.totalorder %s203, %s219
    %p221 = scmp.eq.s32.totalorder %s24, 0
    %p222 = por %p220, %p221
    %s224 = sadd.s32 %s223, 1
    %p227 = scmp.eq.s32.totalorder %s18, 7
    %p228 = scmp.ne.s32.totalorder %s223, %s225
    %p229 = scmp.eq.s32.totalorder %s18, 0
    %p230 = por %p228, %p229
    %p231 = scmp.ne.s32.totalorder %s223, %s225
    %p232 = scmp.eq.s32.totalorder %s23, 7
    %p233 = por %p231, %p232
    %p234 = scmp.ne.s32.totalorder %s225, %s226
    %p235 = scmp.eq.s32.totalorder %s23, 0
    %p236 = por %p234, %p235
    %p237 = scmp.ne.s32.totalorder %s225, %s226
    %p238 = scmp.eq.s32.totalorder %s24, 7
    %p239 = por %p237, %p238
    %p241 = scmp.ne.s32.totalorder %s226, %s240
    %p242 = scmp.eq.s32.totalorder %s24, 0
    %p243 = por %p241, %p242
    %s244 = ssub.s32 %s25, %s37
    %p245 = scmp.eq.s32.totalorder %s244, 0
    %s247 = sadd.s32 %s246, 1
    %s248 = scalar_select %p245, %s246, %s247
    %p251 = pneg %p245
    %p252 = scmp.eq.s32.totalorder %s18, 7
    %p253 = por %p251, %p252
    %p254 = scmp.ne.s32.totalorder %s246, %s249
    %p255 = scmp.eq.s32.totalorder %s18, 0
    %p256 = por %p254, %p255
    %p257 = scmp.ne.s32.totalorder %s246, %s249
    %p258 = scmp.eq.s32.totalorder %s23, 7
    %p259 = por %p257, %p258
    %p260 = scmp.ne.s32.totalorder %s249, %s250
    %p261 = scmp.eq.s32.totalorder %s23, 0
    %p262 = por %p260, %p261
    %p263 = scmp.ne.s32.totalorder %s249, %s250
    %p264 = scmp.eq.s32.totalorder %s24, 7
    %p265 = por %p263, %p264
    %p267 = scmp.ne.s32.totalorder %s250, %s266
    %p268 = scmp.eq.s32.totalorder %s24, 0
    %p269 = por %p267, %p268
    %s270 = ssub.s32 %s25, %s37
    %p271 = scmp.eq.s32.totalorder %s270, 0
    %s273 = sadd.s32 %s272, 1
    %s274 = scalar_select %p271, %s272, %s273
    %p277 = pneg %p271
    %p278 = scmp.eq.s32.totalorder %s18, 7
    %p279 = por %p277, %p278
    %p280 = scmp.ne.s32.totalorder %s272, %s275
    %p281 = scmp.eq.s32.totalorder %s18, 0
    %p282 = por %p280, %p281
    %p283 = scmp.ne.s32.totalorder %s272, %s275
    %p284 = scmp.eq.s32.totalorder %s23, 7
    %p285 = por %p283, %p284
    %p286 = scmp.ne.s32.totalorder %s275, %s276
    %p287 = scmp.eq.s32.totalorder %s23, 0
    %p288 = por %p286, %p287
    %p289 = scmp.ne.s32.totalorder %s275, %s276
    %p290 = scmp.eq.s32.totalorder %s24, 7
    %p291 = por %p289, %p290
    %p293 = scmp.ne.s32.totalorder %s276, %s292
    %p294 = scmp.eq.s32.totalorder %s24, 0
    %p295 = por %p293, %p294
    %s296 = ssub.s32 %s25, %s37
    %p297 = scmp.eq.s32.totalorder %s296, 0
    %s299 = sadd.s32 %s298, 1
    %s300 = scalar_select %p297, %s298, %s299
    %p303 = pneg %p297
    %p304 = scmp.eq.s32.totalorder %s18, 7
    %p305 = por %p303, %p304
    %p306 = scmp.ne.s32.totalorder %s298, %s301
    %p307 = scmp.eq.s32.totalorder %s18, 0
    %p308 = por %p306, %p307
    %p309 = scmp.ne.s32.totalorder %s298, %s301
    %p310 = scmp.eq.s32.totalorder %s23, 7
    %p311 = por %p309, %p310
    %p312 = scmp.ne.s32.totalorder %s301, %s302
    %p313 = scmp.eq.s32.totalorder %s23, 0
    %p314 = por %p312, %p313
    %p315 = scmp.ne.s32.totalorder %s301, %s302
    %p316 = scmp.eq.s32.totalorder %s24, 7
    %p317 = por %p315, %p316
    %p319 = scmp.ne.s32.totalorder %s302, %s318
    %p320 = scmp.eq.s32.totalorder %s24, 0
    %p321 = por %p319, %p320
    %s322 = ssub.s32 %s25, %s37
    %p323 = scmp.eq.s32.totalorder %s322, 0
    %s325 = sadd.s32 %s324, 1
    %s326 = scalar_select %p323, %s324, %s325
    %p329 = pneg %p323
    %p330 = scmp.eq.s32.totalorder %s18, 7
    %p331 = por %p329, %p330
    %p332 = scmp.ne.s32.totalorder %s324, %s327
    %p333 = scmp.eq.s32.totalorder %s18, 0
    %p334 = por %p332, %p333
    %p335 = scmp.ne.s32.totalorder %s324, %s327
    %p336 = scmp.eq.s32.totalorder %s23, 7
    %p337 = por %p335, %p336
    %p338 = scmp.ne.s32.totalorder %s327, %s328
    %p339 = scmp.eq.s32.totalorder %s23, 0
    %p340 = por %p338, %p339
    %p341 = scmp.ne.s32.totalorder %s327, %s328
    %p342 = scmp.eq.s32.totalorder %s24, 7
    %p343 = por %p341, %p342
    %p345 = scmp.ne.s32.totalorder %s328, %s344
    %p346 = scmp.eq.s32.totalorder %s24, 0
    %p347 = por %p345, %p346
    %p348 = scmp.le.s32.totalorder 1, %s18
    %p349 = scmp.lt.s32.totalorder %s18, 9
    %p350 = pnand %p348, %p349
    %p351 = pneg %p350
    // Predicated region
    $region9: #{vision_transformer_forward.18} parent=5 // pred_check
      _
    $region10: #{vision_transformer_forward.18} parent=5 // pred_check_branch
      %353 = sbr.rel (%p350) target = $region12
    $region11: #{vision_transformer_forward.18} parent=5 // pred_region
      %s354 = ssub.s32 %s18, 1
      // Predicated region
      $region13: #{vision_transformer_forward.18} parent=11 // pred_check
        %p355 = pneg %p189
      $region14: #{vision_transformer_forward.18} parent=11 // pred_check_branch
        %357 = sbr.rel (%p355) target = $region16
      $region15: #{vision_transformer_forward.18} parent=11 // pred_region
        _
      $region16: #{vision_transformer_forward.18} parent=11 // pred_fallthru
        _
      // Predicated region
      $region17: #{vision_transformer_forward.18} parent=11 // pred_check
        %p358 = pneg %p236
      $region18: #{vision_transformer_forward.18} parent=11 // pred_check_branch
        %360 = sbr.rel (%p358) target = $region20
      $region19: #{vision_transformer_forward.18} parent=11 // pred_region
        _
      $region20: #{vision_transformer_forward.18} parent=11 // pred_fallthru
        _
    $region12: #{vision_transformer_forward.18} parent=5 // pred_fallthru
      _
    %p361 = scmp.lt.s32.totalorder %s18, 8
    // Predicated region
    $region21: #{vision_transformer_forward.18} parent=5 // pred_check
      %p362 = pneg %p361
    $region22: #{vision_transformer_forward.18} parent=5 // pred_check_branch
      %364 = sbr.rel (%p362) target = $region24
    $region23: #{vision_transformer_forward.18} parent=5 // pred_region
      // Predicated region
      $region25: #{vision_transformer_forward.18} parent=23 // pred_check
        %p365 = pneg %p52
      $region26: #{vision_transformer_forward.18} parent=23 // pred_check_branch
        %367 = sbr.rel (%p365) target = $region28
      $region27: #{vision_transformer_forward.18} parent=23 // pred_region
        %p368 = scmp.lt.s32.totalorder %s25, 1
        %s369 = scalar_select %p368, %s25, 1
        %p370 = scmp.lt.s32.totalorder %s26, 3
        %s371 = scalar_select %p370, %s26, 3
        %s372 = smul.addr %s371, 2
        %s373 = smul.addr %s369, 8
        %s374 = sadd.s32 %s372, %s373
        %s375 = smul.addr %s374, 4
        %s376 = scalar_lea.vmem %s0, %s375
      $region28: #{vision_transformer_forward.18} parent=23 // pred_fallthru
        _
      // Predicated region
      $region29: #{vision_transformer_forward.18} parent=23 // pred_check
        %p377 = pneg %p80
      $region30: #{vision_transformer_forward.18} parent=23 // pred_check_branch
        %379 = sbr.rel (%p377) target = $region32
      $region31: #{vision_transformer_forward.18} parent=23 // pred_region
        %p380 = scmp.lt.s32.totalorder %s25, 1
        %s381 = scalar_select %p380, %s25, 1
        %p382 = scmp.lt.s32.totalorder %s26, 3
        %s383 = scalar_select %p382, %s26, 3
        %s384 = smul.addr %s383, 4
        %s385 = smul.addr %s381, 16
        %s386 = sadd.s32 %s384, %s385
        %s387 = smul.addr %s386, 4
        %s388 = scalar_lea.vmem %s1, %s387
      $region32: #{vision_transformer_forward.18} parent=23 // pred_fallthru
        _
      // Predicated region
      $region33: #{vision_transformer_forward.18} parent=23 // pred_check
        %p389 = pneg %p108
      $region34: #{vision_transformer_forward.18} parent=23 // pred_check_branch
        %391 = sbr.rel (%p389) target = $region36
      $region35: #{vision_transformer_forward.18} parent=23 // pred_region
        %p392 = scmp.lt.s32.totalorder %s25, 1
        %s393 = scalar_select %p392, %s25, 1
        %p394 = scmp.lt.s32.totalorder %s26, 3
        %s395 = scalar_select %p394, %s26, 3
        %s396 = smul.addr %s393, 4
        %s397 = sadd.s32 %s395, %s396
        %s398 = smul.addr %s397, 4
        %s399 = scalar_lea.vmem %s2, %s398
      $region36: #{vision_transformer_forward.18} parent=23 // pred_fallthru
        _
      // Predicated region
      $region37: #{vision_transformer_forward.18} parent=23 // pred_check
        %p400 = pneg %p136
      $region38: #{vision_transformer_forward.18} parent=23 // pred_check_branch
        %402 = sbr.rel (%p400) target = $region40
      $region39: #{vision_transformer_forward.18} parent=23 // pred_region
        %p403 = scmp.lt.s32.totalorder %s25, 1
        %s404 = scalar_select %p403, %s25, 1
        %p405 = scmp.lt.s32.totalorder %s26, 3
        %s406 = scalar_select %p405, %s26, 3
        %s407 = smul.addr %s406, 4
        %s408 = smul.addr %s404, 16
        %s409 = sadd.s32 %s407, %s408
        %s410 = smul.addr %s409, 4
        %s411 = scalar_lea.vmem %s3, %s410
      $region40: #{vision_transformer_forward.18} parent=23 // pred_fallthru
        _
      // Predicated region
      $region41: #{vision_transformer_forward.18} parent=23 // pred_check
        %p412 = pneg %p162
      $region42: #{vision_transformer_forward.18} parent=23 // pred_check_branch
        %414 = sbr.rel (%p412) target = $region44
      $region43: #{vision_transformer_forward.18} parent=23 // pred_region
        %p415 = scmp.lt.s32.totalorder %s25, 1
        %s416 = scalar_select %p415, %s25, 1
        %s417 = smul.addr %s416, 2
        %s418 = smul.addr %s417, 8
        %s419 = scalar_lea.vmem %s4, %s418
      $region44: #{vision_transformer_forward.18} parent=23 // pred_fallthru
        _
      // Predicated region
      $region45: #{vision_transformer_forward.18} parent=23 // pred_check
        %p420 = pneg %p209
      $region46: #{vision_transformer_forward.18} parent=23 // pred_check_branch
        %422 = sbr.rel (%p420) target = $region48
      $region47: #{vision_transformer_forward.18} parent=23 // pred_region
        %p423 = scmp.lt.s32.totalorder %s26, 3
        %s424 = scalar_select %p423, %s26, 3
        %s425 = smul.addr %s424, 4
        %s426 = scalar_lea.vmem %s6, %s425
      $region48: #{vision_transformer_forward.18} parent=23 // pred_fallthru
        _
      // Predicated region
      $region49: #{vision_transformer_forward.18} parent=23 // pred_check
        %p427 = pneg %p256
      $region50: #{vision_transformer_forward.18} parent=23 // pred_check_branch
        %429 = sbr.rel (%p427) target = $region52
      $region51: #{vision_transformer_forward.18} parent=23 // pred_region
        %p430 = scmp.lt.s32.totalorder %s25, 1
        %s431 = scalar_select %p430, %s25, 1
        %s432 = smul.addr %s431, 2
        %s433 = smul.addr %s432, 4
        %s434 = scalar_lea.vmem %s8, %s433
      $region52: #{vision_transformer_forward.18} parent=23 // pred_fallthru
        _
      // Predicated region
      $region53: #{vision_transformer_forward.18} parent=23 // pred_check
        %p435 = pneg %p282
      $region54: #{vision_transformer_forward.18} parent=23 // pred_check_branch
        %437 = sbr.rel (%p435) target = $region56
      $region55: #{vision_transformer_forward.18} parent=23 // pred_region
        %p438 = scmp.lt.s32.totalorder %s25, 1
        %s439 = scalar_select %p438, %s25, 1
        %s440 = smul.addr %s439, 4
        %s441 = smul.addr %s440, 4
        %s442 = scalar_lea.vmem %s9, %s441
      $region56: #{vision_transformer_forward.18} parent=23 // pred_fallthru
        _
    $region24: #{vision_transformer_forward.18} parent=5 // pred_fallthru
      _
    %p443 = scmp.le.s32.totalorder 1, %s18
    %p444 = scmp.lt.s32.totalorder %s18, 9
    %p445 = pnand %p443, %p444
    %p446 = pneg %p445
    // Predicated region
    $region57: #{vision_transformer_forward.18} parent=5 // pred_check
      _
    $region58: #{vision_transformer_forward.18} parent=5 // pred_check_branch
      %448 = sbr.rel (%p445) target = $region60
    $region59: #{vision_transformer_forward.18} parent=5 // pred_region
      %s449 = ssub.s32 %s18, 1
      %p450 = scmp.lt.s32.totalorder %s27, 1
      %s451 = scalar_select %p450, %s27, 1
      %p452 = scmp.lt.s32.totalorder %s28, 3
      %s453 = scalar_select %p452, %s28, 3
      %s454 = smul.addr %s453, 2
      %s455 = smul.addr %s451, 8
      %s456 = sadd.s32 %s454, %s455
      %s457 = smul.addr %s456, 4
      %s458 = scalar_lea.vmem %s0, %s457
      %p459 = pneg %p58
      %p460 = pneg %p55
      %p461 = scmp.lt.s32.totalorder %s27, 1
      %s462 = scalar_select %p461, %s27, 1
      %p463 = scmp.lt.s32.totalorder %s28, 3
      %s464 = scalar_select %p463, %s28, 3
      %s465 = smul.addr %s464, 4
      %s466 = smul.addr %s462, 16
      %s467 = sadd.s32 %s465, %s466
      %s468 = smul.addr %s467, 4
      %s469 = scalar_lea.vmem %s1, %s468
      %p470 = pneg %p86
      %p471 = pneg %p83
      %p472 = scmp.lt.s32.totalorder %s27, 1
      %s473 = scalar_select %p472, %s27, 1
      %p474 = scmp.lt.s32.totalorder %s28, 3
      %s475 = scalar_select %p474, %s28, 3
      %s476 = smul.addr %s473, 4
      %s477 = sadd.s32 %s475, %s476
      %s478 = smul.addr %s477, 4
      %s479 = scalar_lea.vmem %s2, %s478
      %p480 = pneg %p114
      %p481 = pneg %p111
      %p482 = scmp.lt.s32.totalorder %s27, 1
      %s483 = scalar_select %p482, %s27, 1
      %p484 = scmp.lt.s32.totalorder %s28, 3
      %s485 = scalar_select %p484, %s28, 3
      %s486 = smul.addr %s485, 4
      %s487 = smul.addr %s483, 16
      %s488 = sadd.s32 %s486, %s487
      %s489 = smul.addr %s488, 4
      %s490 = scalar_lea.vmem %s3, %s489
      %p491 = pneg %p142
      %p492 = pneg %p139
      %p493 = scmp.lt.s32.totalorder %s27, 1
      %s494 = scalar_select %p493, %s27, 1
      %s495 = smul.addr %s494, 2
      %s496 = smul.addr %s495, 8
      %s497 = scalar_lea.vmem %s4, %s496
      %p498 = pneg %p168
      %p499 = pneg %p165
      %p500 = pneg %p189
      %p501 = pneg %p186
      %p502 = scmp.lt.s32.totalorder %s28, 3
      %s503 = scalar_select %p502, %s28, 3
      %s504 = smul.addr %s503, 4
      %s505 = scalar_lea.vmem %s6, %s504
      %p506 = pneg %p215
      %p507 = pneg %p212
      %p508 = pneg %p236
      %p509 = pneg %p233
      %p510 = scmp.lt.s32.totalorder %s27, 1
      %s511 = scalar_select %p510, %s27, 1
      %s512 = smul.addr %s511, 2
      %s513 = smul.addr %s512, 4
      %s514 = scalar_lea.vmem %s8, %s513
      %p515 = pneg %p262
      %p516 = pneg %p259
      %p517 = scmp.lt.s32.totalorder %s27, 1
      %s518 = scalar_select %p517, %s27, 1
      %s519 = smul.addr %s518, 4
      %s520 = smul.addr %s519, 4
      %s521 = scalar_lea.vmem %s9, %s520
      %p522 = pneg %p288
      %p523 = pneg %p285
      %p524 = pneg %p314
      %p525 = pneg %p311
      %p526 = scmp.lt.s32.totalorder %s27, 1
      %s527 = scalar_select %p526, %s27, 1
      %s528 = smul.addr %s527, 2
      %s529 = smul.addr %s528, 4
      %s530 = scalar_lea.vmem %s10, %s529
      %p531 = pneg %p340
      %p532 = pneg %p337
      %p533 = scmp.lt.s32.totalorder %s27, 1
      %s534 = scalar_select %p533, %s27, 1
      %s535 = smul.addr %s534, 4
      %s536 = smul.addr %s535, 4
      %s537 = scalar_lea.vmem %s11, %s536
      %p538 = scmp.lt.s32.totalorder %s27, 1
      %s539 = scalar_select %p538, %s27, 1
      %p540 = scmp.lt.s32.totalorder %s28, 3
      %s541 = scalar_select %p540, %s28, 3
      %s542 = smul.addr %s541, 2
      %s543 = smul.addr %s539, 8
      %s544 = sadd.s32 %s542, %s543
      %s545 = smul.addr %s544, 4
      %s546 = scalar_lea.vmem %s0, %s545
      %p547 = scmp.lt.s32.totalorder %s27, 1
      %s548 = scalar_select %p547, %s27, 1
      %p549 = scmp.lt.s32.totalorder %s28, 3
      %s550 = scalar_select %p549, %s28, 3
      %s551 = smul.addr %s550, 4
      %s552 = smul.addr %s548, 16
      %s553 = sadd.s32 %s551, %s552
      %s554 = smul.addr %s553, 4
      %s555 = scalar_lea.vmem %s1, %s554
      %p556 = scmp.lt.s32.totalorder %s27, 1
      %s557 = scalar_select %p556, %s27, 1
      %p558 = scmp.lt.s32.totalorder %s28, 3
      %s559 = scalar_select %p558, %s28, 3
      %s560 = smul.addr %s557, 4
      %s561 = sadd.s32 %s559, %s560
      %s562 = smul.addr %s561, 4
      %s563 = scalar_lea.vmem %s2, %s562
      %p564 = scmp.lt.s32.totalorder %s27, 1
      %s565 = scalar_select %p564, %s27, 1
      %p566 = scmp.lt.s32.totalorder %s28, 3
      %s567 = scalar_select %p566, %s28, 3
      %s568 = smul.addr %s567, 4
      %s569 = smul.addr %s565, 16
      %s570 = sadd.s32 %s568, %s569
      %s571 = smul.addr %s570, 4
      %s572 = scalar_lea.vmem %s3, %s571
      %p573 = scmp.lt.s32.totalorder %s27, 1
      %s574 = scalar_select %p573, %s27, 1
      %s575 = smul.addr %s574, 2
      %s576 = smul.addr %s575, 8
      %s577 = scalar_lea.vmem %s4, %s576
      %p578 = scmp.lt.s32.totalorder %s28, 3
      %s579 = scalar_select %p578, %s28, 3
      %s580 = smul.addr %s579, 4
      %s581 = scalar_lea.vmem %s6, %s580
      %p582 = scmp.lt.s32.totalorder %s27, 1
      %s583 = scalar_select %p582, %s27, 1
      %s584 = smul.addr %s583, 2
      %s585 = smul.addr %s584, 4
      %s586 = scalar_lea.vmem %s8, %s585
      %p587 = scmp.lt.s32.totalorder %s27, 1
      %s588 = scalar_select %p587, %s27, 1
      %s589 = smul.addr %s588, 4
      %s590 = smul.addr %s589, 4
      %s591 = scalar_lea.vmem %s9, %s590
      %p592 = scmp.lt.s32.totalorder %s27, 1
      %s593 = scalar_select %p592, %s27, 1
      %s594 = smul.addr %s593, 2
      %s595 = smul.addr %s594, 4
      %s596 = scalar_lea.vmem %s10, %s595
      %p597 = scmp.lt.s32.totalorder %s27, 1
      %s598 = scalar_select %p597, %s27, 1
      %s599 = smul.addr %s598, 4
      %s600 = smul.addr %s599, 4
      %s601 = scalar_lea.vmem %s11, %s600
      %p603 = scmp.eq.s32.totalorder %s28, 0
      // Predicated region
      $region61: #{vision_transformer_forward.18} parent=59 // pred_check
        %p604 = pneg %p603
      $region62: #{vision_transformer_forward.18} parent=59 // pred_check_branch
        %606 = sbr.rel (%p604) target = $region64
      $region63: #{vision_transformer_forward.18} parent=59 // pred_region
        %vm607 = vcmask 261120
        %608 = vst.msk [vmem:[#allocation2] sm:$0xff] %vm607, 0.0
        %609 = vst.msk [vmem:[#allocation2 + $0x8] sm:$0xff] %vm607, 0.0
        %610 = vst.msk [vmem:[#allocation3] sm:$0xff] %vm607, 0.0
        %611 = vst.msk [vmem:[#allocation3 + $0x8] sm:$0xff] %vm607, 0.0
        %612 = vst.msk [vmem:[#allocation3 + $0x10] sm:$0xff] %vm607, 0.0
        %613 = vst.msk [vmem:[#allocation3 + $0x18] sm:$0xff] %vm607, 0.0
      $region64: #{vision_transformer_forward.18} parent=59 // pred_fallthru
        _
      %v614 = vld [vmem:[%s563] sm:$0xf]
      %v615 = vld [vmem:[%s572] sm:$0xf]
      %v616 = vld [vmem:[%s572 + $0x4] sm:$0xf]
      %v617 = vld [vmem:[%s572 + $0x8] sm:$0xf]
      %v618 = vld [vmem:[%s572 + $0xc] sm:$0xf]
      %v619 = vld [vmem:[%s581] sm:$0xf]
      %v620 = vld [vmem:[%s546] sm:$0xf]
      %v621 = vld [vmem:[%s546 + $0x4] sm:$0xf]
      %v622 = vld [vmem:[%s577] sm:$0xff]
      %v623 = vld [vmem:[%s577 + $0x8] sm:$0xff]
      %v626 = vunpack.c.l.b16 %v620
      %v627 = vunpack.c.l.b16 %v621
      %v628 = vpack.c.b16 %v627, %v626
      %vm629 = vcmask 64512
      %v631 = vsel %vm629, %v628, 0
      %vm633 = vcmask 1043456
      %v635 = vsel %vm633, %v614, 0
      %637 = vmatpush.bf16.msra.mxu0 0
      %638 = vmatpush.bf16.msra.mxu0 0
      %639 = vmatpush.bf16.msra.mxu0 0
      %640 = vmatpush.bf16.msra.mxu0 0
      %641 = vmatpush.bf16.msra.mxu0 0
      %642 = vmatpush.bf16.msra.mxu0 0
      %643 = vmatpush.bf16.msra.mxu0 0
      %644 = vmatpush.bf16.msra.mxu0 %v635
      %645 = vmatmul.bf16.gmra.mxu0 %v631
      %v646 = vpop.f32.mrf.mxu0
      %v647 = vadd.f32 0.0, %v646
      %v648 = vpop.f32.mrf.mxu0
      %v649 = vadd.f32 0.0, %v648
      %650 = vdwg.mxu0
      %v651 = vmul.f32 %v647, 0.35355338
      %v652 = vmul.f32 %v649, 0.35355338
      %v653 = vadd.f32 %v651, %v622
      %v654 = vadd.f32 %v652, %v623
      %vm655 = vcmask 261120
      %v656 = vsel %vm655, %v653, -inf
      %657 = vmax.xlane.f32.xlu0 %v656
      %v658 = vpop.xlane.xlu0 %657
      %v659 = vsel %vm655, %v654, -inf
      %660 = vmax.xlane.f32.xlu0 %v659
      %v661 = vpop.xlane.xlu0 %660
      %v662 = vsub.f32 %v653, %v658
      %v663 = vsub.f32 %v654, %v661
      %v664 = vmul.f32 %v662, 1.442695
      %v665 = vpow.pop %v664
      %v666 = vmul.f32 %v663, 1.442695
      %v667 = vpow.pop %v666
      %v668 = vsel %vm655, %v665, 0.0
      %669 = vadd.xlane.f32.xlu0 %v668
      %v670 = vpop.xlane.xlu0 %669
      %v671 = vsel %vm655, %v667, 0.0
      %672 = vadd.xlane.f32.xlu0 %v671
      %v673 = vpop.xlane.xlu0 %672
      %v674 = vrcp.pop %v670
      %v675 = vrcp.pop %v673
      %v676 = vmul.f32 %v665, %v674
      %v677 = vmul.f32 %v667, %v675
      %v678 = vpack.c.bf16 %v677, %v676
      %v683 = vunpack.c.l.b16 %v615
      %v684 = vunpack.c.l.b16 %v616
      %v685 = vunpack.c.l.b16 %v617
      %v686 = vunpack.c.l.b16 %v618
      %v687 = vpack.c.b16 %v684, %v683
      %v688 = vpack.c.b16 %v686, %v685
      %v692 = vsel %vm655, %v678, 0
      %694 = vmatpush.bf16.msra.mxu0 0
      %695 = vmatpush.bf16.msra.mxu0 0
      %696 = vmatpush.bf16.msra.mxu0 0
      %697 = vmatpush.bf16.msra.mxu0 0
      %698 = vmatpush.bf16.msra.mxu0 0
      %699 = vmatpush.bf16.msra.mxu0 0
      %700 = vmatpush.bf16.msra.mxu0 %v688
      %701 = vmatpush.bf16.msra.mxu0 %v687
      %702 = vmatmul.bf16.gmra.mxu0 %v692
      %v703 = vpop.f32.mrf.mxu0
      %v704 = vadd.f32 0.0, %v703
      %v705 = vpop.f32.mrf.mxu0
      %v706 = vadd.f32 0.0, %v705
      %707 = vdwg.mxu0
      %v708 = vld [vmem:[%s555] sm:$0xf]
      %v709 = vld [vmem:[%s555 + $0x4] sm:$0xf]
      %v710 = vld [vmem:[%s555 + $0x8] sm:$0xf]
      %v711 = vld [vmem:[%s555 + $0xc] sm:$0xf]
      %v712 = vld [vmem:[%s5] sm:$0x1]
      %v717 = vunpack.c.l.b16 %v708
      %v718 = vunpack.c.l.b16 %v709
      %v719 = vunpack.c.l.b16 %v710
      %v720 = vunpack.c.l.b16 %v711
      %v721 = vpack.c.b16 %v718, %v717
      %v722 = vpack.c.b16 %v720, %v719
      %v724 = vsel %vm629, %v721, 0
      %v727 = vsel %vm629, %v722, 0
      %729 = vmatpush.bf16.msra.mxu0 0
      %730 = vmatpush.bf16.msra.mxu0 0
      %731 = vmatpush.bf16.msra.mxu0 0
      %732 = vmatpush.bf16.msra.mxu0 0
      %733 = vmatpush.bf16.msra.mxu0 0
      %734 = vmatpush.bf16.msra.mxu0 0
      %735 = vmatpush.bf16.msra.mxu0 0
      %736 = vmatpush.bf16.msra.mxu0 %v635
      %737 = vmatmul.bf16.gmra.mxu0 %v724
      %v738 = vpop.f32.mrf.mxu0
      %v739 = vadd.f32 0.0, %v738
      %v740 = vpop.f32.mrf.mxu0
      %v741 = vadd.f32 0.0, %v740
      %742 = vmatmul.bf16.gmra.mxu0 %v727
      %v743 = vpop.f32.mrf.mxu0
      %v744 = vadd.f32 0.0, %v743
      %v745 = vpop.f32.mrf.mxu0
      %v746 = vadd.f32 0.0, %v745
      %747 = vdwg.mxu0
      %v748 = vmul.f32 %v739, 0.35355338
      %v749 = vmul.f32 %v741, 0.35355338
      %v750 = vmul.f32 %v744, 0.35355338
      %v751 = vmul.f32 %v746, 0.35355338
      %v753 = vperm.slane %v712, 0
      %v755 = vadd.f32 %v748, %v753
      %v756 = vadd.f32 %v749, %v753
      %v757 = vadd.f32 %v750, %v753
      %v758 = vadd.f32 %v751, %v753
      %v759 = vsel %vm655, %v755, -inf
      %760 = vmax.xlane.f32.xlu0 %v759
      %v761 = vpop.xlane.xlu0 %760
      %v762 = vsel %vm655, %v756, -inf
      %763 = vmax.xlane.f32.xlu0 %v762
      %v764 = vpop.xlane.xlu0 %763
      %v765 = vsel %vm655, %v757, -inf
      %766 = vmax.xlane.f32.xlu0 %v765
      %v767 = vpop.xlane.xlu0 %766
      %v768 = vsel %vm655, %v758, -inf
      %769 = vmax.xlane.f32.xlu0 %v768
      %v770 = vpop.xlane.xlu0 %769
      %v771 = vsub.f32 %v755, %v761
      %v772 = vsub.f32 %v756, %v764
      %v773 = vsub.f32 %v757, %v767
      %v774 = vsub.f32 %v758, %v770
      %v775 = vmul.f32 %v771, 1.442695
      %v776 = vpow.pop %v775
      %v777 = vmul.f32 %v772, 1.442695
      %v778 = vpow.pop %v777
      %v779 = vmul.f32 %v773, 1.442695
      %v780 = vpow.pop %v779
      %v781 = vmul.f32 %v774, 1.442695
      %v782 = vpow.pop %v781
      %v783 = vsel %vm655, %v776, 0.0
      %784 = vadd.xlane.f32.xlu0 %v783
      %v785 = vpop.xlane.xlu0 %784
      %v786 = vsel %vm655, %v778, 0.0
      %787 = vadd.xlane.f32.xlu0 %v786
      %v788 = vpop.xlane.xlu0 %787
      %v789 = vsel %vm655, %v780, 0.0
      %790 = vadd.xlane.f32.xlu0 %v789
      %v791 = vpop.xlane.xlu0 %790
      %v792 = vsel %vm655, %v782, 0.0
      %793 = vadd.xlane.f32.xlu0 %v792
      %v794 = vpop.xlane.xlu0 %793
      %v795 = vrcp.pop %v785
      %v796 = vrcp.pop %v788
      %v797 = vrcp.pop %v791
      %v798 = vrcp.pop %v794
      %v799 = vmul.f32 %v776, %v795
      %v800 = vmul.f32 %v778, %v796
      %v801 = vmul.f32 %v780, %v797
      %v802 = vmul.f32 %v782, %v798
      %v803 = vpack.c.bf16 %v800, %v799
      %v804 = vpack.c.bf16 %v802, %v801
      %v806 = vsel %vm655, %v803, 0
      %v809 = vsel %vm655, %v804, 0
      %811 = vmatpush.bf16.msra.mxu0 0
      %812 = vmatpush.bf16.msra.mxu0 0
      %813 = vmatpush.bf16.msra.mxu0 0
      %814 = vmatpush.bf16.msra.mxu0 0
      %815 = vmatpush.bf16.msra.mxu0 0
      %816 = vmatpush.bf16.msra.mxu0 0
      %817 = vmatpush.bf16.msra.mxu0 %v688
      %818 = vmatpush.bf16.msra.mxu0 %v687
      %819 = vmatmul.bf16.gmra.mxu0 %v806
      %v820 = vpop.f32.mrf.mxu0
      %v821 = vadd.f32 0.0, %v820
      %v822 = vpop.f32.mrf.mxu0
      %v823 = vadd.f32 0.0, %v822
      %824 = vmatmul.bf16.gmra.mxu0 %v809
      %v825 = vpop.f32.mrf.mxu0
      %v826 = vadd.f32 0.0, %v825
      %v827 = vpop.f32.mrf.mxu0
      %v828 = vadd.f32 0.0, %v827
      %829 = vdwg.mxu0
      %v830 = vld [vmem:[#allocation2] sm:$0xff]
      %v831 = vld [vmem:[#allocation2 + $0x8] sm:$0xff]
      %v832 = vpack.c.bf16 %v706, %v704
      %v834 = vsel %vm629, %v832, 0
      %v837 = vsel %vm633, %v619, 0
      %839 = vmatpush.bf16.msra.mxu0 0
      %840 = vmatpush.bf16.msra.mxu0 0
      %841 = vmatpush.bf16.msra.mxu0 0
      %842 = vmatpush.bf16.msra.mxu0 0
      %843 = vmatpush.bf16.msra.mxu0 0
      %844 = vmatpush.bf16.msra.mxu0 0
      %845 = vmatpush.bf16.msra.mxu0 0
      %846 = vmatpush.bf16.msra.mxu0 %v837
      %847 = vmatmul.bf16.gmra.mxu0 %v834
      %v848 = vpop.f32.mrf.mxu0
      %v849 = vadd.f32 0.0, %v848
      %v850 = vpop.f32.mrf.mxu0
      %v851 = vadd.f32 0.0, %v850
      %852 = vdwg.mxu0
      %v853 = vadd.f32 %v830, %v849
      %v854 = vadd.f32 %v831, %v851
      %855 = vst.msk [vmem:[#allocation2] sm:$0xff] %vm655, %v853
      %856 = vst.msk [vmem:[#allocation2 + $0x8] sm:$0xff] %vm655, %v854
      %v857 = vld [vmem:[#allocation3] sm:$0xff]
      %v858 = vld [vmem:[#allocation3 + $0x8] sm:$0xff]
      %v859 = vld [vmem:[#allocation3 + $0x10] sm:$0xff]
      %v860 = vld [vmem:[#allocation3 + $0x18] sm:$0xff]
      %v861 = vpack.c.bf16 %v823, %v821
      %v862 = vpack.c.bf16 %v828, %v826
      %v864 = vsel %vm629, %v861, 0
      %v867 = vsel %vm629, %v862, 0
      %869 = vmatpush.bf16.msra.mxu0 0
      %870 = vmatpush.bf16.msra.mxu0 0
      %871 = vmatpush.bf16.msra.mxu0 0
      %872 = vmatpush.bf16.msra.mxu0 0
      %873 = vmatpush.bf16.msra.mxu0 0
      %874 = vmatpush.bf16.msra.mxu0 0
      %875 = vmatpush.bf16.msra.mxu0 0
      %876 = vmatpush.bf16.msra.mxu0 %v837
      %877 = vmatmul.bf16.gmra.mxu0 %v864
      %v878 = vpop.f32.mrf.mxu0
      %v879 = vadd.f32 0.0, %v878
      %v880 = vpop.f32.mrf.mxu0
      %v881 = vadd.f32 0.0, %v880
      %882 = vmatmul.bf16.gmra.mxu0 %v867
      %v883 = vpop.f32.mrf.mxu0
      %v884 = vadd.f32 0.0, %v883
      %v885 = vpop.f32.mrf.mxu0
      %v886 = vadd.f32 0.0, %v885
      %887 = vdwg.mxu0
      %v888 = vadd.f32 %v857, %v879
      %v889 = vadd.f32 %v858, %v881
      %v890 = vadd.f32 %v859, %v884
      %v891 = vadd.f32 %v860, %v886
      %892 = vst.msk [vmem:[#allocation3] sm:$0xff] %vm655, %v888
      %893 = vst.msk [vmem:[#allocation3 + $0x8] sm:$0xff] %vm655, %v889
      %894 = vst.msk [vmem:[#allocation3 + $0x10] sm:$0xff] %vm655, %v890
      %895 = vst.msk [vmem:[#allocation3 + $0x18] sm:$0xff] %vm655, %v891
      %p896 = scmp.eq.s32.totalorder %s28, 3
      // Predicated region
      $region65: #{vision_transformer_forward.18} parent=59 // pred_check
        %p897 = pneg %p896
      $region66: #{vision_transformer_forward.18} parent=59 // pred_check_branch
        %899 = sbr.rel (%p897) target = $region68
      $region67: #{vision_transformer_forward.18} parent=59 // pred_region
        %v900 = vld [vmem:[%s7] sm:$0x1]
        %v901 = vld [vmem:[%s586] sm:$0xf]
        %v902 = vld [vmem:[%s586 + $0x4] sm:$0xf]
        %v903 = vunpack.c.l.bf16 %v901
        %v904 = vunpack.c.l.bf16 %v902
        %v905 = vld [vmem:[#allocation2] sm:$0xff]
        %v906 = vld [vmem:[#allocation2 + $0x8] sm:$0xff]
        %v907 = vadd.f32 %v903, %v905
        %v908 = vadd.f32 %v904, %v906
        %v910 = vperm.slane %v900, 0
        %v912 = vadd.f32 %v907, %v910
        %v913 = vadd.f32 %v908, %v910
        %v914 = vpack.c.bf16 %v912, %v912
        %v915 = vpack.c.bf16 %v913, %v913
        %vm916 = vcmask 257024
        %917 = vst.msk [vmem:[%s596] sm:$0xf] %vm916, %v914
        %918 = vst.msk [vmem:[%s596 + $0x4] sm:$0xf] %vm916, %v915
        %v919 = vld [vmem:[%s591] sm:$0xf]
        %v920 = vld [vmem:[%s591 + $0x4] sm:$0xf]
        %v921 = vld [vmem:[%s591 + $0x8] sm:$0xf]
        %v922 = vld [vmem:[%s591 + $0xc] sm:$0xf]
        %v923 = vunpack.c.l.bf16 %v919
        %v924 = vunpack.c.l.bf16 %v920
        %v925 = vunpack.c.l.bf16 %v921
        %v926 = vunpack.c.l.bf16 %v922
        %v927 = vld [vmem:[#allocation3] sm:$0xff]
        %v928 = vld [vmem:[#allocation3 + $0x8] sm:$0xff]
        %v929 = vld [vmem:[#allocation3 + $0x10] sm:$0xff]
        %v930 = vld [vmem:[#allocation3 + $0x18] sm:$0xff]
        %v931 = vadd.f32 %v923, %v927
        %v932 = vadd.f32 %v924, %v928
        %v933 = vadd.f32 %v925, %v929
        %v934 = vadd.f32 %v926, %v930
        %v935 = vadd.f32 %v931, %v910
        %v936 = vadd.f32 %v932, %v910
        %v937 = vadd.f32 %v933, %v910
        %v938 = vadd.f32 %v934, %v910
        %v939 = vpack.c.bf16 %v935, %v935
        %v940 = vpack.c.bf16 %v936, %v936
        %v941 = vpack.c.bf16 %v937, %v937
        %v942 = vpack.c.bf16 %v938, %v938
        %943 = vst.msk [vmem:[%s601] sm:$0xf] %vm916, %v939
        %944 = vst.msk [vmem:[%s601 + $0x4] sm:$0xf] %vm916, %v940
        %945 = vst.msk [vmem:[%s601 + $0x8] sm:$0xf] %vm916, %v941
        %946 = vst.msk [vmem:[%s601 + $0xc] sm:$0xf] %vm916, %v942
      $region68: #{vision_transformer_forward.18} parent=59 // pred_fallthru
        _
      %p947 = scmp.lt.s32.totalorder %s27, 1
      %s948 = scalar_select %p947, %s27, 1
      %s949 = smul.addr %s948, 2
      %s950 = smul.addr %s949, 4
      %s951 = scalar_lea.vmem %s10, %s950
      %p952 = scmp.lt.s32.totalorder %s27, 1
      %s953 = scalar_select %p952, %s27, 1
      %s954 = smul.addr %s953, 4
      %s955 = smul.addr %s954, 4
      %s956 = scalar_lea.vmem %s11, %s955
      // Predicated region
      $region69: #{vision_transformer_forward.18} parent=59 // pred_check
        %p957 = pneg %p311
      $region70: #{vision_transformer_forward.18} parent=59 // pred_check_branch
        %959 = sbr.rel (%p957) target = $region72
      $region71: #{vision_transformer_forward.18} parent=59 // pred_region
        _
      $region72: #{vision_transformer_forward.18} parent=59 // pred_fallthru
        _
      // Predicated region
      $region73: #{vision_transformer_forward.18} parent=59 // pred_check
        %p960 = pneg %p337
      $region74: #{vision_transformer_forward.18} parent=59 // pred_check_branch
        %962 = sbr.rel (%p960) target = $region76
      $region75: #{vision_transformer_forward.18} parent=59 // pred_region
        _
      $region76: #{vision_transformer_forward.18} parent=59 // pred_fallthru
        _
    $region60: #{vision_transformer_forward.18} parent=5 // pred_fallthru
      _
    %p963 = scmp.le.s32.totalorder 2, %s18
    // Predicated region
    $region77: #{vision_transformer_forward.18} parent=5 // pred_check
      %p964 = pneg %p963
    $region78: #{vision_transformer_forward.18} parent=5 // pred_check_branch
      %966 = sbr.rel (%p964) target = $region80
    $region79: #{vision_transformer_forward.18} parent=5 // pred_region
      %s967 = ssub.s32 %s18, 2
      // Predicated region
      $region81: #{vision_transformer_forward.18} parent=79 // pred_check
        %p968 = pneg %p317
      $region82: #{vision_transformer_forward.18} parent=79 // pred_check_branch
        %970 = sbr.rel (%p968) target = $region84
      $region83: #{vision_transformer_forward.18} parent=79 // pred_region
        %p971 = scmp.lt.s32.totalorder %s29, 1
        %s972 = scalar_select %p971, %s29, 1
        %s973 = smul.addr %s972, 2
        %s974 = smul.addr %s973, 4
        %s975 = scalar_lea.vmem %s10, %s974
      $region84: #{vision_transformer_forward.18} parent=79 // pred_fallthru
        _
      // Predicated region
      $region85: #{vision_transformer_forward.18} parent=79 // pred_check
        %p976 = pneg %p343
      $region86: #{vision_transformer_forward.18} parent=79 // pred_check_branch
        %978 = sbr.rel (%p976) target = $region88
      $region87: #{vision_transformer_forward.18} parent=79 // pred_region
        %p979 = scmp.lt.s32.totalorder %s29, 1
        %s980 = scalar_select %p979, %s29, 1
        %s981 = smul.addr %s980, 4
        %s982 = smul.addr %s981, 4
        %s983 = scalar_lea.vmem %s11, %s982
      $region88: #{vision_transformer_forward.18} parent=79 // pred_fallthru
        _
    $region80: #{vision_transformer_forward.18} parent=5 // pred_fallthru
      _
  $region6: #{vision_transformer_forward.18} parent=0 // loop_footer
    %s22 = sadd.s32 1, %s18
  $region7: #{vision_transformer_forward.18} parent=0 // loop_footer_branch
    %17 = sbr.rel target = $region3
  $region8: #{vision_transformer_forward.18} parent=0 // loop_exit
    _

// kernel: vision_transformer_forward.20
$region0: #{vision_transformer_forward.20}
  #allocation0 [shape = 'u32[]', space=smem, size = 0x4, offset = 0x4, fixed_abs, tag = 'smem constant byte address 0x4 - core index']
  #allocation1 [shape = 'u32[72,128]{1,0:T(1,128)}', space=vmem, size = 0x9000, scoped, tag = 'internal scratch']
  #allocation2 [shape = 'bf16[64,32]{1,0:T(8,128)(2,1)}', space=vmem, size = 0x4000, scoped, tag = 'scratch operand']
  #allocation3 [shape = 'f32[64,32]{1,0:T(8,128)}', space=vmem, size = 0x8000, scoped, tag = 'scratch operand']
  %s0 = inlined_call_operand.vmem [shape: bf16[64,32], index: 0, kind: input, shape index: {}]
  %s1 = inlined_call_operand.vmem [shape: f32[1,32], index: 1, kind: input, shape index: {}]
  %s2 = inlined_call_operand.vmem [shape: f32[1,32], index: 2, kind: input, shape index: {}]
  %s3 = inlined_call_operand.vmem [shape: bf16[32,128], index: 3, kind: input, shape index: {}]
  %s4 = inlined_call_operand.vmem [shape: f32[1,128], index: 4, kind: input, shape index: {}]
  %s5 = inlined_call_operand.vmem [shape: bf16[128,32], index: 5, kind: input, shape index: {}]
  %s6 = inlined_call_operand.vmem [shape: f32[1,32], index: 6, kind: input, shape index: {}]
  %s7 = inlined_call_operand.vmem [shape: bf16[64,32], index: 7, kind: output, shape index: {}]
  %s8 = sld [smem:[#allocation0]]
  $region46: #{vision_transformer_forward.20} parent=0
    _
  %s10 = ssub.s32 1, %s8
  %s11 = scalar_select 0, %s10, %s8
  // Predicated region
  $region2: #{vision_transformer_forward.20} parent=0 // pred_check
    _
  $region3: #{vision_transformer_forward.20} parent=0 // pred_check_branch
    %13 = sbr.rel (0) target = $region5
  $region4: #{vision_transformer_forward.20} parent=0 // pred_region
    _
  $region5: #{vision_transformer_forward.20} parent=0 // pred_fallthru
    _
  // Predicated region
  $region6: #{vision_transformer_forward.20} parent=0 // pred_check
    _
  $region7: #{vision_transformer_forward.20} parent=0 // pred_check_branch
    %15 = sbr.rel (0) target = $region9
  $region8: #{vision_transformer_forward.20} parent=0 // pred_region
    _
  $region9: #{vision_transformer_forward.20} parent=0 // pred_fallthru
    _
  // Predicated region
  $region10: #{vision_transformer_forward.20} parent=0 // pred_check
    _
  $region11: #{vision_transformer_forward.20} parent=0 // pred_check_branch
    %17 = sbr.rel (0) target = $region13
  $region12: #{vision_transformer_forward.20} parent=0 // pred_region
    _
  $region13: #{vision_transformer_forward.20} parent=0 // pred_fallthru
    _
  // Predicated region
  $region14: #{vision_transformer_forward.20} parent=0 // pred_check
    _
  $region15: #{vision_transformer_forward.20} parent=0 // pred_check_branch
    %19 = sbr.rel (0) target = $region17
  $region16: #{vision_transformer_forward.20} parent=0 // pred_region
    _
  $region17: #{vision_transformer_forward.20} parent=0 // pred_fallthru
    _
  // Predicated region
  $region18: #{vision_transformer_forward.20} parent=0 // pred_check
    _
  $region19: #{vision_transformer_forward.20} parent=0 // pred_check_branch
    %21 = sbr.rel (0) target = $region21
  $region20: #{vision_transformer_forward.20} parent=0 // pred_region
    _
  $region21: #{vision_transformer_forward.20} parent=0 // pred_fallthru
    _
  // Predicated region
  $region22: #{vision_transformer_forward.20} parent=0 // pred_check
    _
  $region23: #{vision_transformer_forward.20} parent=0 // pred_check_branch
    %23 = sbr.rel (0) target = $region25
  $region24: #{vision_transformer_forward.20} parent=0 // pred_region
    _
  $region25: #{vision_transformer_forward.20} parent=0 // pred_fallthru
    _
  // Predicated region
  $region26: #{vision_transformer_forward.20} parent=0 // pred_check
    _
  $region27: #{vision_transformer_forward.20} parent=0 // pred_check_branch
    %25 = sbr.rel (0) target = $region29
  $region28: #{vision_transformer_forward.20} parent=0 // pred_region
    _
  $region29: #{vision_transformer_forward.20} parent=0 // pred_fallthru
    _
  %p27 = scmp.eq.s32.totalorder 0, 0
  // Predicated region
  $region30: #{vision_transformer_forward.20} parent=0 // pred_check
    %p28 = pneg %p27
  $region31: #{vision_transformer_forward.20} parent=0 // pred_check_branch
    %30 = sbr.rel (%p28) target = $region33
  $region32: #{vision_transformer_forward.20} parent=0 // pred_region
    %v31 = vld [vmem:[%s0] sm:$0xf]
    %v32 = vld [vmem:[%s0 + $0x4] sm:$0xf]
    %v33 = vld [vmem:[%s0 + $0x8] sm:$0xf]
    %v34 = vld [vmem:[%s0 + $0xc] sm:$0xf]
    %v35 = vld [vmem:[%s0 + $0x10] sm:$0xf]
    %v36 = vld [vmem:[%s0 + $0x14] sm:$0xf]
    %v37 = vld [vmem:[%s0 + $0x18] sm:$0xf]
    %v38 = vld [vmem:[%s0 + $0x1c] sm:$0xf]
    %v39 = vunpack.c.l.bf16 %v31
    %v40 = vunpack.c.l.bf16 %v32
    %v41 = vunpack.c.l.bf16 %v33
    %v42 = vunpack.c.l.bf16 %v34
    %v43 = vunpack.c.l.bf16 %v35
    %v44 = vunpack.c.l.bf16 %v36
    %v45 = vunpack.c.l.bf16 %v37
    %v46 = vunpack.c.l.bf16 %v38
    %vm47 = vcmask 261120
    %v48 = vsel %vm47, %v39, 0.0
    %49 = vadd.xlane.f32.xlu0 %v48
    %v50 = vpop.xlane.xlu0 %49
    %v51 = vsel %vm47, %v40, 0.0
    %52 = vadd.xlane.f32.xlu0 %v51
    %v53 = vpop.xlane.xlu0 %52
    %v54 = vsel %vm47, %v41, 0.0
    %55 = vadd.xlane.f32.xlu0 %v54
    %v56 = vpop.xlane.xlu0 %55
    %v57 = vsel %vm47, %v42, 0.0
    %58 = vadd.xlane.f32.xlu0 %v57
    %v59 = vpop.xlane.xlu0 %58
    %v60 = vsel %vm47, %v43, 0.0
    %61 = vadd.xlane.f32.xlu0 %v60
    %v62 = vpop.xlane.xlu0 %61
    %v63 = vsel %vm47, %v44, 0.0
    %64 = vadd.xlane.f32.xlu0 %v63
    %v65 = vpop.xlane.xlu0 %64
    %v66 = vsel %vm47, %v45, 0.0
    %67 = vadd.xlane.f32.xlu0 %v66
    %v68 = vpop.xlane.xlu0 %67
    %v69 = vsel %vm47, %v46, 0.0
    %70 = vadd.xlane.f32.xlu0 %v69
    %v71 = vpop.xlane.xlu0 %70
    %v72 = vrcp.pop 32.0
    %v73 = vmul.f32 32.0, %v72
    %v74 = vsub.f32 1.0, %v73
    %v75 = vmul.f32 %v72, %v74
    %v76 = vadd.f32 %v72, %v75
    %vm77 = vweird.f32 %v72
    %v78 = vsel %vm77, %v72, %v76
    %v79 = vmul.f32 %v50, %v78
    %v80 = vmul.f32 %v53, %v78
    %v81 = vmul.f32 %v56, %v78
    %v82 = vmul.f32 %v59, %v78
    %v83 = vmul.f32 %v62, %v78
    %v84 = vmul.f32 %v65, %v78
    %v85 = vmul.f32 %v68, %v78
    %v86 = vmul.f32 %v71, %v78
    %v87 = vsub.f32 %v39, %v79
    %v88 = vsub.f32 %v40, %v80
    %v89 = vsub.f32 %v41, %v81
    %v90 = vsub.f32 %v42, %v82
    %v91 = vsub.f32 %v43, %v83
    %v92 = vsub.f32 %v44, %v84
    %v93 = vsub.f32 %v45, %v85
    %v94 = vsub.f32 %v46, %v86
    %v95 = vmul.f32 %v87, %v87
    %v96 = vmul.f32 %v88, %v88
    %v97 = vmul.f32 %v89, %v89
    %v98 = vmul.f32 %v90, %v90
    %v99 = vmul.f32 %v91, %v91
    %v100 = vmul.f32 %v92, %v92
    %v101 = vmul.f32 %v93, %v93
    %v102 = vmul.f32 %v94, %v94
    %v103 = vsel %vm47, %v95, 0.0
    %104 = vadd.xlane.f32.xlu0 %v103
    %v105 = vpop.xlane.xlu0 %104
    %v106 = vsel %vm47, %v96, 0.0
    %107 = vadd.xlane.f32.xlu0 %v106
    %v108 = vpop.xlane.xlu0 %107
    %v109 = vsel %vm47, %v97, 0.0
    %110 = vadd.xlane.f32.xlu0 %v109
    %v111 = vpop.xlane.xlu0 %110
    %v112 = vsel %vm47, %v98, 0.0
    %113 = vadd.xlane.f32.xlu0 %v112
    %v114 = vpop.xlane.xlu0 %113
    %v115 = vsel %vm47, %v99, 0.0
    %116 = vadd.xlane.f32.xlu0 %v115
    %v117 = vpop.xlane.xlu0 %116
    %v118 = vsel %vm47, %v100, 0.0
    %119 = vadd.xlane.f32.xlu0 %v118
    %v120 = vpop.xlane.xlu0 %119
    %v121 = vsel %vm47, %v101, 0.0
    %122 = vadd.xlane.f32.xlu0 %v121
    %v123 = vpop.xlane.xlu0 %122
    %v124 = vsel %vm47, %v102, 0.0
    %125 = vadd.xlane.f32.xlu0 %v124
    %v126 = vpop.xlane.xlu0 %125
    %v127 = vmul.f32 %v105, %v78
    %v128 = vmul.f32 %v108, %v78
    %v129 = vmul.f32 %v111, %v78
    %v130 = vmul.f32 %v114, %v78
    %v131 = vmul.f32 %v117, %v78
    %v132 = vmul.f32 %v120, %v78
    %v133 = vmul.f32 %v123, %v78
    %v134 = vmul.f32 %v126, %v78
    %v135 = vadd.f32 %v127, 1e-05
    %v136 = vadd.f32 %v128, 1e-05
    %v137 = vadd.f32 %v129, 1e-05
    %v138 = vadd.f32 %v130, 1e-05
    %v139 = vadd.f32 %v131, 1e-05
    %v140 = vadd.f32 %v132, 1e-05
    %v141 = vadd.f32 %v133, 1e-05
    %v142 = vadd.f32 %v134, 1e-05
    %v143 = vrsqrt.pop %v135
    %v144 = vmul.f32 %v143, %v135
    %v145 = vmul.f32 %v144, %v143
    %v146 = vmul.f32 0.5, %v145
    %v147 = vsub.f32 1.5, %v146
    %v148 = vmul.f32 %v143, %v147
    %vm149 = vweird.f32 %v135
    %vm150 = vweird.f32 %v143
    %vm151 = vmor %vm149, %vm150
    %v152 = vsel %vm151, %v143, %v148
    %v153 = vrsqrt.pop %v136
    %v154 = vmul.f32 %v153, %v136
    %v155 = vmul.f32 %v154, %v153
    %v156 = vmul.f32 0.5, %v155
    %v157 = vsub.f32 1.5, %v156
    %v158 = vmul.f32 %v153, %v157
    %vm159 = vweird.f32 %v136
    %vm160 = vweird.f32 %v153
    %vm161 = vmor %vm159, %vm160
    %v162 = vsel %vm161, %v153, %v158
    %v163 = vrsqrt.pop %v137
    %v164 = vmul.f32 %v163, %v137
    %v165 = vmul.f32 %v164, %v163
    %v166 = vmul.f32 0.5, %v165
    %v167 = vsub.f32 1.5, %v166
    %v168 = vmul.f32 %v163, %v167
    %vm169 = vweird.f32 %v137
    %vm170 = vweird.f32 %v163
    %vm171 = vmor %vm169, %vm170
    %v172 = vsel %vm171, %v163, %v168
    %v173 = vrsqrt.pop %v138
    %v174 = vmul.f32 %v173, %v138
    %v175 = vmul.f32 %v174, %v173
    %v176 = vmul.f32 0.5, %v175
    %v177 = vsub.f32 1.5, %v176
    %v178 = vmul.f32 %v173, %v177
    %vm179 = vweird.f32 %v138
    %vm180 = vweird.f32 %v173
    %vm181 = vmor %vm179, %vm180
    %v182 = vsel %vm181, %v173, %v178
    %v183 = vrsqrt.pop %v139
    %v184 = vmul.f32 %v183, %v139
    %v185 = vmul.f32 %v184, %v183
    %v186 = vmul.f32 0.5, %v185
    %v187 = vsub.f32 1.5, %v186
    %v188 = vmul.f32 %v183, %v187
    %vm189 = vweird.f32 %v139
    %vm190 = vweird.f32 %v183
    %vm191 = vmor %vm189, %vm190
    %v192 = vsel %vm191, %v183, %v188
    %v193 = vrsqrt.pop %v140
    %v194 = vmul.f32 %v193, %v140
    %v195 = vmul.f32 %v194, %v193
    %v196 = vmul.f32 0.5, %v195
    %v197 = vsub.f32 1.5, %v196
    %v198 = vmul.f32 %v193, %v197
    %vm199 = vweird.f32 %v140
    %vm200 = vweird.f32 %v193
    %vm201 = vmor %vm199, %vm200
    %v202 = vsel %vm201, %v193, %v198
    %v203 = vrsqrt.pop %v141
    %v204 = vmul.f32 %v203, %v141
    %v205 = vmul.f32 %v204, %v203
    %v206 = vmul.f32 0.5, %v205
    %v207 = vsub.f32 1.5, %v206
    %v208 = vmul.f32 %v203, %v207
    %vm209 = vweird.f32 %v141
    %vm210 = vweird.f32 %v203
    %vm211 = vmor %vm209, %vm210
    %v212 = vsel %vm211, %v203, %v208
    %v213 = vrsqrt.pop %v142
    %v214 = vmul.f32 %v213, %v142
    %v215 = vmul.f32 %v214, %v213
    %v216 = vmul.f32 0.5, %v215
    %v217 = vsub.f32 1.5, %v216
    %v218 = vmul.f32 %v213, %v217
    %vm219 = vweird.f32 %v142
    %vm220 = vweird.f32 %v213
    %vm221 = vmor %vm219, %vm220
    %v222 = vsel %vm221, %v213, %v218
    %v223 = vmul.f32 %v87, %v152
    %v224 = vmul.f32 %v88, %v162
    %v225 = vmul.f32 %v89, %v172
    %v226 = vmul.f32 %v90, %v182
    %v227 = vmul.f32 %v91, %v192
    %v228 = vmul.f32 %v92, %v202
    %v229 = vmul.f32 %v93, %v212
    %v230 = vmul.f32 %v94, %v222
    %v231 = vld [vmem:[%s1] sm:$0x1]
    %v233 = vperm.slane %v231, 0
    %v235 = vmul.f32 %v223, %v233
    %v236 = vmul.f32 %v224, %v233
    %v237 = vmul.f32 %v225, %v233
    %v238 = vmul.f32 %v226, %v233
    %v239 = vmul.f32 %v227, %v233
    %v240 = vmul.f32 %v228, %v233
    %v241 = vmul.f32 %v229, %v233
    %v242 = vmul.f32 %v230, %v233
    %v243 = vld [vmem:[%s2] sm:$0x1]
    %v245 = vperm.slane %v243, 0
    %v247 = vadd.f32 %v235, %v245
    %v248 = vadd.f32 %v236, %v245
    %v249 = vadd.f32 %v237, %v245
    %v250 = vadd.f32 %v238, %v245
    %v251 = vadd.f32 %v239, %v245
    %v252 = vadd.f32 %v240, %v245
    %v253 = vadd.f32 %v241, %v245
    %v254 = vadd.f32 %v242, %v245
    %v255 = vpack.c.bf16 %v247, %v247
    %v256 = vpack.c.bf16 %v248, %v248
    %v257 = vpack.c.bf16 %v249, %v249
    %v258 = vpack.c.bf16 %v250, %v250
    %v259 = vpack.c.bf16 %v251, %v251
    %v260 = vpack.c.bf16 %v252, %v252
    %v261 = vpack.c.bf16 %v253, %v253
    %v262 = vpack.c.bf16 %v254, %v254
    %vm263 = vcmask 257024
    %264 = vst.msk [vmem:[#allocation2] sm:$0xf] %vm263, %v255
    %265 = vst.msk [vmem:[#allocation2 + $0x4] sm:$0xf] %vm263, %v256
    %266 = vst.msk [vmem:[#allocation2 + $0x8] sm:$0xf] %vm263, %v257
    %267 = vst.msk [vmem:[#allocation2 + $0xc] sm:$0xf] %vm263, %v258
    %268 = vst.msk [vmem:[#allocation2 + $0x10] sm:$0xf] %vm263, %v259
    %269 = vst.msk [vmem:[#allocation2 + $0x14] sm:$0xf] %vm263, %v260
    %270 = vst.msk [vmem:[#allocation2 + $0x18] sm:$0xf] %vm263, %v261
    %271 = vst.msk [vmem:[#allocation2 + $0x1c] sm:$0xf] %vm263, %v262
    %272 = vst.msk [vmem:[#allocation3] sm:$0xff] %vm47, 0.0
    %273 = vst.msk [vmem:[#allocation3 + $0x8] sm:$0xff] %vm47, 0.0
    %274 = vst.msk [vmem:[#allocation3 + $0x10] sm:$0xff] %vm47, 0.0
    %275 = vst.msk [vmem:[#allocation3 + $0x18] sm:$0xff] %vm47, 0.0
    %276 = vst.msk [vmem:[#allocation3 + $0x20] sm:$0xff] %vm47, 0.0
    %277 = vst.msk [vmem:[#allocation3 + $0x28] sm:$0xff] %vm47, 0.0
    %278 = vst.msk [vmem:[#allocation3 + $0x30] sm:$0xff] %vm47, 0.0
    %279 = vst.msk [vmem:[#allocation3 + $0x38] sm:$0xff] %vm47, 0.0
  $region33: #{vision_transformer_forward.20} parent=0 // pred_fallthru
    _
  %v280 = vld [vmem:[#allocation2] sm:$0xf]
  %v281 = vld [vmem:[#allocation2 + $0x4] sm:$0xf]
  %v282 = vld [vmem:[#allocation2 + $0x8] sm:$0xf]
  %v283 = vld [vmem:[#allocation2 + $0xc] sm:$0xf]
  %v284 = vld [vmem:[#allocation2 + $0x10] sm:$0xf]
  %v285 = vld [vmem:[#allocation2 + $0x14] sm:$0xf]
  %v286 = vld [vmem:[#allocation2 + $0x18] sm:$0xf]
  %v287 = vld [vmem:[#allocation2 + $0x1c] sm:$0xf]
  %v288 = vld [vmem:[%s3] sm:$0xf]
  %v289 = vld [vmem:[%s3 + $0x4] sm:$0xf]
  %v290 = vld [vmem:[%s3 + $0x8] sm:$0xf]
  %v291 = vld [vmem:[%s3 + $0xc] sm:$0xf]
  %v292 = vld [vmem:[%s4] sm:$0x1]
  %v294 = vperm.slane %v292, 0
  %v304 = vunpack.c.l.b16 %v280
  %v305 = vunpack.c.l.b16 %v281
  %v306 = vunpack.c.l.b16 %v282
  %v307 = vunpack.c.l.b16 %v283
  %v308 = vunpack.c.l.b16 %v284
  %v309 = vunpack.c.l.b16 %v285
  %v310 = vunpack.c.l.b16 %v286
  %v311 = vunpack.c.l.b16 %v287
  %v312 = vpack.c.b16 %v305, %v304
  %v313 = vpack.c.b16 %v307, %v306
  %v314 = vpack.c.b16 %v309, %v308
  %v315 = vpack.c.b16 %v311, %v310
  %v320 = vunpack.c.l.b16 %v288
  %v321 = vunpack.c.l.b16 %v289
  %v322 = vunpack.c.l.b16 %v290
  %v323 = vunpack.c.l.b16 %v291
  %v324 = vpack.c.b16 %v321, %v320
  %v325 = vpack.c.b16 %v323, %v322
  %vm328 = vcmask 261120
  %v330 = vsel %vm328, %v312, 0
  %v333 = vsel %vm328, %v313, 0
  %v336 = vsel %vm328, %v314, 0
  %v339 = vsel %vm328, %v315, 0
  %341 = vmatpush.bf16.msra.mxu0 0
  %342 = vmatpush.bf16.msra.mxu0 0
  %343 = vmatpush.bf16.msra.mxu0 0
  %344 = vmatpush.bf16.msra.mxu0 0
  %345 = vmatpush.bf16.msra.mxu0 0
  %346 = vmatpush.bf16.msra.mxu0 0
  %347 = vmatpush.bf16.msra.mxu0 %v325
  %348 = vmatpush.bf16.msra.mxu0 %v324
  %349 = vmatmul.bf16.gmra.mxu0 %v330
  %v350 = vpop.f32.mrf.mxu0
  %v351 = vadd.f32 %v294, %v350
  %v352 = vpop.f32.mrf.mxu0
  %v353 = vadd.f32 %v294, %v352
  %354 = vmatmul.bf16.gmra.mxu0 %v333
  %v355 = vpop.f32.mrf.mxu0
  %v356 = vadd.f32 %v294, %v355
  %v357 = vpop.f32.mrf.mxu0
  %v358 = vadd.f32 %v294, %v357
  %359 = vmatmul.bf16.gmra.mxu0 %v336
  %v360 = vpop.f32.mrf.mxu0
  %v361 = vadd.f32 %v294, %v360
  %v362 = vpop.f32.mrf.mxu0
  %v363 = vadd.f32 %v294, %v362
  %364 = vmatmul.bf16.gmra.mxu0 %v339
  %v365 = vpop.f32.mrf.mxu0
  %v366 = vadd.f32 %v294, %v365
  %v367 = vpop.f32.mrf.mxu0
  %v368 = vadd.f32 %v294, %v367
  %369 = vdwg.mxu0
  %v370 = vmul.f32 %v351, 1.702
  %v371 = vmul.f32 %v353, 1.702
  %v372 = vmul.f32 %v356, 1.702
  %v373 = vmul.f32 %v358, 1.702
  %v374 = vmul.f32 %v361, 1.702
  %v375 = vmul.f32 %v363, 1.702
  %v376 = vmul.f32 %v366, 1.702
  %v377 = vmul.f32 %v368, 1.702
  %v378 = vxor.u32 %v370, 2147483648
  %v379 = vxor.u32 %v371, 2147483648
  %v380 = vxor.u32 %v372, 2147483648
  %v381 = vxor.u32 %v373, 2147483648
  %v382 = vxor.u32 %v374, 2147483648
  %v383 = vxor.u32 %v375, 2147483648
  %v384 = vxor.u32 %v376, 2147483648
  %v385 = vxor.u32 %v377, 2147483648
  %v386 = vmul.f32 %v378, 1.442695
  %v387 = vpow.pop %v386
  %v388 = vmul.f32 %v379, 1.442695
  %v389 = vpow.pop %v388
  %v390 = vmul.f32 %v380, 1.442695
  %v391 = vpow.pop %v390
  %v392 = vmul.f32 %v381, 1.442695
  %v393 = vpow.pop %v392
  %v394 = vmul.f32 %v382, 1.442695
  %v395 = vpow.pop %v394
  %v396 = vmul.f32 %v383, 1.442695
  %v397 = vpow.pop %v396
  %v398 = vmul.f32 %v384, 1.442695
  %v399 = vpow.pop %v398
  %v400 = vmul.f32 %v385, 1.442695
  %v401 = vpow.pop %v400
  %v402 = vadd.f32 %v387, 1.0
  %v403 = vadd.f32 %v389, 1.0
  %v404 = vadd.f32 %v391, 1.0
  %v405 = vadd.f32 %v393, 1.0
  %v406 = vadd.f32 %v395, 1.0
  %v407 = vadd.f32 %v397, 1.0
  %v408 = vadd.f32 %v399, 1.0
  %v409 = vadd.f32 %v401, 1.0
  %v410 = vrcp.pop %v402
  %v411 = vmul.f32 %v402, %v410
  %v412 = vsub.f32 1.0, %v411
  %v413 = vmul.f32 %v410, %v412
  %v414 = vadd.f32 %v410, %v413
  %vm415 = vweird.f32 %v402
  %vm416 = vweird.f32 %v410
  %vm417 = vmor %vm415, %vm416
  %v418 = vsel %vm417, %v410, %v414
  %v419 = vand.u32 2147483647, %v402
  %vm420 = vcmp.eq.f32.partialorder %v419, 8.507059e+37
  %v421 = vand.u32 %v402, 2147483648
  %v422 = vor.u32 1.1754944e-38, %v421
  %v423 = vsel %vm420, %v422, %v418
  %v424 = vmul.f32 1.0, %v423
  %v425 = vrcp.pop %v403
  %v426 = vmul.f32 %v403, %v425
  %v427 = vsub.f32 1.0, %v426
  %v428 = vmul.f32 %v425, %v427
  %v429 = vadd.f32 %v425, %v428
  %vm430 = vweird.f32 %v403
  %vm431 = vweird.f32 %v425
  %vm432 = vmor %vm430, %vm431
  %v433 = vsel %vm432, %v425, %v429
  %v434 = vand.u32 2147483647, %v403
  %vm435 = vcmp.eq.f32.partialorder %v434, 8.507059e+37
  %v436 = vand.u32 %v403, 2147483648
  %v437 = vor.u32 1.1754944e-38, %v436
  %v438 = vsel %vm435, %v437, %v433
  %v439 = vmul.f32 1.0, %v438
  %v440 = vrcp.pop %v404
  %v441 = vmul.f32 %v404, %v440
  %v442 = vsub.f32 1.0, %v441
  %v443 = vmul.f32 %v440, %v442
  %v444 = vadd.f32 %v440, %v443
  %vm445 = vweird.f32 %v404
  %vm446 = vweird.f32 %v440
  %vm447 = vmor %vm445, %vm446
  %v448 = vsel %vm447, %v440, %v444
  %v449 = vand.u32 2147483647, %v404
  %vm450 = vcmp.eq.f32.partialorder %v449, 8.507059e+37
  %v451 = vand.u32 %v404, 2147483648
  %v452 = vor.u32 1.1754944e-38, %v451
  %v453 = vsel %vm450, %v452, %v448
  %v454 = vmul.f32 1.0, %v453
  %v455 = vrcp.pop %v405
  %v456 = vmul.f32 %v405, %v455
  %v457 = vsub.f32 1.0, %v456
  %v458 = vmul.f32 %v455, %v457
  %v459 = vadd.f32 %v455, %v458
  %vm460 = vweird.f32 %v405
  %vm461 = vweird.f32 %v455
  %vm462 = vmor %vm460, %vm461
  %v463 = vsel %vm462, %v455, %v459
  %v464 = vand.u32 2147483647, %v405
  %vm465 = vcmp.eq.f32.partialorder %v464, 8.507059e+37
  %v466 = vand.u32 %v405, 2147483648
  %v467 = vor.u32 1.1754944e-38, %v466
  %v468 = vsel %vm465, %v467, %v463
  %v469 = vmul.f32 1.0, %v468
  %v470 = vrcp.pop %v406
  %v471 = vmul.f32 %v406, %v470
  %v472 = vsub.f32 1.0, %v471
  %v473 = vmul.f32 %v470, %v472
  %v474 = vadd.f32 %v470, %v473
  %vm475 = vweird.f32 %v406
  %vm476 = vweird.f32 %v470
  %vm477 = vmor %vm475, %vm476
  %v478 = vsel %vm477, %v470, %v474
  %v479 = vand.u32 2147483647, %v406
  %vm480 = vcmp.eq.f32.partialorder %v479, 8.507059e+37
  %v481 = vand.u32 %v406, 2147483648
  %v482 = vor.u32 1.1754944e-38, %v481
  %v483 = vsel %vm480, %v482, %v478
  %v484 = vmul.f32 1.0, %v483
  %v485 = vrcp.pop %v407
  %v486 = vmul.f32 %v407, %v485
  %v487 = vsub.f32 1.0, %v486
  %v488 = vmul.f32 %v485, %v487
  %v489 = vadd.f32 %v485, %v488
  %vm490 = vweird.f32 %v407
  %vm491 = vweird.f32 %v485
  %vm492 = vmor %vm490, %vm491
  %v493 = vsel %vm492, %v485, %v489
  %v494 = vand.u32 2147483647, %v407
  %vm495 = vcmp.eq.f32.partialorder %v494, 8.507059e+37
  %v496 = vand.u32 %v407, 2147483648
  %v497 = vor.u32 1.1754944e-38, %v496
  %v498 = vsel %vm495, %v497, %v493
  %v499 = vmul.f32 1.0, %v498
  %v500 = vrcp.pop %v408
  %v501 = vmul.f32 %v408, %v500
  %v502 = vsub.f32 1.0, %v501
  %v503 = vmul.f32 %v500, %v502
  %v504 = vadd.f32 %v500, %v503
  %vm505 = vweird.f32 %v408
  %vm506 = vweird.f32 %v500
  %vm507 = vmor %vm505, %vm506
  %v508 = vsel %vm507, %v500, %v504
  %v509 = vand.u32 2147483647, %v408
  %vm510 = vcmp.eq.f32.partialorder %v509, 8.507059e+37
  %v511 = vand.u32 %v408, 2147483648
  %v512 = vor.u32 1.1754944e-38, %v511
  %v513 = vsel %vm510, %v512, %v508
  %v514 = vmul.f32 1.0, %v513
  %v515 = vrcp.pop %v409
  %v516 = vmul.f32 %v409, %v515
  %v517 = vsub.f32 1.0, %v516
  %v518 = vmul.f32 %v515, %v517
  %v519 = vadd.f32 %v515, %v518
  %vm520 = vweird.f32 %v409
  %vm521 = vweird.f32 %v515
  %vm522 = vmor %vm520, %vm521
  %v523 = vsel %vm522, %v515, %v519
  %v524 = vand.u32 2147483647, %v409
  %vm525 = vcmp.eq.f32.partialorder %v524, 8.507059e+37
  %v526 = vand.u32 %v409, 2147483648
  %v527 = vor.u32 1.1754944e-38, %v526
  %v528 = vsel %vm525, %v527, %v523
  %v529 = vmul.f32 1.0, %v528
  %v530 = vmul.f32 %v351, %v424
  %v531 = vmul.f32 %v353, %v439
  %v532 = vmul.f32 %v356, %v454
  %v533 = vmul.f32 %v358, %v469
  %v534 = vmul.f32 %v361, %v484
  %v535 = vmul.f32 %v363, %v499
  %v536 = vmul.f32 %v366, %v514
  %v537 = vmul.f32 %v368, %v529
  %v538 = vld [vmem:[#allocation3] sm:$0xff]
  %v539 = vld [vmem:[#allocation3 + $0x8] sm:$0xff]
  %v540 = vld [vmem:[#allocation3 + $0x10] sm:$0xff]
  %v541 = vld [vmem:[#allocation3 + $0x18] sm:$0xff]
  %v542 = vld [vmem:[#allocation3 + $0x20] sm:$0xff]
  %v543 = vld [vmem:[#allocation3 + $0x28] sm:$0xff]
  %v544 = vld [vmem:[#allocation3 + $0x30] sm:$0xff]
  %v545 = vld [vmem:[#allocation3 + $0x38] sm:$0xff]
  %v546 = vpack.c.bf16 %v531, %v530
  %v547 = vpack.c.bf16 %v533, %v532
  %v548 = vpack.c.bf16 %v535, %v534
  %v549 = vpack.c.bf16 %v537, %v536
  %v550 = vld [vmem:[%s5] sm:$0xf]
  %v551 = vld [vmem:[%s5 + $0x4] sm:$0xf]
  %v552 = vld [vmem:[%s5 + $0x8] sm:$0xf]
  %v553 = vld [vmem:[%s5 + $0xc] sm:$0xf]
  %v554 = vld [vmem:[%s5 + $0x10] sm:$0xf]
  %v555 = vld [vmem:[%s5 + $0x14] sm:$0xf]
  %v556 = vld [vmem:[%s5 + $0x18] sm:$0xf]
  %v557 = vld [vmem:[%s5 + $0x1c] sm:$0xf]
  %v558 = vld [vmem:[%s5 + $0x20] sm:$0xf]
  %v559 = vld [vmem:[%s5 + $0x24] sm:$0xf]
  %v560 = vld [vmem:[%s5 + $0x28] sm:$0xf]
  %v561 = vld [vmem:[%s5 + $0x2c] sm:$0xf]
  %v562 = vld [vmem:[%s5 + $0x30] sm:$0xf]
  %v563 = vld [vmem:[%s5 + $0x34] sm:$0xf]
  %v564 = vld [vmem:[%s5 + $0x38] sm:$0xf]
  %v565 = vld [vmem:[%s5 + $0x3c] sm:$0xf]
  %v582 = vunpack.c.l.b16 %v550
  %v583 = vunpack.c.l.b16 %v551
  %v584 = vunpack.c.l.b16 %v552
  %v585 = vunpack.c.l.b16 %v553
  %v586 = vunpack.c.l.b16 %v554
  %v587 = vunpack.c.l.b16 %v555
  %v588 = vunpack.c.l.b16 %v556
  %v589 = vunpack.c.l.b16 %v557
  %v590 = vunpack.c.l.b16 %v558
  %v591 = vunpack.c.l.b16 %v559
  %v592 = vunpack.c.l.b16 %v560
  %v593 = vunpack.c.l.b16 %v561
  %v594 = vunpack.c.l.b16 %v562
  %v595 = vunpack.c.l.b16 %v563
  %v596 = vunpack.c.l.b16 %v564
  %v597 = vunpack.c.l.b16 %v565
  %v598 = vpack.c.b16 %v583, %v582
  %v599 = vpack.c.b16 %v585, %v584
  %v600 = vpack.c.b16 %v587, %v586
  %v601 = vpack.c.b16 %v589, %v588
  %v602 = vpack.c.b16 %v591, %v590
  %v603 = vpack.c.b16 %v593, %v592
  %v604 = vpack.c.b16 %v595, %v594
  %v605 = vpack.c.b16 %v597, %v596
  %614 = vmatpush.bf16.msra.mxu0 %v605
  %615 = vmatpush.bf16.msra.mxu0 %v604
  %616 = vmatpush.bf16.msra.mxu0 %v603
  %617 = vmatpush.bf16.msra.mxu0 %v602
  %618 = vmatpush.bf16.msra.mxu0 %v601
  %619 = vmatpush.bf16.msra.mxu0 %v600
  %620 = vmatpush.bf16.msra.mxu0 %v599
  %621 = vmatpush.bf16.msra.mxu0 %v598
  %622 = vmatmul.bf16.gmra.mxu0 %v546
  %v623 = vpop.f32.mrf.mxu0
  %v624 = vadd.f32 0.0, %v623
  %v625 = vpop.f32.mrf.mxu0
  %v626 = vadd.f32 0.0, %v625
  %627 = vmatmul.bf16.gmra.mxu0 %v547
  %v628 = vpop.f32.mrf.mxu0
  %v629 = vadd.f32 0.0, %v628
  %v630 = vpop.f32.mrf.mxu0
  %v631 = vadd.f32 0.0, %v630
  %632 = vmatmul.bf16.gmra.mxu0 %v548
  %v633 = vpop.f32.mrf.mxu0
  %v634 = vadd.f32 0.0, %v633
  %v635 = vpop.f32.mrf.mxu0
  %v636 = vadd.f32 0.0, %v635
  %637 = vmatmul.bf16.gmra.mxu0 %v549
  %v638 = vpop.f32.mrf.mxu0
  %v639 = vadd.f32 0.0, %v638
  %v640 = vpop.f32.mrf.mxu0
  %v641 = vadd.f32 0.0, %v640
  %642 = vdwg.mxu0
  %v643 = vadd.f32 %v538, %v624
  %v644 = vadd.f32 %v539, %v626
  %v645 = vadd.f32 %v540, %v629
  %v646 = vadd.f32 %v541, %v631
  %v647 = vadd.f32 %v542, %v634
  %v648 = vadd.f32 %v543, %v636
  %v649 = vadd.f32 %v544, %v639
  %v650 = vadd.f32 %v545, %v641
  %651 = vst.msk [vmem:[#allocation3] sm:$0xff] %vm328, %v643
  %652 = vst.msk [vmem:[#allocation3 + $0x8] sm:$0xff] %vm328, %v644
  %653 = vst.msk [vmem:[#allocation3 + $0x10] sm:$0xff] %vm328, %v645
  %654 = vst.msk [vmem:[#allocation3 + $0x18] sm:$0xff] %vm328, %v646
  %655 = vst.msk [vmem:[#allocation3 + $0x20] sm:$0xff] %vm328, %v647
  %656 = vst.msk [vmem:[#allocation3 + $0x28] sm:$0xff] %vm328, %v648
  %657 = vst.msk [vmem:[#allocation3 + $0x30] sm:$0xff] %vm328, %v649
  %658 = vst.msk [vmem:[#allocation3 + $0x38] sm:$0xff] %vm328, %v650
  // Predicated region
  $region34: #{vision_transformer_forward.20} parent=0 // pred_check
    %p659 = pneg %p27
  $region35: #{vision_transformer_forward.20} parent=0 // pred_check_branch
    %661 = sbr.rel (%p659) target = $region37
  $region36: #{vision_transformer_forward.20} parent=0 // pred_region
    %v662 = vld [vmem:[%s0] sm:$0xf]
    %v663 = vld [vmem:[%s0 + $0x4] sm:$0xf]
    %v664 = vld [vmem:[%s0 + $0x8] sm:$0xf]
    %v665 = vld [vmem:[%s0 + $0xc] sm:$0xf]
    %v666 = vld [vmem:[%s0 + $0x10] sm:$0xf]
    %v667 = vld [vmem:[%s0 + $0x14] sm:$0xf]
    %v668 = vld [vmem:[%s0 + $0x18] sm:$0xf]
    %v669 = vld [vmem:[%s0 + $0x1c] sm:$0xf]
    %v670 = vunpack.c.l.bf16 %v662
    %v671 = vunpack.c.l.bf16 %v663
    %v672 = vunpack.c.l.bf16 %v664
    %v673 = vunpack.c.l.bf16 %v665
    %v674 = vunpack.c.l.bf16 %v666
    %v675 = vunpack.c.l.bf16 %v667
    %v676 = vunpack.c.l.bf16 %v668
    %v677 = vunpack.c.l.bf16 %v669
    %v678 = vld [vmem:[#allocation3] sm:$0xff]
    %v679 = vld [vmem:[#allocation3 + $0x8] sm:$0xff]
    %v680 = vld [vmem:[#allocation3 + $0x10] sm:$0xff]
    %v681 = vld [vmem:[#allocation3 + $0x18] sm:$0xff]
    %v682 = vld [vmem:[#allocation3 + $0x20] sm:$0xff]
    %v683 = vld [vmem:[#allocation3 + $0x28] sm:$0xff]
    %v684 = vld [vmem:[#allocation3 + $0x30] sm:$0xff]
    %v685 = vld [vmem:[#allocation3 + $0x38] sm:$0xff]
    %v686 = vadd.f32 %v670, %v678
    %v687 = vadd.f32 %v671, %v679
    %v688 = vadd.f32 %v672, %v680
    %v689 = vadd.f32 %v673, %v681
    %v690 = vadd.f32 %v674, %v682
    %v691 = vadd.f32 %v675, %v683
    %v692 = vadd.f32 %v676, %v684
    %v693 = vadd.f32 %v677, %v685
    %v694 = vld [vmem:[%s6] sm:$0x1]
    %v696 = vperm.slane %v694, 0
    %v698 = vadd.f32 %v686, %v696
    %v699 = vadd.f32 %v687, %v696
    %v700 = vadd.f32 %v688, %v696
    %v701 = vadd.f32 %v689, %v696
    %v702 = vadd.f32 %v690, %v696
    %v703 = vadd.f32 %v691, %v696
    %v704 = vadd.f32 %v692, %v696
    %v705 = vadd.f32 %v693, %v696
    %v706 = vpack.c.bf16 %v698, %v698
    %v707 = vpack.c.bf16 %v699, %v699
    %v708 = vpack.c.bf16 %v700, %v700
    %v709 = vpack.c.bf16 %v701, %v701
    %v710 = vpack.c.bf16 %v702, %v702
    %v711 = vpack.c.bf16 %v703, %v703
    %v712 = vpack.c.bf16 %v704, %v704
    %v713 = vpack.c.bf16 %v705, %v705
    %vm714 = vcmask 257024
    %715 = vst.msk [vmem:[%s7] sm:$0xf] %vm714, %v706
    %716 = vst.msk [vmem:[%s7 + $0x4] sm:$0xf] %vm714, %v707
    %717 = vst.msk [vmem:[%s7 + $0x8] sm:$0xf] %vm714, %v708
    %718 = vst.msk [vmem:[%s7 + $0xc] sm:$0xf] %vm714, %v709
    %719 = vst.msk [vmem:[%s7 + $0x10] sm:$0xf] %vm714, %v710
    %720 = vst.msk [vmem:[%s7 + $0x14] sm:$0xf] %vm714, %v711
    %721 = vst.msk [vmem:[%s7 + $0x18] sm:$0xf] %vm714, %v712
    %722 = vst.msk [vmem:[%s7 + $0x1c] sm:$0xf] %vm714, %v713
  $region37: #{vision_transformer_forward.20} parent=0 // pred_fallthru
    _
  // Predicated region
  $region38: #{vision_transformer_forward.20} parent=0 // pred_check
    _
  $region39: #{vision_transformer_forward.20} parent=0 // pred_check_branch
    %724 = sbr.rel (0) target = $region41
  $region40: #{vision_transformer_forward.20} parent=0 // pred_region
    _
  $region41: #{vision_transformer_forward.20} parent=0 // pred_fallthru
    _
  // Predicated region
  $region42: #{vision_transformer_forward.20} parent=0 // pred_check
    _
  $region43: #{vision_transformer_forward.20} parent=0 // pred_check_branch
    %726 = sbr.rel (0) target = $region45
  $region44: #{vision_transformer_forward.20} parent=0 // pred_region
    _
  $region45: #{vision_transformer_forward.20} parent=0 // pred_fallthru
    _

</llo_original>
